<compile_context>
chip_gen: v6e
topology: v6e:2x2x1
jax: 0.10.0
libtpu: 0.0.40
codegen_flags: <defaults>
</compile_context>

<pallas_src>
import functools

import jax
import jax.numpy as jnp
from jax import lax
from jax.experimental import pallas as pl
from jax.experimental.pallas import tpu as pltpu

# Matmul operand dtype: set to jnp.bfloat16 for ~2x MXU throughput on v6e/v7x
# (accumulation stays f32 via preferred_element_type).  Kept f32 so the self-test's
# 1e-3 comparison against the f32 XLA reference stays tight.
MATMUL_DTYPE = jnp.float32
_EPS = 1e-5
_VMEM_LIMIT = 32 * 1024 * 1024   # explicit scoped-VMEM budget (>= v5e/v6e defaults, < v7x physical)


def _conv_bn_stats_kernel(x_ref, w_ref, scale_ref, shift_ref,
                          y_ref, part_ref, xp_scr, *, apply_pre_bn):
    """3x3 'same' conv (no bias) on one batch tile, emitting raw output + partial BN stats.

    x_ref     : (1, H, W, Cin)        input activation tile (NHWC)
    w_ref     : (9*Cin, Cout)         3x3 taps flattened along K (im2col weights)
    scale_ref : (1, Cin)              folded BN scale of the PREVIOUS layer (unused for conv1)
    shift_ref : (1, Cin)              folded BN shift of the PREVIOUS layer (unused for conv1)
    y_ref     : (1, H, W, Cout)       raw (pre-BN) conv output
    part_ref  : (1, 2, Cout)          per-tile [sum, sum_of_squares] of the conv output
    xp_scr    : VMEM (H+2, W+2, Cin)  zero-halo padded activation scratch
    """
    _, H, W, cin = x_ref.shape
    cout = w_ref.shape[1]

    x = x_ref[0]                                             # (H, W, Cin) f32
    if apply_pre_bn:
        # previous layer's BatchNorm (batch statistics) + LeakyReLU(0.2), folded to scale/shift
        x = x * scale_ref[...].reshape(1, 1, cin) + shift_ref[...].reshape(1, 1, cin)
        x = jnp.where(x > 0, x, 0.2 * x)

    # zero only the 1-wide halo strips, then write the interior once
    zrow = jnp.zeros((1, W + 2, cin), jnp.float32)
    zcol = jnp.zeros((H + 2, 1, cin), jnp.float32)
    xp_scr[0:1, :, :] = zrow
    xp_scr[H + 1:H + 2, :, :] = zrow
    xp_scr[:, 0:1, :] = zcol
    xp_scr[:, W + 1:W + 2, :] = zcol
    xp_scr[1:H + 1, 1:W + 1, :] = x

    # im2col: fuse all 9 taps along K -> a single MXU matmul with K = 9*Cin
    taps = [xp_scr[dy:dy + H, dx:dx + W, :] for dy in range(3) for dx in range(3)]
    patches = jnp.concatenate(taps, axis=-1).reshape(H * W, 9 * cin)
    acc = jnp.dot(patches.astype(w_ref.dtype), w_ref[...],
                  preferred_element_type=jnp.float32)        # (H*W, Cout) f32

    # per-tile partial BatchNorm statistics (finalized across the grid in the wrapper)
    s1 = jnp.sum(acc, axis=0, keepdims=True)                 # (1, Cout)
    s2 = jnp.sum(acc * acc, axis=0, keepdims=True)           # (1, Cout)
    part_ref[0:1, 0:1, :] = s1.reshape(1, 1, cout)
    part_ref[0:1, 1:2, :] = s2.reshape(1, 1, cout)

    y_ref[...] = acc.reshape(1, H, W, cout)


def _bn_act_kernel(x_ref, scale_ref, shift_ref, o_ref):
    """Final BatchNorm (as scale/shift) + LeakyReLU(0.2) on a lane-dense (rows, W*C) tile."""
    y = x_ref[...] * scale_ref[...] + shift_ref[...]
    o_ref[...] = jnp.where(y > 0, y, 0.2 * y)


def _conv_block(x_nhwc, w_k, pre_scale, pre_shift, cout, apply_pre_bn):
    """pallas_call wrapper: batch-tiled conv (+ optional folded pre-BN/act) + partial stats."""
    N, H, W, cin = x_nhwc.shape
    kernel = functools.partial(_conv_bn_stats_kernel, apply_pre_bn=apply_pre_bn)
    y, part = pl.pallas_call(
        kernel,
        grid=(N,),
        in_specs=[
            pl.BlockSpec((1, H, W, cin), lambda n: (n, 0, 0, 0)),
            pl.BlockSpec((9 * cin, cout), lambda n: (0, 0)),       # weights stay resident
            pl.BlockSpec((1, cin), lambda n: (0, 0)),
            pl.BlockSpec((1, cin), lambda n: (0, 0)),
        ],
        out_specs=[
            pl.BlockSpec((1, H, W, cout), lambda n: (n, 0, 0, 0)),
            pl.BlockSpec((1, 2, cout), lambda n: (n, 0, 0)),
        ],
        out_shape=[
            jax.ShapeDtypeStruct((N, H, W, cout), jnp.float32),
            jax.ShapeDtypeStruct((N, 2, cout), jnp.float32),
        ],
        scratch_shapes=[pltpu.VMEM((H + 2, W + 2, cin), jnp.float32)],
        compiler_params=pltpu.CompilerParams(
            dimension_semantics=("parallel",),
            vmem_limit_bytes=_VMEM_LIMIT),
    )(x_nhwc, w_k, pre_scale, pre_shift)
    return y, part


def _bn_act(y_flat, scale_row, shift_row, rows_per_tile):
    R, L = y_flat.shape
    return pl.pallas_call(
        _bn_act_kernel,
        grid=(R // rows_per_tile,),
        in_specs=[
            pl.BlockSpec((rows_per_tile, L), lambda i: (i, 0)),
            pl.BlockSpec((1, L), lambda i: (0, 0)),
            pl.BlockSpec((1, L), lambda i: (0, 0)),
        ],
        out_specs=pl.BlockSpec((rows_per_tile, L), lambda i: (i, 0)),
        out_shape=jax.ShapeDtypeStruct((R, L), jnp.float32),
        compiler_params=pltpu.CompilerParams(
            dimension_semantics=("parallel",),
            vmem_limit_bytes=_VMEM_LIMIT),
    )(y_flat, scale_row, shift_row)


def _finalize_bn(partials, gamma, beta, count):
    """Combine per-tile partial sums into BatchNorm (train-mode) scale/shift, in f32."""
    s = jnp.sum(partials[:, 0, :], axis=0)
    ss = jnp.sum(partials[:, 1, :], axis=0)
    mean = s / count
    var = jnp.maximum(ss / count - mean * mean, 0.0)   # guard E[x^2]-E[x]^2 cancellation
    scale = gamma.astype(jnp.float32) * lax.rsqrt(var + _EPS)
    shift = beta.astype(jnp.float32) - mean * scale
    return scale, shift


@jax.jit
def double_conv(x_nchw, w1_oihw, g1, b1, w2_oihw, g2, b2):
    """Forward pass of DoubleConv. x_nchw: (N, Cin, H, W) f32. Returns (N, Cout, H, W)."""
    N, Cin, H, W = x_nchw.shape
    Cmid = w1_oihw.shape[0]
    Cout = w2_oihw.shape[0]
    count = N * H * W
    f32 = jnp.float32

    # glue: NCHW -> NHWC; weights (O,I,ky,kx) -> (ky,kx,I,O) -> (9*I, O)  (im2col tap order)
    x_nhwc = jnp.transpose(x_nchw, (0, 2, 3, 1)).astype(f32)
    w1_k = jnp.transpose(w1_oihw, (2, 3, 1, 0)).reshape(9 * Cin, Cmid).astype(MATMUL_DTYPE)
    w2_k = jnp.transpose(w2_oihw, (2, 3, 1, 0)).reshape(9 * Cmid, Cout).astype(MATMUL_DTYPE)

    # conv1 (raw) + partial BN1 stats
    y1, part1 = _conv_block(x_nhwc, w1_k,
                            jnp.ones((1, Cin), f32), jnp.zeros((1, Cin), f32),
                            Cmid, apply_pre_bn=False)
    scale1, shift1 = _finalize_bn(part1, g1, b1, count)

    # BN1 + LeakyReLU folded into conv2's kernel; conv2 (raw) + partial BN2 stats
    y2, part2 = _conv_block(y1, w2_k,
                            scale1.reshape(1, Cmid), shift1.reshape(1, Cmid),
                            Cout, apply_pre_bn=True)
    scale2, shift2 = _finalize_bn(part2, g2, b2, count)

    # final BN2 + LeakyReLU on a lane-dense (N*H, W*Cout) view (free reshape of NHWC layout)
    y2_flat = y2.reshape(N * H, W * Cout)
    scale_row = jnp.tile(scale2, W).reshape(1, W * Cout)
    shift_row = jnp.tile(shift2, W).reshape(1, W * Cout)
    out_flat = _bn_act(y2_flat, scale_row, shift_row, rows_per_tile=H)

    return jnp.transpose(out_flat.reshape(N, H, W, Cout), (0, 3, 1, 2))


def _reference(x, w1, g1, b1, w2, g2, b2):
    """Pure-JAX reference (mirrors PyTorch Conv2d(bias=False)+BN(train stats)+LeakyReLU(0.2))."""
    def block(x, w, g, b):
        y = lax.conv_general_dilated(
            x, w, window_strides=(1, 1), padding='SAME',
            dimension_numbers=('NCHW', 'OIHW', 'NCHW'))
        mean = y.mean(axis=(0, 2, 3), keepdims=True)
        var = ((y - mean) ** 2).mean(axis=(0, 2, 3), keepdims=True)
        y = (y - mean) * lax.rsqrt(var + _EPS) * g.reshape(1, -1, 1, 1) + b.reshape(1, -1, 1, 1)
        return jnp.where(y > 0, y, 0.2 * y)
    return block(block(x, w1, g1, b1), w2, g2, b2)


if __name__ == "__main__":
    # DoubleConv(in_channels=4, out_channels=8)   (mid_channels defaults to out_channels)
    N, Cin, H, W = 2, 4, 16, 16
    Cmid = Cout = 8

    key = jax.random.PRNGKey(0)
    k1, k2, k3, k4, k5, k6, kx = jax.random.split(key, 7)

    # deterministic synthetic parameters (Kaiming-ish scale for convs)
    w1 = jax.random.normal(k1, (Cmid, Cin, 3, 3), jnp.float32) * (2.0 / (Cin * 9)) ** 0.5
    w2 = jax.random.normal(k2, (Cout, Cmid, 3, 3), jnp.float32) * (2.0 / (Cmid * 9)) ** 0.5
    g1 = 1.0 + 0.1 * jax.random.normal(k3, (Cmid,), jnp.float32)
    b1 = 0.1 * jax.random.normal(k4, (Cmid,), jnp.float32)
    g2 = 1.0 + 0.1 * jax.random.normal(k5, (Cout,), jnp.float32)
    b2 = 0.1 * jax.random.normal(k6, (Cout,), jnp.float32)

    x = jax.random.normal(kx, (N, Cin, H, W), jnp.float32)

    out = jax.block_until_ready(double_conv(x, w1, g1, b1, w2, g2, b2))
    ref = jax.block_until_ready(_reference(x, w1, g1, b1, w2, g2, b2))

    assert out.shape == (N, Cout, H, W), out.shape
    assert jnp.allclose(out, ref, atol=1e-3, rtol=1e-3), float(jnp.max(jnp.abs(out - ref)))

    print("KERNEL_OK")
</pallas_src>

<mosaic_0001>
module attributes {stable_mosaic.version = 11 : i64} {
  func.func @_conv_bn_stats_kernel(%arg0: i32, %arg1: memref<1x16x16x4xf32, #tpu.memory_space<vmem>>, %arg2: memref<36x8xf32, #tpu.memory_space<vmem>>, %arg3: memref<1x4xf32, #tpu.memory_space<vmem>>, %arg4: memref<1x4xf32, #tpu.memory_space<vmem>>, %arg5: memref<1x16x16x8xf32, #tpu.memory_space<vmem>>, %arg6: memref<1x2x8xf32, #tpu.memory_space<vmem>>, %arg7: memref<18x18x4xf32, #tpu.memory_space<vmem>>) attributes {dimension_semantics = [#tpu.dimension_semantics<parallel>], iteration_bounds = array<i64: 2>, scalar_prefetch = 0 : i64, scratch_operands = 1 : i64, tpu.core_type = #tpu.core_type<tc>, window_params = [{transform_indices = @transform_0, window_bounds = array<i64: 1, 16, 16, 4>}, {pipeline_mode = #tpu.pipeline_mode<synchronous>, transform_indices = @transform_1, window_bounds = array<i64: 36, 8>}, {pipeline_mode = #tpu.pipeline_mode<synchronous>, transform_indices = @transform_2, window_bounds = array<i64: 1, 4>}, {pipeline_mode = #tpu.pipeline_mode<synchronous>, transform_indices = @transform_3, window_bounds = array<i64: 1, 4>}, {transform_indices = @transform_4, window_bounds = array<i64: 1, 16, 16, 8>}, {transform_indices = @transform_5, window_bounds = array<i64: 1, 2, 8>}]} {
    %c0 = arith.constant 0 : index
    %c0_0 = arith.constant 0 : index
    %c0_1 = arith.constant 0 : index
    %c0_2 = arith.constant 0 : index
    %0 = vector.load %arg1[%c0, %c0_0, %c0_1, %c0_2] : memref<1x16x16x4xf32, #tpu.memory_space<vmem>>, vector<1x16x16x4xf32>
    %1 = vector.shape_cast %0 : vector<1x16x16x4xf32> to vector<16x16x4xf32>
    %cst = arith.constant 0.000000e+00 : f32
    %2 = vector.broadcast %cst : f32 to vector<1x18x4xf32>
    %cst_3 = arith.constant 0.000000e+00 : f32
    %3 = vector.broadcast %cst_3 : f32 to vector<18x1x4xf32>
    %c0_4 = arith.constant 0 : index
    %c0_5 = arith.constant 0 : index
    %c0_6 = arith.constant 0 : index
    %4 = vector.load %arg7[%c0_4, %c0_5, %c0_6] : memref<18x18x4xf32, #tpu.memory_space<vmem>>, vector<1x18x4xf32>
    tpu.vector_store %arg7[%c0_4, %c0_5, %c0_6], %2 {strides = array<i32>} : memref<18x18x4xf32, #tpu.memory_space<vmem>>, vector<1x18x4xf32>,
    %c17 = arith.constant 17 : index
    %c0_7 = arith.constant 0 : index
    %c0_8 = arith.constant 0 : index
    %5 = vector.load %arg7[%c17, %c0_7, %c0_8] : memref<18x18x4xf32, #tpu.memory_space<vmem>>, vector<1x18x4xf32>
    tpu.vector_store %arg7[%c17, %c0_7, %c0_8], %2 {strides = array<i32>} : memref<18x18x4xf32, #tpu.memory_space<vmem>>, vector<1x18x4xf32>,
    %c0_9 = arith.constant 0 : index
    %c0_10 = arith.constant 0 : index
    %c0_11 = arith.constant 0 : index
    %6 = vector.load %arg7[%c0_9, %c0_10, %c0_11] : memref<18x18x4xf32, #tpu.memory_space<vmem>>, vector<18x1x4xf32>
    tpu.vector_store %arg7[%c0_9, %c0_10, %c0_11], %3 {strides = array<i32>} : memref<18x18x4xf32, #tpu.memory_space<vmem>>, vector<18x1x4xf32>,
    %c0_12 = arith.constant 0 : index
    %c17_13 = arith.constant 17 : index
    %c0_14 = arith.constant 0 : index
    %7 = vector.load %arg7[%c0_12, %c17_13, %c0_14] : memref<18x18x4xf32, #tpu.memory_space<vmem>>, vector<18x1x4xf32>
    tpu.vector_store %arg7[%c0_12, %c17_13, %c0_14], %3 {strides = array<i32>} : memref<18x18x4xf32, #tpu.memory_space<vmem>>, vector<18x1x4xf32>,
    %c1 = arith.constant 1 : index
    %c1_15 = arith.constant 1 : index
    %c0_16 = arith.constant 0 : index
    %8 = vector.load %arg7[%c1, %c1_15, %c0_16] : memref<18x18x4xf32, #tpu.memory_space<vmem>>, vector<16x16x4xf32>
    tpu.vector_store %arg7[%c1, %c1_15, %c0_16], %1 {strides = array<i32>} : memref<18x18x4xf32, #tpu.memory_space<vmem>>, vector<16x16x4xf32>,
    %c0_17 = arith.constant 0 : index
    %c0_18 = arith.constant 0 : index
    %c0_19 = arith.constant 0 : index
    %9 = vector.load %arg7[%c0_17, %c0_18, %c0_19] : memref<18x18x4xf32, #tpu.memory_space<vmem>>, vector<16x16x4xf32>
    %c0_20 = arith.constant 0 : index
    %c1_21 = arith.constant 1 : index
    %c0_22 = arith.constant 0 : index
    %10 = vector.load %arg7[%c0_20, %c1_21, %c0_22] : memref<18x18x4xf32, #tpu.memory_space<vmem>>, vector<16x16x4xf32>
    %c0_23 = arith.constant 0 : index
    %c2 = arith.constant 2 : index
    %c0_24 = arith.constant 0 : index
    %11 = vector.load %arg7[%c0_23, %c2, %c0_24] : memref<18x18x4xf32, #tpu.memory_space<vmem>>, vector<16x16x4xf32>
    %c1_25 = arith.constant 1 : index
    %c0_26 = arith.constant 0 : index
    %c0_27 = arith.constant 0 : index
    %12 = vector.load %arg7[%c1_25, %c0_26, %c0_27] : memref<18x18x4xf32, #tpu.memory_space<vmem>>, vector<16x16x4xf32>
    %c1_28 = arith.constant 1 : index
    %c1_29 = arith.constant 1 : index
    %c0_30 = arith.constant 0 : index
    %13 = vector.load %arg7[%c1_28, %c1_29, %c0_30] : memref<18x18x4xf32, #tpu.memory_space<vmem>>, vector<16x16x4xf32>
    %c1_31 = arith.constant 1 : index
    %c2_32 = arith.constant 2 : index
    %c0_33 = arith.constant 0 : index
    %14 = vector.load %arg7[%c1_31, %c2_32, %c0_33] : memref<18x18x4xf32, #tpu.memory_space<vmem>>, vector<16x16x4xf32>
    %c2_34 = arith.constant 2 : index
    %c0_35 = arith.constant 0 : index
    %c0_36 = arith.constant 0 : index
    %15 = vector.load %arg7[%c2_34, %c0_35, %c0_36] : memref<18x18x4xf32, #tpu.memory_space<vmem>>, vector<16x16x4xf32>
    %c2_37 = arith.constant 2 : index
    %c1_38 = arith.constant 1 : index
    %c0_39 = arith.constant 0 : index
    %16 = vector.load %arg7[%c2_37, %c1_38, %c0_39] : memref<18x18x4xf32, #tpu.memory_space<vmem>>, vector<16x16x4xf32>
    %c2_40 = arith.constant 2 : index
    %c2_41 = arith.constant 2 : index
    %c0_42 = arith.constant 0 : index
    %17 = vector.load %arg7[%c2_40, %c2_41, %c0_42] : memref<18x18x4xf32, #tpu.memory_space<vmem>>, vector<16x16x4xf32>
    %18 = tpu.concatenate %9, %10, %11, %12, %13, %14, %15, %16, %17 in 2 : vector<16x16x4xf32>, vector<16x16x4xf32>, vector<16x16x4xf32>, vector<16x16x4xf32>, vector<16x16x4xf32>, vector<16x16x4xf32>, vector<16x16x4xf32>, vector<16x16x4xf32>, vector<16x16x4xf32> -> vector<16x16x36xf32>
    %19 = vector.shape_cast %18 : vector<16x16x36xf32> to vector<256x36xf32>
    %c0_43 = arith.constant 0 : index
    %c0_44 = arith.constant 0 : index
    %20 = vector.load %arg2[%c0_43, %c0_44] : memref<36x8xf32, #tpu.memory_space<vmem>>, vector<36x8xf32>
    %cst_45 = arith.constant dense<0.000000e+00> : vector<256x8xf32>
    %21 = tpu.matmul %19, %20, %cst_45 {dimension_numbers = #tpu.dot_dimension_numbers<[1], [0], [0], [1], [0, 0, 1, 1], [], []>} : vector<256x36xf32>, vector<36x8xf32>, vector<256x8xf32> -> vector<256x8xf32>
    %cst_46 = arith.constant dense<0.000000e+00> : vector<8xf32>
    %22 = vector.multi_reduction <add>, %21, %cst_46 [0] : vector<256x8xf32> to vector<8xf32>
    %23 = vector.shape_cast %22 : vector<8xf32> to vector<1x8xf32>
    %24 = arith.mulf %21, %21 : vector<256x8xf32>
    %cst_47 = arith.constant dense<0.000000e+00> : vector<8xf32>
    %25 = vector.multi_reduction <add>, %24, %cst_47 [0] : vector<256x8xf32> to vector<8xf32>
    %26 = vector.shape_cast %25 : vector<8xf32> to vector<1x8xf32>
    %27 = vector.shape_cast %23 : vector<1x8xf32> to vector<1x1x8xf32>
    %c0_48 = arith.constant 0 : index
    %c0_49 = arith.constant 0 : index
    %c0_50 = arith.constant 0 : index
    %28 = vector.load %arg6[%c0_48, %c0_49, %c0_50] : memref<1x2x8xf32, #tpu.memory_space<vmem>>, vector<1x1x8xf32>
    tpu.vector_store %arg6[%c0_48, %c0_49, %c0_50], %27 {strides = array<i32>} : memref<1x2x8xf32, #tpu.memory_space<vmem>>, vector<1x1x8xf32>,
    %29 = vector.shape_cast %26 : vector<1x8xf32> to vector<1x1x8xf32>
    %c0_51 = arith.constant 0 : index
    %c1_52 = arith.constant 1 : index
    %c0_53 = arith.constant 0 : index
    %30 = vector.load %arg6[%c0_51, %c1_52, %c0_53] : memref<1x2x8xf32, #tpu.memory_space<vmem>>, vector<1x1x8xf32>
    tpu.vector_store %arg6[%c0_51, %c1_52, %c0_53], %29 {strides = array<i32>} : memref<1x2x8xf32, #tpu.memory_space<vmem>>, vector<1x1x8xf32>,
    %31 = vector.shape_cast %21 : vector<256x8xf32> to vector<1x16x16x8xf32>
    %c0_54 = arith.constant 0 : index
    %c0_55 = arith.constant 0 : index
    %c0_56 = arith.constant 0 : index
    %c0_57 = arith.constant 0 : index
    %32 = vector.load %arg5[%c0_54, %c0_55, %c0_56, %c0_57] : memref<1x16x16x8xf32, #tpu.memory_space<vmem>>, vector<1x16x16x8xf32>
    tpu.vector_store %arg5[%c0_54, %c0_55, %c0_56, %c0_57], %31 {strides = array<i32>} : memref<1x16x16x8xf32, #tpu.memory_space<vmem>>, vector<1x16x16x8xf32>,
    return
  }
  func.func @transform_0(%arg0: i32) -> (i32, i32, i32, i32) {
    %c0_i32 = arith.constant 0 : i32
    %c0_i32_0 = arith.constant 0 : i32
    %c0_i32_1 = arith.constant 0 : i32
    %c0_i32_2 = arith.constant 0 : i32
    return %arg0, %c0_i32, %c0_i32_0, %c0_i32_1 : i32, i32, i32, i32
  }
  func.func @transform_1(%arg0: i32) -> (i32, i32) {
    %c0_i32 = arith.constant 0 : i32
    %c0_i32_0 = arith.constant 0 : i32
    %c0_i32_1 = arith.constant 0 : i32
    return %c0_i32, %c0_i32_0 : i32, i32
  }
  func.func @transform_2(%arg0: i32) -> (i32, i32) {
    %c0_i32 = arith.constant 0 : i32
    %c0_i32_0 = arith.constant 0 : i32
    %c0_i32_1 = arith.constant 0 : i32
    return %c0_i32, %c0_i32_0 : i32, i32
  }
  func.func @transform_3(%arg0: i32) -> (i32, i32) {
    %c0_i32 = arith.constant 0 : i32
    %c0_i32_0 = arith.constant 0 : i32
    %c0_i32_1 = arith.constant 0 : i32
    return %c0_i32, %c0_i32_0 : i32, i32
  }
  func.func @transform_4(%arg0: i32) -> (i32, i32, i32, i32) {
    %c0_i32 = arith.constant 0 : i32
    %c0_i32_0 = arith.constant 0 : i32
    %c0_i32_1 = arith.constant 0 : i32
    %c0_i32_2 = arith.constant 0 : i32
    return %arg0, %c0_i32, %c0_i32_0, %c0_i32_1 : i32, i32, i32, i32
  }
  func.func @transform_5(%arg0: i32) -> (i32, i32, i32) {
    %c0_i32 = arith.constant 0 : i32
    %c0_i32_0 = arith.constant 0 : i32
    %c0_i32_1 = arith.constant 0 : i32
    return %arg0, %c0_i32, %c0_i32_0 : i32, i32, i32
  }
}

module attributes {stable_mosaic.version = 11 : i64} {
  func.func @_conv_bn_stats_kernel(%arg0: i32, %arg1: memref<1x16x16x8xf32, #tpu.memory_space<vmem>>, %arg2: memref<72x8xf32, #tpu.memory_space<vmem>>, %arg3: memref<1x8xf32, #tpu.memory_space<vmem>>, %arg4: memref<1x8xf32, #tpu.memory_space<vmem>>, %arg5: memref<1x16x16x8xf32, #tpu.memory_space<vmem>>, %arg6: memref<1x2x8xf32, #tpu.memory_space<vmem>>, %arg7: memref<18x18x8xf32, #tpu.memory_space<vmem>>) attributes {dimension_semantics = [#tpu.dimension_semantics<parallel>], iteration_bounds = array<i64: 2>, scalar_prefetch = 0 : i64, scratch_operands = 1 : i64, tpu.core_type = #tpu.core_type<tc>, window_params = [{transform_indices = @transform_0, window_bounds = array<i64: 1, 16, 16, 8>}, {pipeline_mode = #tpu.pipeline_mode<synchronous>, transform_indices = @transform_1, window_bounds = array<i64: 72, 8>}, {pipeline_mode = #tpu.pipeline_mode<synchronous>, transform_indices = @transform_2, window_bounds = array<i64: 1, 8>}, {pipeline_mode = #tpu.pipeline_mode<synchronous>, transform_indices = @transform_3, window_bounds = array<i64: 1, 8>}, {transform_indices = @transform_4, window_bounds = array<i64: 1, 16, 16, 8>}, {transform_indices = @transform_5, window_bounds = array<i64: 1, 2, 8>}]} {
    %c0 = arith.constant 0 : index
    %c0_0 = arith.constant 0 : index
    %c0_1 = arith.constant 0 : index
    %c0_2 = arith.constant 0 : index
    %0 = vector.load %arg1[%c0, %c0_0, %c0_1, %c0_2] : memref<1x16x16x8xf32, #tpu.memory_space<vmem>>, vector<1x16x16x8xf32>
    %1 = vector.shape_cast %0 : vector<1x16x16x8xf32> to vector<16x16x8xf32>
    %c0_3 = arith.constant 0 : index
    %c0_4 = arith.constant 0 : index
    %2 = vector.load %arg3[%c0_3, %c0_4] : memref<1x8xf32, #tpu.memory_space<vmem>>, vector<1x8xf32>
    %3 = vector.shape_cast %2 : vector<1x8xf32> to vector<1x1x8xf32>
    %4 = vector.broadcast %3 : vector<1x1x8xf32> to vector<16x16x8xf32>
    %5 = arith.mulf %1, %4 : vector<16x16x8xf32>
    %c0_5 = arith.constant 0 : index
    %c0_6 = arith.constant 0 : index
    %6 = vector.load %arg4[%c0_5, %c0_6] : memref<1x8xf32, #tpu.memory_space<vmem>>, vector<1x8xf32>
    %7 = vector.shape_cast %6 : vector<1x8xf32> to vector<1x1x8xf32>
    %8 = vector.broadcast %7 : vector<1x1x8xf32> to vector<16x16x8xf32>
    %9 = arith.addf %5, %8 : vector<16x16x8xf32>
    %cst = arith.constant 0.000000e+00 : f32
    %10 = vector.broadcast %cst : f32 to vector<16x16x8xf32>
    %11 = arith.cmpf ogt, %9, %10 : vector<16x16x8xf32>
    %cst_7 = arith.constant 2.000000e-01 : f32
    %12 = vector.broadcast %cst_7 : f32 to vector<16x16x8xf32>
    %13 = arith.mulf %12, %9 : vector<16x16x8xf32>
    %14 = arith.select %11, %9, %13 : vector<16x16x8xi1>, vector<16x16x8xf32>
    %cst_8 = arith.constant 0.000000e+00 : f32
    %15 = vector.broadcast %cst_8 : f32 to vector<1x18x8xf32>
    %cst_9 = arith.constant 0.000000e+00 : f32
    %16 = vector.broadcast %cst_9 : f32 to vector<18x1x8xf32>
    %c0_10 = arith.constant 0 : index
    %c0_11 = arith.constant 0 : index
    %c0_12 = arith.constant 0 : index
    %17 = vector.load %arg7[%c0_10, %c0_11, %c0_12] : memref<18x18x8xf32, #tpu.memory_space<vmem>>, vector<1x18x8xf32>
    tpu.vector_store %arg7[%c0_10, %c0_11, %c0_12], %15 {strides = array<i32>} : memref<18x18x8xf32, #tpu.memory_space<vmem>>, vector<1x18x8xf32>,
    %c17 = arith.constant 17 : index
    %c0_13 = arith.constant 0 : index
    %c0_14 = arith.constant 0 : index
    %18 = vector.load %arg7[%c17, %c0_13, %c0_14] : memref<18x18x8xf32, #tpu.memory_space<vmem>>, vector<1x18x8xf32>
    tpu.vector_store %arg7[%c17, %c0_13, %c0_14], %15 {strides = array<i32>} : memref<18x18x8xf32, #tpu.memory_space<vmem>>, vector<1x18x8xf32>,
    %c0_15 = arith.constant 0 : index
    %c0_16 = arith.constant 0 : index
    %c0_17 = arith.constant 0 : index
    %19 = vector.load %arg7[%c0_15, %c0_16, %c0_17] : memref<18x18x8xf32, #tpu.memory_space<vmem>>, vector<18x1x8xf32>
    tpu.vector_store %arg7[%c0_15, %c0_16, %c0_17], %16 {strides = array<i32>} : memref<18x18x8xf32, #tpu.memory_space<vmem>>, vector<18x1x8xf32>,
    %c0_18 = arith.constant 0 : index
    %c17_19 = arith.constant 17 : index
    %c0_20 = arith.constant 0 : index
    %20 = vector.load %arg7[%c0_18, %c17_19, %c0_20] : memref<18x18x8xf32, #tpu.memory_space<vmem>>, vector<18x1x8xf32>
    tpu.vector_store %arg7[%c0_18, %c17_19, %c0_20], %16 {strides = array<i32>} : memref<18x18x8xf32, #tpu.memory_space<vmem>>, vector<18x1x8xf32>,
    %c1 = arith.constant 1 : index
    %c1_21 = arith.constant 1 : index
    %c0_22 = arith.constant 0 : index
    %21 = vector.load %arg7[%c1, %c1_21, %c0_22] : memref<18x18x8xf32, #tpu.memory_space<vmem>>, vector<16x16x8xf32>
    tpu.vector_store %arg7[%c1, %c1_21, %c0_22], %14 {strides = array<i32>} : memref<18x18x8xf32, #tpu.memory_space<vmem>>, vector<16x16x8xf32>,
    %c0_23 = arith.constant 0 : index
    %c0_24 = arith.constant 0 : index
    %c0_25 = arith.constant 0 : index
    %22 = vector.load %arg7[%c0_23, %c0_24, %c0_25] : memref<18x18x8xf32, #tpu.memory_space<vmem>>, vector<16x16x8xf32>
    %c0_26 = arith.constant 0 : index
    %c1_27 = arith.constant 1 : index
    %c0_28 = arith.constant 0 : index
    %23 = vector.load %arg7[%c0_26, %c1_27, %c0_28] : memref<18x18x8xf32, #tpu.memory_space<vmem>>, vector<16x16x8xf32>
    %c0_29 = arith.constant 0 : index
    %c2 = arith.constant 2 : index
    %c0_30 = arith.constant 0 : index
    %24 = vector.load %arg7[%c0_29, %c2, %c0_30] : memref<18x18x8xf32, #tpu.memory_space<vmem>>, vector<16x16x8xf32>
    %c1_31 = arith.constant 1 : index
    %c0_32 = arith.constant 0 : index
    %c0_33 = arith.constant 0 : index
    %25 = vector.load %arg7[%c1_31, %c0_32, %c0_33] : memref<18x18x8xf32, #tpu.memory_space<vmem>>, vector<16x16x8xf32>
    %c1_34 = arith.constant 1 : index
    %c1_35 = arith.constant 1 : index
    %c0_36 = arith.constant 0 : index
    %26 = vector.load %arg7[%c1_34, %c1_35, %c0_36] : memref<18x18x8xf32, #tpu.memory_space<vmem>>, vector<16x16x8xf32>
    %c1_37 = arith.constant 1 : index
    %c2_38 = arith.constant 2 : index
    %c0_39 = arith.constant 0 : index
    %27 = vector.load %arg7[%c1_37, %c2_38, %c0_39] : memref<18x18x8xf32, #tpu.memory_space<vmem>>, vector<16x16x8xf32>
    %c2_40 = arith.constant 2 : index
    %c0_41 = arith.constant 0 : index
    %c0_42 = arith.constant 0 : index
    %28 = vector.load %arg7[%c2_40, %c0_41, %c0_42] : memref<18x18x8xf32, #tpu.memory_space<vmem>>, vector<16x16x8xf32>
    %c2_43 = arith.constant 2 : index
    %c1_44 = arith.constant 1 : index
    %c0_45 = arith.constant 0 : index
    %29 = vector.load %arg7[%c2_43, %c1_44, %c0_45] : memref<18x18x8xf32, #tpu.memory_space<vmem>>, vector<16x16x8xf32>
    %c2_46 = arith.constant 2 : index
    %c2_47 = arith.constant 2 : index
    %c0_48 = arith.constant 0 : index
    %30 = vector.load %arg7[%c2_46, %c2_47, %c0_48] : memref<18x18x8xf32, #tpu.memory_space<vmem>>, vector<16x16x8xf32>
    %31 = tpu.concatenate %22, %23, %24, %25, %26, %27, %28, %29, %30 in 2 : vector<16x16x8xf32>, vector<16x16x8xf32>, vector<16x16x8xf32>, vector<16x16x8xf32>, vector<16x16x8xf32>, vector<16x16x8xf32>, vector<16x16x8xf32>, vector<16x16x8xf32>, vector<16x16x8xf32> -> vector<16x16x72xf32>
    %32 = vector.shape_cast %31 : vector<16x16x72xf32> to vector<256x72xf32>
    %c0_49 = arith.constant 0 : index
    %c0_50 = arith.constant 0 : index
    %33 = vector.load %arg2[%c0_49, %c0_50] : memref<72x8xf32, #tpu.memory_space<vmem>>, vector<72x8xf32>
    %cst_51 = arith.constant dense<0.000000e+00> : vector<256x8xf32>
    %34 = tpu.matmul %32, %33, %cst_51 {dimension_numbers = #tpu.dot_dimension_numbers<[1], [0], [0], [1], [0, 0, 1, 1], [], []>} : vector<256x72xf32>, vector<72x8xf32>, vector<256x8xf32> -> vector<256x8xf32>
    %cst_52 = arith.constant dense<0.000000e+00> : vector<8xf32>
    %35 = vector.multi_reduction <add>, %34, %cst_52 [0] : vector<256x8xf32> to vector<8xf32>
    %36 = vector.shape_cast %35 : vector<8xf32> to vector<1x8xf32>
    %37 = arith.mulf %34, %34 : vector<256x8xf32>
    %cst_53 = arith.constant dense<0.000000e+00> : vector<8xf32>
    %38 = vector.multi_reduction <add>, %37, %cst_53 [0] : vector<256x8xf32> to vector<8xf32>
    %39 = vector.shape_cast %38 : vector<8xf32> to vector<1x8xf32>
    %40 = vector.shape_cast %36 : vector<1x8xf32> to vector<1x1x8xf32>
    %c0_54 = arith.constant 0 : index
    %c0_55 = arith.constant 0 : index
    %c0_56 = arith.constant 0 : index
    %41 = vector.load %arg6[%c0_54, %c0_55, %c0_56] : memref<1x2x8xf32, #tpu.memory_space<vmem>>, vector<1x1x8xf32>
    tpu.vector_store %arg6[%c0_54, %c0_55, %c0_56], %40 {strides = array<i32>} : memref<1x2x8xf32, #tpu.memory_space<vmem>>, vector<1x1x8xf32>,
    %42 = vector.shape_cast %39 : vector<1x8xf32> to vector<1x1x8xf32>
    %c0_57 = arith.constant 0 : index
    %c1_58 = arith.constant 1 : index
    %c0_59 = arith.constant 0 : index
    %43 = vector.load %arg6[%c0_57, %c1_58, %c0_59] : memref<1x2x8xf32, #tpu.memory_space<vmem>>, vector<1x1x8xf32>
    tpu.vector_store %arg6[%c0_57, %c1_58, %c0_59], %42 {strides = array<i32>} : memref<1x2x8xf32, #tpu.memory_space<vmem>>, vector<1x1x8xf32>,
    %44 = vector.shape_cast %34 : vector<256x8xf32> to vector<1x16x16x8xf32>
    %c0_60 = arith.constant 0 : index
    %c0_61 = arith.constant 0 : index
    %c0_62 = arith.constant 0 : index
    %c0_63 = arith.constant 0 : index
    %45 = vector.load %arg5[%c0_60, %c0_61, %c0_62, %c0_63] : memref<1x16x16x8xf32, #tpu.memory_space<vmem>>, vector<1x16x16x8xf32>
    tpu.vector_store %arg5[%c0_60, %c0_61, %c0_62, %c0_63], %44 {strides = array<i32>} : memref<1x16x16x8xf32, #tpu.memory_space<vmem>>, vector<1x16x16x8xf32>,
    return
  }
  func.func @transform_0(%arg0: i32) -> (i32, i32, i32, i32) {
    %c0_i32 = arith.constant 0 : i32
    %c0_i32_0 = arith.constant 0 : i32
    %c0_i32_1 = arith.constant 0 : i32
    %c0_i32_2 = arith.constant 0 : i32
    return %arg0, %c0_i32, %c0_i32_0, %c0_i32_1 : i32, i32, i32, i32
  }
  func.func @transform_1(%arg0: i32) -> (i32, i32) {
    %c0_i32 = arith.constant 0 : i32
    %c0_i32_0 = arith.constant 0 : i32
    %c0_i32_1 = arith.constant 0 : i32
    return %c0_i32, %c0_i32_0 : i32, i32
  }
  func.func @transform_2(%arg0: i32) -> (i32, i32) {
    %c0_i32 = arith.constant 0 : i32
    %c0_i32_0 = arith.constant 0 : i32
    %c0_i32_1 = arith.constant 0 : i32
    return %c0_i32, %c0_i32_0 : i32, i32
  }
  func.func @transform_3(%arg0: i32) -> (i32, i32) {
    %c0_i32 = arith.constant 0 : i32
    %c0_i32_0 = arith.constant 0 : i32
    %c0_i32_1 = arith.constant 0 : i32
    return %c0_i32, %c0_i32_0 : i32, i32
  }
  func.func @transform_4(%arg0: i32) -> (i32, i32, i32, i32) {
    %c0_i32 = arith.constant 0 : i32
    %c0_i32_0 = arith.constant 0 : i32
    %c0_i32_1 = arith.constant 0 : i32
    %c0_i32_2 = arith.constant 0 : i32
    return %arg0, %c0_i32, %c0_i32_0, %c0_i32_1 : i32, i32, i32, i32
  }
  func.func @transform_5(%arg0: i32) -> (i32, i32, i32) {
    %c0_i32 = arith.constant 0 : i32
    %c0_i32_0 = arith.constant 0 : i32
    %c0_i32_1 = arith.constant 0 : i32
    return %arg0, %c0_i32, %c0_i32_0 : i32, i32, i32
  }
}

module attributes {stable_mosaic.version = 11 : i64} {
  func.func @_bn_act_kernel(%arg0: i32, %arg1: memref<16x128xf32, #tpu.memory_space<vmem>>, %arg2: memref<1x128xf32, #tpu.memory_space<vmem>>, %arg3: memref<1x128xf32, #tpu.memory_space<vmem>>, %arg4: memref<16x128xf32, #tpu.memory_space<vmem>>) attributes {dimension_semantics = [#tpu.dimension_semantics<parallel>], iteration_bounds = array<i64: 2>, scalar_prefetch = 0 : i64, scratch_operands = 0 : i64, tpu.core_type = #tpu.core_type<tc>, window_params = [{transform_indices = @transform_0, window_bounds = array<i64: 16, 128>}, {pipeline_mode = #tpu.pipeline_mode<synchronous>, transform_indices = @transform_1, window_bounds = array<i64: 1, 128>}, {pipeline_mode = #tpu.pipeline_mode<synchronous>, transform_indices = @transform_2, window_bounds = array<i64: 1, 128>}, {transform_indices = @transform_3, window_bounds = array<i64: 16, 128>}]} {
    %c0 = arith.constant 0 : index
    %c0_0 = arith.constant 0 : index
    %0 = vector.load %arg1[%c0, %c0_0] : memref<16x128xf32, #tpu.memory_space<vmem>>, vector<16x128xf32>
    %c0_1 = arith.constant 0 : index
    %c0_2 = arith.constant 0 : index
    %1 = vector.load %arg2[%c0_1, %c0_2] : memref<1x128xf32, #tpu.memory_space<vmem>>, vector<1x128xf32>
    %2 = vector.broadcast %1 : vector<1x128xf32> to vector<16x128xf32>
    %3 = arith.mulf %0, %2 : vector<16x128xf32>
    %c0_3 = arith.constant 0 : index
    %c0_4 = arith.constant 0 : index
    %4 = vector.load %arg3[%c0_3, %c0_4] : memref<1x128xf32, #tpu.memory_space<vmem>>, vector<1x128xf32>
    %5 = vector.broadcast %4 : vector<1x128xf32> to vector<16x128xf32>
    %6 = arith.addf %3, %5 : vector<16x128xf32>
    %cst = arith.constant 0.000000e+00 : f32
    %7 = vector.broadcast %cst : f32 to vector<16x128xf32>
    %8 = arith.cmpf ogt, %6, %7 : vector<16x128xf32>
    %cst_5 = arith.constant 2.000000e-01 : f32
    %9 = vector.broadcast %cst_5 : f32 to vector<16x128xf32>
    %10 = arith.mulf %9, %6 : vector<16x128xf32>
    %11 = arith.select %8, %6, %10 : vector<16x128xi1>, vector<16x128xf32>
    %c0_6 = arith.constant 0 : index
    %c0_7 = arith.constant 0 : index
    %12 = vector.load %arg4[%c0_6, %c0_7] : memref<16x128xf32, #tpu.memory_space<vmem>>, vector<16x128xf32>
    tpu.vector_store %arg4[%c0_6, %c0_7], %11 {strides = array<i32>} : memref<16x128xf32, #tpu.memory_space<vmem>>, vector<16x128xf32>,
    return
  }
  func.func @transform_0(%arg0: i32) -> (i32, i32) {
    %c0_i32 = arith.constant 0 : i32
    %c0_i32_0 = arith.constant 0 : i32
    return %arg0, %c0_i32 : i32, i32
  }
  func.func @transform_1(%arg0: i32) -> (i32, i32) {
    %c0_i32 = arith.constant 0 : i32
    %c0_i32_0 = arith.constant 0 : i32
    %c0_i32_1 = arith.constant 0 : i32
    return %c0_i32, %c0_i32_0 : i32, i32
  }
  func.func @transform_2(%arg0: i32) -> (i32, i32) {
    %c0_i32 = arith.constant 0 : i32
    %c0_i32_0 = arith.constant 0 : i32
    %c0_i32_1 = arith.constant 0 : i32
    return %c0_i32, %c0_i32_0 : i32, i32
  }
  func.func @transform_3(%arg0: i32) -> (i32, i32) {
    %c0_i32 = arith.constant 0 : i32
    %c0_i32_0 = arith.constant 0 : i32
    return %arg0, %c0_i32 : i32, i32
  }
}

</mosaic_0001>

<llo_original>
// kernel: tile.13
$region0: #{tile.13}
  #allocation0 [shape = 's32[1]{0}', space=sflag, size = 0x4, scoped, tag = 'scoped memory for tile.13']
  %s0 = inlined_call_operand.vmem [shape: f32[8], index: 0, kind: input, shape index: {}]
  %s1 = inlined_call_operand.vmem [shape: f32[16,8], index: 1, kind: output, shape index: {}]
  // Predicated region
  $region2: #{tile.13} parent=0 // pred_check
    _
  $region3: #{tile.13} parent=0 // pred_check_branch
    %3 = sbr.rel (0) target = $region5
  $region4: #{tile.13} parent=0 // pred_region
    _
  $region5: #{tile.13} parent=0 // pred_fallthru
    _
  %v4 = vld [vmem:[%s0] ss:$0 sm:$0xff]
  %5 = vst [vmem:[%s1] sm:$0xff] %v4
  %s6 = scalar_lea.vmem %s1, 8
  %7 = vst [vmem:[%s6] sm:$0xff] %v4

// kernel: tile.14
$region0: #{tile.14}
  %s0 = inlined_call_operand.vmem [shape: f32[16,8], index: 0, kind: input, shape index: {}]
  %s1 = inlined_call_operand.vmem [shape: f32[1,128], index: 1, kind: output, shape index: {}]
  $region1: #{tile.14} parent=0
    #allocation0 [shape = 'u8[4096]{0}', space=vmem, size = 0x1000, scoped, tag = 'scoped mem for output reshape']
    %v2 = vld [vmem:[%s0] sm:$0x1]
    %vm3 = vcmask 64512
    %4 = vst.msk [vmem:[#allocation0] sm:$0x1] %vm3, %v2
    %s5 = scalar_lea.vmem %s0, 15
    %v6 = vld [vmem:[%s5] sm:$0x1]
    %7 = vrot.lane.b32.xlu0 %v6, 120
    %v8 = vpop.permute.xlu0 %7
    %vm9 = vcmask 1048512
    %10 = vst.msk [vmem:[#allocation0] sm:$0x1] %vm9, %v8
    %s11 = scalar_lea.vmem %s0, 14
    %v12 = vld [vmem:[%s11] sm:$0x1]
    %13 = vrot.lane.b32.xlu0 %v12, 112
    %v14 = vpop.permute.xlu0 %13
    %vm15 = vcmask 982912
    %16 = vst.msk [vmem:[#allocation0] sm:$0x1] %vm15, %v14
    %s17 = scalar_lea.vmem %s0, 13
    %v18 = vld [vmem:[%s17] sm:$0x1]
    %19 = vrot.lane.b32.xlu0 %v18, 104
    %v20 = vpop.permute.xlu0 %19
    %vm21 = vcmask 917312
    %22 = vst.msk [vmem:[#allocation0] sm:$0x1] %vm21, %v20
    %s23 = scalar_lea.vmem %s0, 12
    %v24 = vld [vmem:[%s23] sm:$0x1]
    %25 = vrot.lane.b32.xlu0 %v24, 96
    %v26 = vpop.permute.xlu0 %25
    %vm27 = vcmask 851712
    %28 = vst.msk [vmem:[#allocation0] sm:$0x1] %vm27, %v26
    %s29 = scalar_lea.vmem %s0, 11
    %v30 = vld [vmem:[%s29] sm:$0x1]
    %31 = vrot.lane.b32.xlu0 %v30, 88
    %v32 = vpop.permute.xlu0 %31
    %vm33 = vcmask 786112
    %34 = vst.msk [vmem:[#allocation0] sm:$0x1] %vm33, %v32
    %s35 = scalar_lea.vmem %s0, 10
    %v36 = vld [vmem:[%s35] sm:$0x1]
    %37 = vrot.lane.b32.xlu0 %v36, 80
    %v38 = vpop.permute.xlu0 %37
    %vm39 = vcmask 720512
    %40 = vst.msk [vmem:[#allocation0] sm:$0x1] %vm39, %v38
    %s41 = scalar_lea.vmem %s0, 9
    %v42 = vld [vmem:[%s41] sm:$0x1]
    %43 = vrot.lane.b32.xlu0 %v42, 72
    %v44 = vpop.permute.xlu0 %43
    %vm45 = vcmask 654912
    %46 = vst.msk [vmem:[#allocation0] sm:$0x1] %vm45, %v44
    %s47 = scalar_lea.vmem %s0, 8
    %v48 = vld [vmem:[%s47] sm:$0x1]
    %49 = vrot.lane.b32.xlu0 %v48, 64
    %v50 = vpop.permute.xlu0 %49
    %vm51 = vcmask 589312
    %52 = vst.msk [vmem:[#allocation0] sm:$0x1] %vm51, %v50
    %s53 = scalar_lea.vmem %s0, 7
    %v54 = vld [vmem:[%s53] sm:$0x1]
    %55 = vrot.lane.b32.xlu0 %v54, 56
    %v56 = vpop.permute.xlu0 %55
    %vm57 = vcmask 523712
    %58 = vst.msk [vmem:[#allocation0] sm:$0x1] %vm57, %v56
    %s59 = scalar_lea.vmem %s0, 6
    %v60 = vld [vmem:[%s59] sm:$0x1]
    %61 = vrot.lane.b32.xlu0 %v60, 48
    %v62 = vpop.permute.xlu0 %61
    %vm63 = vcmask 458112
    %64 = vst.msk [vmem:[#allocation0] sm:$0x1] %vm63, %v62
    %s65 = scalar_lea.vmem %s0, 5
    %v66 = vld [vmem:[%s65] sm:$0x1]
    %67 = vrot.lane.b32.xlu0 %v66, 40
    %v68 = vpop.permute.xlu0 %67
    %vm69 = vcmask 392512
    %70 = vst.msk [vmem:[#allocation0] sm:$0x1] %vm69, %v68
    %s71 = scalar_lea.vmem %s0, 4
    %v72 = vld [vmem:[%s71] sm:$0x1]
    %73 = vrot.lane.b32.xlu0 %v72, 32
    %v74 = vpop.permute.xlu0 %73
    %vm75 = vcmask 326912
    %76 = vst.msk [vmem:[#allocation0] sm:$0x1] %vm75, %v74
    %s77 = scalar_lea.vmem %s0, 3
    %v78 = vld [vmem:[%s77] sm:$0x1]
    %79 = vrot.lane.b32.xlu0 %v78, 24
    %v80 = vpop.permute.xlu0 %79
    %vm81 = vcmask 261312
    %82 = vst.msk [vmem:[#allocation0] sm:$0x1] %vm81, %v80
    %s83 = scalar_lea.vmem %s0, 2
    %v84 = vld [vmem:[%s83] sm:$0x1]
    %85 = vrot.lane.b32.xlu0 %v84, 16
    %v86 = vpop.permute.xlu0 %85
    %vm87 = vcmask 195712
    %88 = vst.msk [vmem:[#allocation0] sm:$0x1] %vm87, %v86
    %s89 = scalar_lea.vmem %s0, 1
    %v90 = vld [vmem:[%s89] sm:$0x1]
    %91 = vrot.lane.b32.xlu0 %v90, 8
    %v92 = vpop.permute.xlu0 %91
    %vm93 = vcmask 130112
    %94 = vst.msk [vmem:[#allocation0] sm:$0x1] %vm93, %v92
    %s96 = sshll.u32 1, 1
    %s97 = ssub.s32 %s96, 1
    %v99 = vld [vmem:[#allocation0] sm:%s97]
    %s100 = sshll.u32 1, 1
    %s101 = ssub.s32 %s100, 1
    %102 = vst [vmem:[%s1] sm:%s101] %v99

// kernel: double_conv.5
$region0: #{double_conv.5}
  #allocation0 [shape = 'u32[]', space=smem, size = 0x4, offset = 0x4, fixed_abs, tag = 'smem constant byte address 0x4 - core index']
  #allocation1 [shape = 'u32[144,128]{1,0:T(1,128)}', space=vmem, size = 0x12000, scoped, tag = 'internal scratch']
  %s0 = inlined_call_operand.vmem [shape: f32[32,128], index: 0, kind: input, shape index: {}]
  %s1 = inlined_call_operand.vmem [shape: f32[1,128], index: 1, kind: input, shape index: {}]
  %s2 = inlined_call_operand.vmem [shape: f32[1,128], index: 2, kind: input, shape index: {}]
  %s3 = inlined_call_operand.vmem [shape: f32[32,128], index: 3, kind: output, shape index: {}]
  %s4 = sld [smem:[#allocation0]]
  $region45: #{double_conv.5} parent=0
    _
  %s6 = ssub.s32 1, %s4
  %s7 = scalar_select 0, %s6, %s4
  loop: start=0, step=1, limit=4
  $region2: #{double_conv.5} parent=0 // loop_pre_header
    _
  $region3: #{double_conv.5} parent=0 // loop_header
    %s9 = sphi 0, %s13
    %p10 = scmp.ge.s32.totalorder %s9, 4
    %s19 = sphi 0, %s21
    %s22 = sphi 0, %s19
    %s23 = sphi 0, %s22
    %s39 = sphi 0, %s23
    %s43 = sphi 0, %s43
    %s45 = sphi 0, %s43
    %s46 = sphi 0, %s45
    %s60 = sphi 0, %s46
    %s64 = sphi 0, %s64
    %s66 = sphi 0, %s64
    %s67 = sphi 0, %s66
    %s81 = sphi 0, %s67
    %s87 = sphi 0, %s89
    %s90 = sphi 0, %s87
    %s91 = sphi 0, %s90
    %s107 = sphi 0, %s91
  $region4: #{double_conv.5} parent=0 // loop_header_branch
    %12 = sbr.rel (%p10) target = $region8
  $region5: #{double_conv.5} parent=0 // loop_body
    %s14 = ssub.s32 %s9, 1
    %s15 = ssub.s32 %s9, 2
    %s16 = sadd.s32 %s9, 1
    %s17 = ssub.s32 %s9, %s16
    %p18 = scmp.eq.s32.totalorder %s17, 0
    %s20 = sadd.s32 %s19, 1
    %s21 = scalar_select %p18, %s19, %s20
    %p24 = pneg %p18
    %p25 = scmp.eq.s32.totalorder %s9, 1
    %p26 = por %p24, %p25
    %p27 = scmp.ne.s32.totalorder %s19, %s22
    %p28 = scmp.eq.s32.totalorder %s9, 0
    %p29 = por %p27, %p28
    %p30 = scmp.ne.s32.totalorder %s19, %s22
    %p31 = scmp.eq.s32.totalorder %s14, 1
    %p32 = por %p30, %p31
    %p33 = scmp.ne.s32.totalorder %s22, %s23
    %p34 = scmp.eq.s32.totalorder %s14, 0
    %p35 = por %p33, %p34
    %p36 = scmp.ne.s32.totalorder %s22, %s23
    %p37 = scmp.eq.s32.totalorder %s15, 1
    %p38 = por %p36, %p37
    %p40 = scmp.ne.s32.totalorder %s23, %s39
    %p41 = scmp.eq.s32.totalorder %s15, 0
    %p42 = por %p40, %p41
    %s44 = sadd.s32 %s43, 1
    %p47 = scmp.eq.s32.totalorder %s9, 1
    %p48 = scmp.ne.s32.totalorder %s43, %s45
    %p49 = scmp.eq.s32.totalorder %s9, 0
    %p50 = por %p48, %p49
    %p51 = scmp.ne.s32.totalorder %s43, %s45
    %p52 = scmp.eq.s32.totalorder %s14, 1
    %p53 = por %p51, %p52
    %p54 = scmp.ne.s32.totalorder %s45, %s46
    %p55 = scmp.eq.s32.totalorder %s14, 0
    %p56 = por %p54, %p55
    %p57 = scmp.ne.s32.totalorder %s45, %s46
    %p58 = scmp.eq.s32.totalorder %s15, 1
    %p59 = por %p57, %p58
    %p61 = scmp.ne.s32.totalorder %s46, %s60
    %p62 = scmp.eq.s32.totalorder %s15, 0
    %p63 = por %p61, %p62
    %s65 = sadd.s32 %s64, 1
    %p68 = scmp.eq.s32.totalorder %s9, 1
    %p69 = scmp.ne.s32.totalorder %s64, %s66
    %p70 = scmp.eq.s32.totalorder %s9, 0
    %p71 = por %p69, %p70
    %p72 = scmp.ne.s32.totalorder %s64, %s66
    %p73 = scmp.eq.s32.totalorder %s14, 1
    %p74 = por %p72, %p73
    %p75 = scmp.ne.s32.totalorder %s66, %s67
    %p76 = scmp.eq.s32.totalorder %s14, 0
    %p77 = por %p75, %p76
    %p78 = scmp.ne.s32.totalorder %s66, %s67
    %p79 = scmp.eq.s32.totalorder %s15, 1
    %p80 = por %p78, %p79
    %p82 = scmp.ne.s32.totalorder %s67, %s81
    %p83 = scmp.eq.s32.totalorder %s15, 0
    %p84 = por %p82, %p83
    %s85 = ssub.s32 %s9, %s16
    %p86 = scmp.eq.s32.totalorder %s85, 0
    %s88 = sadd.s32 %s87, 1
    %s89 = scalar_select %p86, %s87, %s88
    %p92 = pneg %p86
    %p93 = scmp.eq.s32.totalorder %s9, 1
    %p94 = por %p92, %p93
    %p95 = scmp.ne.s32.totalorder %s87, %s90
    %p96 = scmp.eq.s32.totalorder %s9, 0
    %p97 = por %p95, %p96
    %p98 = scmp.ne.s32.totalorder %s87, %s90
    %p99 = scmp.eq.s32.totalorder %s14, 1
    %p100 = por %p98, %p99
    %p101 = scmp.ne.s32.totalorder %s90, %s91
    %p102 = scmp.eq.s32.totalorder %s14, 0
    %p103 = por %p101, %p102
    %p104 = scmp.ne.s32.totalorder %s90, %s91
    %p105 = scmp.eq.s32.totalorder %s15, 1
    %p106 = por %p104, %p105
    %p108 = scmp.ne.s32.totalorder %s91, %s107
    %p109 = scmp.eq.s32.totalorder %s15, 0
    %p110 = por %p108, %p109
    %p111 = scmp.le.s32.totalorder 1, %s9
    %p112 = scmp.lt.s32.totalorder %s9, 3
    %p113 = pnand %p111, %p112
    %p114 = pneg %p113
    // Predicated region
    $region9: #{double_conv.5} parent=5 // pred_check
      _
    $region10: #{double_conv.5} parent=5 // pred_check_branch
      %116 = sbr.rel (%p113) target = $region12
    $region11: #{double_conv.5} parent=5 // pred_region
      %s117 = ssub.s32 %s9, 1
      // Predicated region
      $region13: #{double_conv.5} parent=11 // pred_check
        %p118 = pneg %p56
      $region14: #{double_conv.5} parent=11 // pred_check_branch
        %120 = sbr.rel (%p118) target = $region16
      $region15: #{double_conv.5} parent=11 // pred_region
        _
      $region16: #{double_conv.5} parent=11 // pred_fallthru
        _
      // Predicated region
      $region17: #{double_conv.5} parent=11 // pred_check
        %p121 = pneg %p77
      $region18: #{double_conv.5} parent=11 // pred_check_branch
        %123 = sbr.rel (%p121) target = $region20
      $region19: #{double_conv.5} parent=11 // pred_region
        _
      $region20: #{double_conv.5} parent=11 // pred_fallthru
        _
    $region12: #{double_conv.5} parent=5 // pred_fallthru
      _
    %p124 = scmp.lt.s32.totalorder %s9, 2
    // Predicated region
    $region21: #{double_conv.5} parent=5 // pred_check
      %p125 = pneg %p124
    $region22: #{double_conv.5} parent=5 // pred_check_branch
      %127 = sbr.rel (%p125) target = $region24
    $region23: #{double_conv.5} parent=5 // pred_region
      // Predicated region
      $region25: #{double_conv.5} parent=23 // pred_check
        %p128 = pneg %p29
      $region26: #{double_conv.5} parent=23 // pred_check_branch
        %130 = sbr.rel (%p128) target = $region28
      $region27: #{double_conv.5} parent=23 // pred_region
        %s131 = smul.u32 2, %s9
        %p132 = scmp.lt.s32.totalorder %s131, 3
        %s133 = scalar_select %p132, %s131, 3
        %s134 = smul.addr %s133, 8
        %s135 = scalar_lea.vmem %s0, %s134
        %s136 = smul.u32 2, %s9
      $region28: #{double_conv.5} parent=23 // pred_fallthru
        _
    $region24: #{double_conv.5} parent=5 // pred_fallthru
      _
    %p137 = scmp.le.s32.totalorder 1, %s9
    %p138 = scmp.lt.s32.totalorder %s9, 3
    %p139 = pnand %p137, %p138
    %p140 = pneg %p139
    // Predicated region
    $region29: #{double_conv.5} parent=5 // pred_check
      _
    $region30: #{double_conv.5} parent=5 // pred_check_branch
      %142 = sbr.rel (%p139) target = $region32
    $region31: #{double_conv.5} parent=5 // pred_region
      %s143 = ssub.s32 %s9, 1
      %s144 = smul.u32 2, %s14
      %p145 = scmp.lt.s32.totalorder %s144, 3
      %s146 = scalar_select %p145, %s144, 3
      %s147 = smul.addr %s146, 8
      %s148 = scalar_lea.vmem %s0, %s147
      %p149 = pneg %p35
      %p150 = pneg %p32
      %p151 = pneg %p56
      %p152 = pneg %p53
      %p153 = pneg %p77
      %p154 = pneg %p74
      %p155 = pneg %p103
      %p156 = pneg %p100
      %s157 = smul.u32 2, %s14
      %p158 = scmp.lt.s32.totalorder %s157, 3
      %s159 = scalar_select %p158, %s157, 3
      %s160 = smul.addr %s159, 8
      %s161 = scalar_lea.vmem %s3, %s160
      %s162 = smul.u32 2, %s14
      %p163 = scmp.lt.s32.totalorder %s162, 3
      %s164 = scalar_select %p163, %s162, 3
      %s165 = smul.addr %s164, 8
      %s166 = scalar_lea.vmem %s0, %s165
      %s167 = smul.u32 2, %s14
      %s168 = smul.u32 2, %s14
      %p169 = scmp.lt.s32.totalorder %s168, 3
      %s170 = scalar_select %p169, %s168, 3
      %s171 = smul.addr %s170, 8
      %s172 = scalar_lea.vmem %s3, %s171
      %s173 = smul.u32 2, %s14
      %v174 = vld [vmem:[%s166] sm:$0xff]
      %v175 = vld [vmem:[%s166 + $0x8] sm:$0xff]
      %v176 = vld [vmem:[%s1] sm:$0x1]
      %v178 = vlaneseq
      %v179 = vshrl.u32 %v178, 7
      %v180 = vsub.s32 0, %v179
      %v181 = vrot.slane %v176, %v180
      %v183 = vmul.f32 %v174, %v181
      %v184 = vmul.f32 %v175, %v181
      %v185 = vld [vmem:[%s2] sm:$0x1]
      %v187 = vlaneseq
      %v188 = vshrl.u32 %v187, 7
      %v189 = vsub.s32 0, %v188
      %v190 = vrot.slane %v185, %v189
      %v192 = vadd.f32 %v183, %v190
      %v193 = vadd.f32 %v184, %v190
      %vm194 = vcmp.gt.f32.partialorder %v192, 0.0
      %vm195 = vcmp.gt.f32.partialorder %v193, 0.0
      %v196 = vmul.f32 %v192, 0.2
      %v197 = vmul.f32 %v193, 0.2
      %v198 = vsel %vm194, %v192, %v196
      %v199 = vsel %vm195, %v193, %v197
      %200 = vst [vmem:[%s172] sm:$0xff] %v198
      %201 = vst [vmem:[%s172 + $0x8] sm:$0xff] %v199
      %s202 = smul.u32 2, %s14
      %p203 = scmp.lt.s32.totalorder %s202, 3
      %s204 = scalar_select %p203, %s202, 3
      %s205 = smul.addr %s204, 8
      %s206 = scalar_lea.vmem %s3, %s205
      // Predicated region
      $region33: #{double_conv.5} parent=31 // pred_check
        %p207 = pneg %p100
      $region34: #{double_conv.5} parent=31 // pred_check_branch
        %209 = sbr.rel (%p207) target = $region36
      $region35: #{double_conv.5} parent=31 // pred_region
        %s210 = smul.u32 2, %s14
      $region36: #{double_conv.5} parent=31 // pred_fallthru
        _
    $region32: #{double_conv.5} parent=5 // pred_fallthru
      _
    %p211 = scmp.le.s32.totalorder 2, %s9
    // Predicated region
    $region37: #{double_conv.5} parent=5 // pred_check
      %p212 = pneg %p211
    $region38: #{double_conv.5} parent=5 // pred_check_branch
      %214 = sbr.rel (%p212) target = $region40
    $region39: #{double_conv.5} parent=5 // pred_region
      %s215 = ssub.s32 %s9, 2
      // Predicated region
      $region41: #{double_conv.5} parent=39 // pred_check
        %p216 = pneg %p106
      $region42: #{double_conv.5} parent=39 // pred_check_branch
        %218 = sbr.rel (%p216) target = $region44
      $region43: #{double_conv.5} parent=39 // pred_region
        %s219 = smul.u32 2, %s15
        %p220 = scmp.lt.s32.totalorder %s219, 3
        %s221 = scalar_select %p220, %s219, 3
        %s222 = smul.addr %s221, 8
        %s223 = scalar_lea.vmem %s3, %s222
      $region44: #{double_conv.5} parent=39 // pred_fallthru
        _
    $region40: #{double_conv.5} parent=5 // pred_fallthru
      _
  $region6: #{double_conv.5} parent=0 // loop_footer
    %s13 = sadd.s32 1, %s9
  $region7: #{double_conv.5} parent=0 // loop_footer_branch
    %8 = sbr.rel target = $region3
  $region8: #{double_conv.5} parent=0 // loop_exit
    _

// kernel: double_conv.3
$region0: #{double_conv.3}
  #allocation0 [shape = 'u32[]', space=smem, size = 0x4, offset = 0x4, fixed_abs, tag = 'smem constant byte address 0x4 - core index']
  #allocation1 [shape = 'u32[144,128]{1,0:T(1,128)}', space=vmem, size = 0x12000, scoped, tag = 'internal scratch']
  #allocation2 [shape = 'f32[18,18,4]{2,1,0:T(8,128)}', space=vmem, size = 0x36000, scoped, tag = 'scratch operand']
  %s0 = inlined_call_operand.vmem [shape: f32[2,16,16,4], index: 0, kind: input, shape index: {}]
  %s1 = inlined_call_operand.vmem [shape: f32[36,8], index: 1, kind: input, shape index: {}]
  %s2 = inlined_call_operand.vmem [shape: f32[1,4], index: 2, kind: input, shape index: {}]
  %s3 = inlined_call_operand.vmem [shape: f32[1,4], index: 3, kind: input, shape index: {}]
  %s4 = inlined_call_operand.vmem [shape: f32[2,16,16,8], index: 4, kind: output, shape index: {0}]
  %s5 = inlined_call_operand.vmem [shape: f32[2,2,8], index: 5, kind: output, shape index: {1}]
  %6 = xla_tuple %s4, %s5
  %s7 = sld [smem:[#allocation0]]
  $region57: #{double_conv.3} parent=0
    _
  %s9 = ssub.s32 1, %s7
  %s10 = scalar_select 0, %s9, %s7
  loop: start=0, step=1, limit=4
  $region2: #{double_conv.3} parent=0 // loop_pre_header
    _
  $region3: #{double_conv.3} parent=0 // loop_header
    %s12 = sphi 0, %s16
    %p13 = scmp.ge.s32.totalorder %s12, 4
    %s22 = sphi 0, %s24
    %s25 = sphi 0, %s22
    %s26 = sphi 0, %s25
    %s42 = sphi 0, %s26
    %s46 = sphi 0, %s46
    %s48 = sphi 0, %s46
    %s49 = sphi 0, %s48
    %s63 = sphi 0, %s49
    %s67 = sphi 0, %s67
    %s69 = sphi 0, %s67
    %s70 = sphi 0, %s69
    %s84 = sphi 0, %s70
    %s88 = sphi 0, %s88
    %s90 = sphi 0, %s88
    %s91 = sphi 0, %s90
    %s105 = sphi 0, %s91
    %s111 = sphi 0, %s113
    %s114 = sphi 0, %s111
    %s115 = sphi 0, %s114
    %s131 = sphi 0, %s115
    %s137 = sphi 0, %s139
    %s140 = sphi 0, %s137
    %s141 = sphi 0, %s140
    %s157 = sphi 0, %s141
  $region4: #{double_conv.3} parent=0 // loop_header_branch
    %15 = sbr.rel (%p13) target = $region8
  $region5: #{double_conv.3} parent=0 // loop_body
    %s17 = ssub.s32 %s12, 1
    %s18 = ssub.s32 %s12, 2
    %s19 = sadd.s32 %s12, 1
    %s20 = ssub.s32 %s12, %s19
    %p21 = scmp.eq.s32.totalorder %s20, 0
    %s23 = sadd.s32 %s22, 1
    %s24 = scalar_select %p21, %s22, %s23
    %p27 = pneg %p21
    %p28 = scmp.eq.s32.totalorder %s12, 1
    %p29 = por %p27, %p28
    %p30 = scmp.ne.s32.totalorder %s22, %s25
    %p31 = scmp.eq.s32.totalorder %s12, 0
    %p32 = por %p30, %p31
    %p33 = scmp.ne.s32.totalorder %s22, %s25
    %p34 = scmp.eq.s32.totalorder %s17, 1
    %p35 = por %p33, %p34
    %p36 = scmp.ne.s32.totalorder %s25, %s26
    %p37 = scmp.eq.s32.totalorder %s17, 0
    %p38 = por %p36, %p37
    %p39 = scmp.ne.s32.totalorder %s25, %s26
    %p40 = scmp.eq.s32.totalorder %s18, 1
    %p41 = por %p39, %p40
    %p43 = scmp.ne.s32.totalorder %s26, %s42
    %p44 = scmp.eq.s32.totalorder %s18, 0
    %p45 = por %p43, %p44
    %s47 = sadd.s32 %s46, 1
    %p50 = scmp.eq.s32.totalorder %s12, 1
    %p51 = scmp.ne.s32.totalorder %s46, %s48
    %p52 = scmp.eq.s32.totalorder %s12, 0
    %p53 = por %p51, %p52
    %p54 = scmp.ne.s32.totalorder %s46, %s48
    %p55 = scmp.eq.s32.totalorder %s17, 1
    %p56 = por %p54, %p55
    %p57 = scmp.ne.s32.totalorder %s48, %s49
    %p58 = scmp.eq.s32.totalorder %s17, 0
    %p59 = por %p57, %p58
    %p60 = scmp.ne.s32.totalorder %s48, %s49
    %p61 = scmp.eq.s32.totalorder %s18, 1
    %p62 = por %p60, %p61
    %p64 = scmp.ne.s32.totalorder %s49, %s63
    %p65 = scmp.eq.s32.totalorder %s18, 0
    %p66 = por %p64, %p65
    %s68 = sadd.s32 %s67, 1
    %p71 = scmp.eq.s32.totalorder %s12, 1
    %p72 = scmp.ne.s32.totalorder %s67, %s69
    %p73 = scmp.eq.s32.totalorder %s12, 0
    %p74 = por %p72, %p73
    %p75 = scmp.ne.s32.totalorder %s67, %s69
    %p76 = scmp.eq.s32.totalorder %s17, 1
    %p77 = por %p75, %p76
    %p78 = scmp.ne.s32.totalorder %s69, %s70
    %p79 = scmp.eq.s32.totalorder %s17, 0
    %p80 = por %p78, %p79
    %p81 = scmp.ne.s32.totalorder %s69, %s70
    %p82 = scmp.eq.s32.totalorder %s18, 1
    %p83 = por %p81, %p82
    %p85 = scmp.ne.s32.totalorder %s70, %s84
    %p86 = scmp.eq.s32.totalorder %s18, 0
    %p87 = por %p85, %p86
    %s89 = sadd.s32 %s88, 1
    %p92 = scmp.eq.s32.totalorder %s12, 1
    %p93 = scmp.ne.s32.totalorder %s88, %s90
    %p94 = scmp.eq.s32.totalorder %s12, 0
    %p95 = por %p93, %p94
    %p96 = scmp.ne.s32.totalorder %s88, %s90
    %p97 = scmp.eq.s32.totalorder %s17, 1
    %p98 = por %p96, %p97
    %p99 = scmp.ne.s32.totalorder %s90, %s91
    %p100 = scmp.eq.s32.totalorder %s17, 0
    %p101 = por %p99, %p100
    %p102 = scmp.ne.s32.totalorder %s90, %s91
    %p103 = scmp.eq.s32.totalorder %s18, 1
    %p104 = por %p102, %p103
    %p106 = scmp.ne.s32.totalorder %s91, %s105
    %p107 = scmp.eq.s32.totalorder %s18, 0
    %p108 = por %p106, %p107
    %s109 = ssub.s32 %s12, %s19
    %p110 = scmp.eq.s32.totalorder %s109, 0
    %s112 = sadd.s32 %s111, 1
    %s113 = scalar_select %p110, %s111, %s112
    %p116 = pneg %p110
    %p117 = scmp.eq.s32.totalorder %s12, 1
    %p118 = por %p116, %p117
    %p119 = scmp.ne.s32.totalorder %s111, %s114
    %p120 = scmp.eq.s32.totalorder %s12, 0
    %p121 = por %p119, %p120
    %p122 = scmp.ne.s32.totalorder %s111, %s114
    %p123 = scmp.eq.s32.totalorder %s17, 1
    %p124 = por %p122, %p123
    %p125 = scmp.ne.s32.totalorder %s114, %s115
    %p126 = scmp.eq.s32.totalorder %s17, 0
    %p127 = por %p125, %p126
    %p128 = scmp.ne.s32.totalorder %s114, %s115
    %p129 = scmp.eq.s32.totalorder %s18, 1
    %p130 = por %p128, %p129
    %p132 = scmp.ne.s32.totalorder %s115, %s131
    %p133 = scmp.eq.s32.totalorder %s18, 0
    %p134 = por %p132, %p133
    %s135 = ssub.s32 %s12, %s19
    %p136 = scmp.eq.s32.totalorder %s135, 0
    %s138 = sadd.s32 %s137, 1
    %s139 = scalar_select %p136, %s137, %s138
    %p142 = pneg %p136
    %p143 = scmp.eq.s32.totalorder %s12, 1
    %p144 = por %p142, %p143
    %p145 = scmp.ne.s32.totalorder %s137, %s140
    %p146 = scmp.eq.s32.totalorder %s12, 0
    %p147 = por %p145, %p146
    %p148 = scmp.ne.s32.totalorder %s137, %s140
    %p149 = scmp.eq.s32.totalorder %s17, 1
    %p150 = por %p148, %p149
    %p151 = scmp.ne.s32.totalorder %s140, %s141
    %p152 = scmp.eq.s32.totalorder %s17, 0
    %p153 = por %p151, %p152
    %p154 = scmp.ne.s32.totalorder %s140, %s141
    %p155 = scmp.eq.s32.totalorder %s18, 1
    %p156 = por %p154, %p155
    %p158 = scmp.ne.s32.totalorder %s141, %s157
    %p159 = scmp.eq.s32.totalorder %s18, 0
    %p160 = por %p158, %p159
    %p161 = scmp.le.s32.totalorder 1, %s12
    %p162 = scmp.lt.s32.totalorder %s12, 3
    %p163 = pnand %p161, %p162
    %p164 = pneg %p163
    // Predicated region
    $region9: #{double_conv.3} parent=5 // pred_check
      _
    $region10: #{double_conv.3} parent=5 // pred_check_branch
      %166 = sbr.rel (%p163) target = $region12
    $region11: #{double_conv.3} parent=5 // pred_region
      %s167 = ssub.s32 %s12, 1
      // Predicated region
      $region13: #{double_conv.3} parent=11 // pred_check
        %p168 = pneg %p59
      $region14: #{double_conv.3} parent=11 // pred_check_branch
        %170 = sbr.rel (%p168) target = $region16
      $region15: #{double_conv.3} parent=11 // pred_region
        _
      $region16: #{double_conv.3} parent=11 // pred_fallthru
        _
      // Predicated region
      $region17: #{double_conv.3} parent=11 // pred_check
        %p171 = pneg %p80
      $region18: #{double_conv.3} parent=11 // pred_check_branch
        %173 = sbr.rel (%p171) target = $region20
      $region19: #{double_conv.3} parent=11 // pred_region
        _
      $region20: #{double_conv.3} parent=11 // pred_fallthru
        _
      // Predicated region
      $region21: #{double_conv.3} parent=11 // pred_check
        %p174 = pneg %p101
      $region22: #{double_conv.3} parent=11 // pred_check_branch
        %176 = sbr.rel (%p174) target = $region24
      $region23: #{double_conv.3} parent=11 // pred_region
        _
      $region24: #{double_conv.3} parent=11 // pred_fallthru
        _
    $region12: #{double_conv.3} parent=5 // pred_fallthru
      _
    %p177 = scmp.lt.s32.totalorder %s12, 2
    // Predicated region
    $region25: #{double_conv.3} parent=5 // pred_check
      %p178 = pneg %p177
    $region26: #{double_conv.3} parent=5 // pred_check_branch
      %180 = sbr.rel (%p178) target = $region28
    $region27: #{double_conv.3} parent=5 // pred_region
      // Predicated region
      $region29: #{double_conv.3} parent=27 // pred_check
        %p181 = pneg %p32
      $region30: #{double_conv.3} parent=27 // pred_check_branch
        %183 = sbr.rel (%p181) target = $region32
      $region31: #{double_conv.3} parent=27 // pred_region
        %p184 = scmp.lt.s32.totalorder %s12, 1
        %s185 = scalar_select %p184, %s12, 1
        %s186 = smul.addr %s185, 32
        %s187 = smul.addr %s186, 8
        %s188 = scalar_lea.vmem %s0, %s187
      $region32: #{double_conv.3} parent=27 // pred_fallthru
        _
    $region28: #{double_conv.3} parent=5 // pred_fallthru
      _
    %p189 = scmp.le.s32.totalorder 1, %s12
    %p190 = scmp.lt.s32.totalorder %s12, 3
    %p191 = pnand %p189, %p190
    %p192 = pneg %p191
    // Predicated region
    $region33: #{double_conv.3} parent=5 // pred_check
      _
    $region34: #{double_conv.3} parent=5 // pred_check_branch
      %194 = sbr.rel (%p191) target = $region36
    $region35: #{double_conv.3} parent=5 // pred_region
      %s195 = ssub.s32 %s12, 1
      %p196 = scmp.lt.s32.totalorder %s17, 1
      %s197 = scalar_select %p196, %s17, 1
      %s198 = smul.addr %s197, 32
      %s199 = smul.addr %s198, 8
      %s200 = scalar_lea.vmem %s0, %s199
      %p201 = pneg %p38
      %p202 = pneg %p35
      %p203 = pneg %p59
      %p204 = pneg %p56
      %p205 = pneg %p80
      %p206 = pneg %p77
      %p207 = pneg %p101
      %p208 = pneg %p98
      %p209 = pneg %p127
      %p210 = pneg %p124
      %p211 = scmp.lt.s32.totalorder %s17, 1
      %s212 = scalar_select %p211, %s17, 1
      %s213 = smul.addr %s212, 32
      %s214 = smul.addr %s213, 8
      %s215 = scalar_lea.vmem %s4, %s214
      %p216 = pneg %p153
      %p217 = pneg %p150
      %p218 = scmp.lt.s32.totalorder %s17, 1
      %s219 = scalar_select %p218, %s17, 1
      %s220 = smul.addr %s219, 2
      %s221 = scalar_lea.vmem %s5, %s220
      %p222 = scmp.lt.s32.totalorder %s17, 1
      %s223 = scalar_select %p222, %s17, 1
      %s224 = smul.addr %s223, 32
      %s225 = smul.addr %s224, 8
      %s226 = scalar_lea.vmem %s0, %s225
      %p227 = scmp.lt.s32.totalorder %s17, 1
      %s228 = scalar_select %p227, %s17, 1
      %s229 = smul.addr %s228, 32
      %s230 = smul.addr %s229, 8
      %s231 = scalar_lea.vmem %s4, %s230
      %p232 = scmp.lt.s32.totalorder %s17, 1
      %s233 = scalar_select %p232, %s17, 1
      %s234 = smul.addr %s233, 2
      %s235 = scalar_lea.vmem %s5, %s234
      %v236 = vld [vmem:[%s226] sm:$0xff]
      %v237 = vld [vmem:[%s226 + $0x8] sm:$0xff]
      %v238 = vld [vmem:[%s226 + $0x10] sm:$0xff]
      %v239 = vld [vmem:[%s226 + $0x18] sm:$0xff]
      %v240 = vld [vmem:[%s226 + $0x20] sm:$0xff]
      %v241 = vld [vmem:[%s226 + $0x28] sm:$0xff]
      %v242 = vld [vmem:[%s226 + $0x30] sm:$0xff]
      %v243 = vld [vmem:[%s226 + $0x38] sm:$0xff]
      %v244 = vld [vmem:[%s226 + $0x40] sm:$0xff]
      %v245 = vld [vmem:[%s226 + $0x48] sm:$0xff]
      %v246 = vld [vmem:[%s226 + $0x50] sm:$0xff]
      %v247 = vld [vmem:[%s226 + $0x58] sm:$0xff]
      %v248 = vld [vmem:[%s226 + $0x60] sm:$0xff]
      %v249 = vld [vmem:[%s226 + $0x68] sm:$0xff]
      %v250 = vld [vmem:[%s226 + $0x70] sm:$0xff]
      %v251 = vld [vmem:[%s226 + $0x78] sm:$0xff]
      %v252 = vld [vmem:[%s226 + $0x80] sm:$0xff]
      %v253 = vld [vmem:[%s226 + $0x88] sm:$0xff]
      %v254 = vld [vmem:[%s226 + $0x90] sm:$0xff]
      %v255 = vld [vmem:[%s226 + $0x98] sm:$0xff]
      %v256 = vld [vmem:[%s226 + $0xa0] sm:$0xff]
      %v257 = vld [vmem:[%s226 + $0xa8] sm:$0xff]
      %v258 = vld [vmem:[%s226 + $0xb0] sm:$0xff]
      %v259 = vld [vmem:[%s226 + $0xb8] sm:$0xff]
      %v260 = vld [vmem:[%s226 + $0xc0] sm:$0xff]
      %v261 = vld [vmem:[%s226 + $0xc8] sm:$0xff]
      %v262 = vld [vmem:[%s226 + $0xd0] sm:$0xff]
      %v263 = vld [vmem:[%s226 + $0xd8] sm:$0xff]
      %v264 = vld [vmem:[%s226 + $0xe0] sm:$0xff]
      %v265 = vld [vmem:[%s226 + $0xe8] sm:$0xff]
      %v266 = vld [vmem:[%s226 + $0xf0] sm:$0xff]
      %v267 = vld [vmem:[%s226 + $0xf8] sm:$0xff]
      %vm268 = vcmask 31744
      %269 = vst.msk [vmem:[#allocation2] sm:$0xff] %vm268, 0.0
      %270 = vst.msk [vmem:[#allocation2 + $0x8] sm:$0xff] %vm268, 0.0
      %vm271 = vcmask 25600
      %272 = vst.msk [vmem:[#allocation2 + $0x10] sm:$0x3] %vm271, 0.0
      %s273 = scalar_lea.vmem [#allocation2], 408
      %274 = vst.msk [vmem:[%s273] sm:$0xff] %vm268, 0.0
      %275 = vst.msk [vmem:[%s273 + $0x8] sm:$0xff] %vm268, 0.0
      %276 = vst.msk [vmem:[%s273 + $0x10] sm:$0x3] %vm271, 0.0
      %vm277 = vcmask 24576
      %278 = vst.msk [vmem:[#allocation2] sm:$0x1] %vm277, 0.0
      %279 = vst.msk [vmem:[#allocation2 + $0x18] sm:$0x1] %vm277, 0.0
      %280 = vst.msk [vmem:[#allocation2 + $0x30] sm:$0x1] %vm277, 0.0
      %281 = vst.msk [vmem:[#allocation2 + $0x48] sm:$0x1] %vm277, 0.0
      %282 = vst.msk [vmem:[#allocation2 + $0x60] sm:$0x1] %vm277, 0.0
      %283 = vst.msk [vmem:[#allocation2 + $0x78] sm:$0x1] %vm277, 0.0
      %284 = vst.msk [vmem:[#allocation2 + $0x90] sm:$0x1] %vm277, 0.0
      %285 = vst.msk [vmem:[#allocation2 + $0xa8] sm:$0x1] %vm277, 0.0
      %286 = vst.msk [vmem:[#allocation2 + $0xc0] sm:$0x1] %vm277, 0.0
      %287 = vst.msk [vmem:[#allocation2 + $0xd8] sm:$0x1] %vm277, 0.0
      %288 = vst.msk [vmem:[#allocation2 + $0xf0] sm:$0x1] %vm277, 0.0
      %289 = vst.msk [vmem:[#allocation2 + $0x108] sm:$0x1] %vm277, 0.0
      %290 = vst.msk [vmem:[#allocation2 + $0x120] sm:$0x1] %vm277, 0.0
      %291 = vst.msk [vmem:[#allocation2 + $0x138] sm:$0x1] %vm277, 0.0
      %292 = vst.msk [vmem:[#allocation2 + $0x150] sm:$0x1] %vm277, 0.0
      %293 = vst.msk [vmem:[#allocation2 + $0x168] sm:$0x1] %vm277, 0.0
      %294 = vst.msk [vmem:[#allocation2 + $0x180] sm:$0x1] %vm277, 0.0
      %295 = vst.msk [vmem:[#allocation2 + $0x198] sm:$0x1] %vm277, 0.0
      %296 = vst.msk [vmem:[#allocation2 + $0x11] sm:$0x1] %vm277, 0.0
      %297 = vst.msk [vmem:[#allocation2 + $0x29] sm:$0x1] %vm277, 0.0
      %298 = vst.msk [vmem:[#allocation2 + $0x41] sm:$0x1] %vm277, 0.0
      %299 = vst.msk [vmem:[#allocation2 + $0x59] sm:$0x1] %vm277, 0.0
      %300 = vst.msk [vmem:[#allocation2 + $0x71] sm:$0x1] %vm277, 0.0
      %301 = vst.msk [vmem:[#allocation2 + $0x89] sm:$0x1] %vm277, 0.0
      %302 = vst.msk [vmem:[#allocation2 + $0xa1] sm:$0x1] %vm277, 0.0
      %303 = vst.msk [vmem:[#allocation2 + $0xb9] sm:$0x1] %vm277, 0.0
      %304 = vst.msk [vmem:[#allocation2 + $0xd1] sm:$0x1] %vm277, 0.0
      %305 = vst.msk [vmem:[#allocation2 + $0xe9] sm:$0x1] %vm277, 0.0
      %306 = vst.msk [vmem:[#allocation2 + $0x101] sm:$0x1] %vm277, 0.0
      %307 = vst.msk [vmem:[#allocation2 + $0x119] sm:$0x1] %vm277, 0.0
      %308 = vst.msk [vmem:[#allocation2 + $0x131] sm:$0x1] %vm277, 0.0
      %309 = vst.msk [vmem:[#allocation2 + $0x149] sm:$0x1] %vm277, 0.0
      %310 = vst.msk [vmem:[#allocation2 + $0x161] sm:$0x1] %vm277, 0.0
      %311 = vst.msk [vmem:[#allocation2 + $0x179] sm:$0x1] %vm277, 0.0
      %312 = vst.msk [vmem:[#allocation2 + $0x191] sm:$0x1] %vm277, 0.0
      %313 = vst.msk [vmem:[#allocation2 + $0x1a9] sm:$0x1] %vm277, 0.0
      %s314 = scalar_lea.vmem [#allocation2], 24
      %315 = vst.msk [vmem:[%s314 + $0x1] sm:$0xff] %vm268, %v236
      %316 = vst.msk [vmem:[%s314 + $0x9] sm:$0xff] %vm268, %v237
      %317 = vst.msk [vmem:[%s314 + $0x19] sm:$0xff] %vm268, %v238
      %318 = vst.msk [vmem:[%s314 + $0x21] sm:$0xff] %vm268, %v239
      %319 = vst.msk [vmem:[%s314 + $0x31] sm:$0xff] %vm268, %v240
      %320 = vst.msk [vmem:[%s314 + $0x39] sm:$0xff] %vm268, %v241
      %321 = vst.msk [vmem:[%s314 + $0x49] sm:$0xff] %vm268, %v242
      %322 = vst.msk [vmem:[%s314 + $0x51] sm:$0xff] %vm268, %v243
      %323 = vst.msk [vmem:[%s314 + $0x61] sm:$0xff] %vm268, %v244
      %324 = vst.msk [vmem:[%s314 + $0x69] sm:$0xff] %vm268, %v245
      %325 = vst.msk [vmem:[%s314 + $0x79] sm:$0xff] %vm268, %v246
      %326 = vst.msk [vmem:[%s314 + $0x81] sm:$0xff] %vm268, %v247
      %327 = vst.msk [vmem:[%s314 + $0x91] sm:$0xff] %vm268, %v248
      %328 = vst.msk [vmem:[%s314 + $0x99] sm:$0xff] %vm268, %v249
      %329 = vst.msk [vmem:[%s314 + $0xa9] sm:$0xff] %vm268, %v250
      %330 = vst.msk [vmem:[%s314 + $0xb1] sm:$0xff] %vm268, %v251
      %331 = vst.msk [vmem:[%s314 + $0xc1] sm:$0xff] %vm268, %v252
      %332 = vst.msk [vmem:[%s314 + $0xc9] sm:$0xff] %vm268, %v253
      %333 = vst.msk [vmem:[%s314 + $0xd9] sm:$0xff] %vm268, %v254
      %334 = vst.msk [vmem:[%s314 + $0xe1] sm:$0xff] %vm268, %v255
      %335 = vst.msk [vmem:[%s314 + $0xf1] sm:$0xff] %vm268, %v256
      %336 = vst.msk [vmem:[%s314 + $0xf9] sm:$0xff] %vm268, %v257
      %337 = vst.msk [vmem:[%s314 + $0x109] sm:$0xff] %vm268, %v258
      %338 = vst.msk [vmem:[%s314 + $0x111] sm:$0xff] %vm268, %v259
      %339 = vst.msk [vmem:[%s314 + $0x121] sm:$0xff] %vm268, %v260
      %340 = vst.msk [vmem:[%s314 + $0x129] sm:$0xff] %vm268, %v261
      %341 = vst.msk [vmem:[%s314 + $0x139] sm:$0xff] %vm268, %v262
      %342 = vst.msk [vmem:[%s314 + $0x141] sm:$0xff] %vm268, %v263
      %343 = vst.msk [vmem:[%s314 + $0x151] sm:$0xff] %vm268, %v264
      %344 = vst.msk [vmem:[%s314 + $0x159] sm:$0xff] %vm268, %v265
      %345 = vst.msk [vmem:[%s314 + $0x169] sm:$0xff] %vm268, %v266
      %346 = vst.msk [vmem:[%s314 + $0x171] sm:$0xff] %vm268, %v267
      %v347 = vld [vmem:[#allocation2] sm:$0xff]
      %v348 = vld [vmem:[#allocation2 + $0x8] sm:$0xff]
      %v349 = vld [vmem:[#allocation2 + $0x18] sm:$0xff]
      %v350 = vld [vmem:[#allocation2 + $0x20] sm:$0xff]
      %v351 = vld [vmem:[#allocation2 + $0x30] sm:$0xff]
      %v352 = vld [vmem:[#allocation2 + $0x38] sm:$0xff]
      %v353 = vld [vmem:[#allocation2 + $0x48] sm:$0xff]
      %v354 = vld [vmem:[#allocation2 + $0x50] sm:$0xff]
      %v355 = vld [vmem:[#allocation2 + $0x60] sm:$0xff]
      %v356 = vld [vmem:[#allocation2 + $0x68] sm:$0xff]
      %v357 = vld [vmem:[#allocation2 + $0x78] sm:$0xff]
      %v358 = vld [vmem:[#allocation2 + $0x80] sm:$0xff]
      %v359 = vld [vmem:[#allocation2 + $0x90] sm:$0xff]
      %v360 = vld [vmem:[#allocation2 + $0x98] sm:$0xff]
      %v361 = vld [vmem:[#allocation2 + $0xa8] sm:$0xff]
      %v362 = vld [vmem:[#allocation2 + $0xb0] sm:$0xff]
      %v363 = vld [vmem:[#allocation2 + $0xc0] sm:$0xff]
      %v364 = vld [vmem:[#allocation2 + $0xc8] sm:$0xff]
      %v365 = vld [vmem:[#allocation2 + $0xd8] sm:$0xff]
      %v366 = vld [vmem:[#allocation2 + $0xe0] sm:$0xff]
      %v367 = vld [vmem:[#allocation2 + $0xf0] sm:$0xff]
      %v368 = vld [vmem:[#allocation2 + $0xf8] sm:$0xff]
      %v369 = vld [vmem:[#allocation2 + $0x108] sm:$0xff]
      %v370 = vld [vmem:[#allocation2 + $0x110] sm:$0xff]
      %v371 = vld [vmem:[#allocation2 + $0x120] sm:$0xff]
      %v372 = vld [vmem:[#allocation2 + $0x128] sm:$0xff]
      %v373 = vld [vmem:[#allocation2 + $0x138] sm:$0xff]
      %v374 = vld [vmem:[#allocation2 + $0x140] sm:$0xff]
      %v375 = vld [vmem:[#allocation2 + $0x150] sm:$0xff]
      %v376 = vld [vmem:[#allocation2 + $0x158] sm:$0xff]
      %v377 = vld [vmem:[#allocation2 + $0x168] sm:$0xff]
      %v378 = vld [vmem:[#allocation2 + $0x170] sm:$0xff]
      %v379 = vld [vmem:[#allocation2 + $0x1] sm:$0xff]
      %v380 = vld [vmem:[#allocation2 + $0x9] sm:$0xff]
      %v381 = vld [vmem:[#allocation2 + $0x19] sm:$0xff]
      %v382 = vld [vmem:[#allocation2 + $0x21] sm:$0xff]
      %v383 = vld [vmem:[#allocation2 + $0x31] sm:$0xff]
      %v384 = vld [vmem:[#allocation2 + $0x39] sm:$0xff]
      %v385 = vld [vmem:[#allocation2 + $0x49] sm:$0xff]
      %v386 = vld [vmem:[#allocation2 + $0x51] sm:$0xff]
      %v387 = vld [vmem:[#allocation2 + $0x61] sm:$0xff]
      %v388 = vld [vmem:[#allocation2 + $0x69] sm:$0xff]
      %v389 = vld [vmem:[#allocation2 + $0x79] sm:$0xff]
      %v390 = vld [vmem:[#allocation2 + $0x81] sm:$0xff]
      %v391 = vld [vmem:[#allocation2 + $0x91] sm:$0xff]
      %v392 = vld [vmem:[#allocation2 + $0x99] sm:$0xff]
      %v393 = vld [vmem:[#allocation2 + $0xa9] sm:$0xff]
      %v394 = vld [vmem:[#allocation2 + $0xb1] sm:$0xff]
      %v395 = vld [vmem:[#allocation2 + $0xc1] sm:$0xff]
      %v396 = vld [vmem:[#allocation2 + $0xc9] sm:$0xff]
      %v397 = vld [vmem:[#allocation2 + $0xd9] sm:$0xff]
      %v398 = vld [vmem:[#allocation2 + $0xe1] sm:$0xff]
      %v399 = vld [vmem:[#allocation2 + $0xf1] sm:$0xff]
      %v400 = vld [vmem:[#allocation2 + $0xf9] sm:$0xff]
      %v401 = vld [vmem:[#allocation2 + $0x109] sm:$0xff]
      %v402 = vld [vmem:[#allocation2 + $0x111] sm:$0xff]
      %v403 = vld [vmem:[#allocation2 + $0x121] sm:$0xff]
      %v404 = vld [vmem:[#allocation2 + $0x129] sm:$0xff]
      %v405 = vld [vmem:[#allocation2 + $0x139] sm:$0xff]
      %v406 = vld [vmem:[#allocation2 + $0x141] sm:$0xff]
      %v407 = vld [vmem:[#allocation2 + $0x151] sm:$0xff]
      %v408 = vld [vmem:[#allocation2 + $0x159] sm:$0xff]
      %v409 = vld [vmem:[#allocation2 + $0x169] sm:$0xff]
      %v410 = vld [vmem:[#allocation2 + $0x171] sm:$0xff]
      %v411 = vld [vmem:[#allocation2 + $0x2] sm:$0xff]
      %v412 = vld [vmem:[#allocation2 + $0xa] sm:$0xff]
      %v413 = vld [vmem:[#allocation2 + $0x1a] sm:$0xff]
      %v414 = vld [vmem:[#allocation2 + $0x22] sm:$0xff]
      %v415 = vld [vmem:[#allocation2 + $0x32] sm:$0xff]
      %v416 = vld [vmem:[#allocation2 + $0x3a] sm:$0xff]
      %v417 = vld [vmem:[#allocation2 + $0x4a] sm:$0xff]
      %v418 = vld [vmem:[#allocation2 + $0x52] sm:$0xff]
      %v419 = vld [vmem:[#allocation2 + $0x62] sm:$0xff]
      %v420 = vld [vmem:[#allocation2 + $0x6a] sm:$0xff]
      %v421 = vld [vmem:[#allocation2 + $0x7a] sm:$0xff]
      %v422 = vld [vmem:[#allocation2 + $0x82] sm:$0xff]
      %v423 = vld [vmem:[#allocation2 + $0x92] sm:$0xff]
      %v424 = vld [vmem:[#allocation2 + $0x9a] sm:$0xff]
      %v425 = vld [vmem:[#allocation2 + $0xaa] sm:$0xff]
      %v426 = vld [vmem:[#allocation2 + $0xb2] sm:$0xff]
      %v427 = vld [vmem:[#allocation2 + $0xc2] sm:$0xff]
      %v428 = vld [vmem:[#allocation2 + $0xca] sm:$0xff]
      %v429 = vld [vmem:[#allocation2 + $0xda] sm:$0xff]
      %v430 = vld [vmem:[#allocation2 + $0xe2] sm:$0xff]
      %v431 = vld [vmem:[#allocation2 + $0xf2] sm:$0xff]
      %v432 = vld [vmem:[#allocation2 + $0xfa] sm:$0xff]
      %v433 = vld [vmem:[#allocation2 + $0x10a] sm:$0xff]
      %v434 = vld [vmem:[#allocation2 + $0x112] sm:$0xff]
      %v435 = vld [vmem:[#allocation2 + $0x122] sm:$0xff]
      %v436 = vld [vmem:[#allocation2 + $0x12a] sm:$0xff]
      %v437 = vld [vmem:[#allocation2 + $0x13a] sm:$0xff]
      %v438 = vld [vmem:[#allocation2 + $0x142] sm:$0xff]
      %v439 = vld [vmem:[#allocation2 + $0x152] sm:$0xff]
      %v440 = vld [vmem:[#allocation2 + $0x15a] sm:$0xff]
      %v441 = vld [vmem:[#allocation2 + $0x16a] sm:$0xff]
      %v442 = vld [vmem:[#allocation2 + $0x172] sm:$0xff]
      %v443 = vld [vmem:[%s314] sm:$0xff]
      %v444 = vld [vmem:[%s314 + $0x8] sm:$0xff]
      %v445 = vld [vmem:[%s314 + $0x18] sm:$0xff]
      %v446 = vld [vmem:[%s314 + $0x20] sm:$0xff]
      %v447 = vld [vmem:[%s314 + $0x30] sm:$0xff]
      %v448 = vld [vmem:[%s314 + $0x38] sm:$0xff]
      %v449 = vld [vmem:[%s314 + $0x48] sm:$0xff]
      %v450 = vld [vmem:[%s314 + $0x50] sm:$0xff]
      %v451 = vld [vmem:[%s314 + $0x60] sm:$0xff]
      %v452 = vld [vmem:[%s314 + $0x68] sm:$0xff]
      %v453 = vld [vmem:[%s314 + $0x78] sm:$0xff]
      %v454 = vld [vmem:[%s314 + $0x80] sm:$0xff]
      %v455 = vld [vmem:[%s314 + $0x90] sm:$0xff]
      %v456 = vld [vmem:[%s314 + $0x98] sm:$0xff]
      %v457 = vld [vmem:[%s314 + $0xa8] sm:$0xff]
      %v458 = vld [vmem:[%s314 + $0xb0] sm:$0xff]
      %v459 = vld [vmem:[%s314 + $0xc0] sm:$0xff]
      %v460 = vld [vmem:[%s314 + $0xc8] sm:$0xff]
      %v461 = vld [vmem:[%s314 + $0xd8] sm:$0xff]
      %v462 = vld [vmem:[%s314 + $0xe0] sm:$0xff]
      %v463 = vld [vmem:[%s314 + $0xf0] sm:$0xff]
      %v464 = vld [vmem:[%s314 + $0xf8] sm:$0xff]
      %v465 = vld [vmem:[%s314 + $0x108] sm:$0xff]
      %v466 = vld [vmem:[%s314 + $0x110] sm:$0xff]
      %v467 = vld [vmem:[%s314 + $0x120] sm:$0xff]
      %v468 = vld [vmem:[%s314 + $0x128] sm:$0xff]
      %v469 = vld [vmem:[%s314 + $0x138] sm:$0xff]
      %v470 = vld [vmem:[%s314 + $0x140] sm:$0xff]
      %v471 = vld [vmem:[%s314 + $0x150] sm:$0xff]
      %v472 = vld [vmem:[%s314 + $0x158] sm:$0xff]
      %v473 = vld [vmem:[%s314 + $0x168] sm:$0xff]
      %v474 = vld [vmem:[%s314 + $0x170] sm:$0xff]
      %v475 = vld [vmem:[%s314 + $0x1] sm:$0xff]
      %v476 = vld [vmem:[%s314 + $0x9] sm:$0xff]
      %v477 = vld [vmem:[%s314 + $0x19] sm:$0xff]
      %v478 = vld [vmem:[%s314 + $0x21] sm:$0xff]
      %v479 = vld [vmem:[%s314 + $0x31] sm:$0xff]
      %v480 = vld [vmem:[%s314 + $0x39] sm:$0xff]
      %v481 = vld [vmem:[%s314 + $0x49] sm:$0xff]
      %v482 = vld [vmem:[%s314 + $0x51] sm:$0xff]
      %v483 = vld [vmem:[%s314 + $0x61] sm:$0xff]
      %v484 = vld [vmem:[%s314 + $0x69] sm:$0xff]
      %v485 = vld [vmem:[%s314 + $0x79] sm:$0xff]
      %v486 = vld [vmem:[%s314 + $0x81] sm:$0xff]
      %v487 = vld [vmem:[%s314 + $0x91] sm:$0xff]
      %v488 = vld [vmem:[%s314 + $0x99] sm:$0xff]
      %v489 = vld [vmem:[%s314 + $0xa9] sm:$0xff]
      %v490 = vld [vmem:[%s314 + $0xb1] sm:$0xff]
      %v491 = vld [vmem:[%s314 + $0xc1] sm:$0xff]
      %v492 = vld [vmem:[%s314 + $0xc9] sm:$0xff]
      %v493 = vld [vmem:[%s314 + $0xd9] sm:$0xff]
      %v494 = vld [vmem:[%s314 + $0xe1] sm:$0xff]
      %v495 = vld [vmem:[%s314 + $0xf1] sm:$0xff]
      %v496 = vld [vmem:[%s314 + $0xf9] sm:$0xff]
      %v497 = vld [vmem:[%s314 + $0x109] sm:$0xff]
      %v498 = vld [vmem:[%s314 + $0x111] sm:$0xff]
      %v499 = vld [vmem:[%s314 + $0x121] sm:$0xff]
      %v500 = vld [vmem:[%s314 + $0x129] sm:$0xff]
      %v501 = vld [vmem:[%s314 + $0x139] sm:$0xff]
      %v502 = vld [vmem:[%s314 + $0x141] sm:$0xff]
      %v503 = vld [vmem:[%s314 + $0x151] sm:$0xff]
      %v504 = vld [vmem:[%s314 + $0x159] sm:$0xff]
      %v505 = vld [vmem:[%s314 + $0x169] sm:$0xff]
      %v506 = vld [vmem:[%s314 + $0x171] sm:$0xff]
      %v507 = vld [vmem:[%s314 + $0x2] sm:$0xff]
      %v508 = vld [vmem:[%s314 + $0xa] sm:$0xff]
      %v509 = vld [vmem:[%s314 + $0x1a] sm:$0xff]
      %v510 = vld [vmem:[%s314 + $0x22] sm:$0xff]
      %v511 = vld [vmem:[%s314 + $0x32] sm:$0xff]
      %v512 = vld [vmem:[%s314 + $0x3a] sm:$0xff]
      %v513 = vld [vmem:[%s314 + $0x4a] sm:$0xff]
      %v514 = vld [vmem:[%s314 + $0x52] sm:$0xff]
      %v515 = vld [vmem:[%s314 + $0x62] sm:$0xff]
      %v516 = vld [vmem:[%s314 + $0x6a] sm:$0xff]
      %v517 = vld [vmem:[%s314 + $0x7a] sm:$0xff]
      %v518 = vld [vmem:[%s314 + $0x82] sm:$0xff]
      %v519 = vld [vmem:[%s314 + $0x92] sm:$0xff]
      %v520 = vld [vmem:[%s314 + $0x9a] sm:$0xff]
      %v521 = vld [vmem:[%s314 + $0xaa] sm:$0xff]
      %v522 = vld [vmem:[%s314 + $0xb2] sm:$0xff]
      %v523 = vld [vmem:[%s314 + $0xc2] sm:$0xff]
      %v524 = vld [vmem:[%s314 + $0xca] sm:$0xff]
      %v525 = vld [vmem:[%s314 + $0xda] sm:$0xff]
      %v526 = vld [vmem:[%s314 + $0xe2] sm:$0xff]
      %v527 = vld [vmem:[%s314 + $0xf2] sm:$0xff]
      %v528 = vld [vmem:[%s314 + $0xfa] sm:$0xff]
      %v529 = vld [vmem:[%s314 + $0x10a] sm:$0xff]
      %v530 = vld [vmem:[%s314 + $0x112] sm:$0xff]
      %v531 = vld [vmem:[%s314 + $0x122] sm:$0xff]
      %v532 = vld [vmem:[%s314 + $0x12a] sm:$0xff]
      %v533 = vld [vmem:[%s314 + $0x13a] sm:$0xff]
      %v534 = vld [vmem:[%s314 + $0x142] sm:$0xff]
      %v535 = vld [vmem:[%s314 + $0x152] sm:$0xff]
      %v536 = vld [vmem:[%s314 + $0x15a] sm:$0xff]
      %v537 = vld [vmem:[%s314 + $0x16a] sm:$0xff]
      %v538 = vld [vmem:[%s314 + $0x172] sm:$0xff]
      %s539 = scalar_lea.vmem [#allocation2], 48
      %v540 = vld [vmem:[%s539] sm:$0xff]
      %v541 = vld [vmem:[%s539 + $0x8] sm:$0xff]
      %v542 = vld [vmem:[%s539 + $0x18] sm:$0xff]
      %v543 = vld [vmem:[%s539 + $0x20] sm:$0xff]
      %v544 = vld [vmem:[%s539 + $0x30] sm:$0xff]
      %v545 = vld [vmem:[%s539 + $0x38] sm:$0xff]
      %v546 = vld [vmem:[%s539 + $0x48] sm:$0xff]
      %v547 = vld [vmem:[%s539 + $0x50] sm:$0xff]
      %v548 = vld [vmem:[%s539 + $0x60] sm:$0xff]
      %v549 = vld [vmem:[%s539 + $0x68] sm:$0xff]
      %v550 = vld [vmem:[%s539 + $0x78] sm:$0xff]
      %v551 = vld [vmem:[%s539 + $0x80] sm:$0xff]
      %v552 = vld [vmem:[%s539 + $0x90] sm:$0xff]
      %v553 = vld [vmem:[%s539 + $0x98] sm:$0xff]
      %v554 = vld [vmem:[%s539 + $0xa8] sm:$0xff]
      %v555 = vld [vmem:[%s539 + $0xb0] sm:$0xff]
      %v556 = vld [vmem:[%s539 + $0xc0] sm:$0xff]
      %v557 = vld [vmem:[%s539 + $0xc8] sm:$0xff]
      %v558 = vld [vmem:[%s539 + $0xd8] sm:$0xff]
      %v559 = vld [vmem:[%s539 + $0xe0] sm:$0xff]
      %v560 = vld [vmem:[%s539 + $0xf0] sm:$0xff]
      %v561 = vld [vmem:[%s539 + $0xf8] sm:$0xff]
      %v562 = vld [vmem:[%s539 + $0x108] sm:$0xff]
      %v563 = vld [vmem:[%s539 + $0x110] sm:$0xff]
      %v564 = vld [vmem:[%s539 + $0x120] sm:$0xff]
      %v565 = vld [vmem:[%s539 + $0x128] sm:$0xff]
      %v566 = vld [vmem:[%s539 + $0x138] sm:$0xff]
      %v567 = vld [vmem:[%s539 + $0x140] sm:$0xff]
      %v568 = vld [vmem:[%s539 + $0x150] sm:$0xff]
      %v569 = vld [vmem:[%s539 + $0x158] sm:$0xff]
      %v570 = vld [vmem:[%s539 + $0x168] sm:$0xff]
      %v571 = vld [vmem:[%s539 + $0x170] sm:$0xff]
      %v572 = vld [vmem:[%s539 + $0x1] sm:$0xff]
      %v573 = vld [vmem:[%s539 + $0x9] sm:$0xff]
      %v574 = vld [vmem:[%s539 + $0x19] sm:$0xff]
      %v575 = vld [vmem:[%s539 + $0x21] sm:$0xff]
      %v576 = vld [vmem:[%s539 + $0x31] sm:$0xff]
      %v577 = vld [vmem:[%s539 + $0x39] sm:$0xff]
      %v578 = vld [vmem:[%s539 + $0x49] sm:$0xff]
      %v579 = vld [vmem:[%s539 + $0x51] sm:$0xff]
      %v580 = vld [vmem:[%s539 + $0x61] sm:$0xff]
      %v581 = vld [vmem:[%s539 + $0x69] sm:$0xff]
      %v582 = vld [vmem:[%s539 + $0x79] sm:$0xff]
      %v583 = vld [vmem:[%s539 + $0x81] sm:$0xff]
      %v584 = vld [vmem:[%s539 + $0x91] sm:$0xff]
      %v585 = vld [vmem:[%s539 + $0x99] sm:$0xff]
      %v586 = vld [vmem:[%s539 + $0xa9] sm:$0xff]
      %v587 = vld [vmem:[%s539 + $0xb1] sm:$0xff]
      %v588 = vld [vmem:[%s539 + $0xc1] sm:$0xff]
      %v589 = vld [vmem:[%s539 + $0xc9] sm:$0xff]
      %v590 = vld [vmem:[%s539 + $0xd9] sm:$0xff]
      %v591 = vld [vmem:[%s539 + $0xe1] sm:$0xff]
      %v592 = vld [vmem:[%s539 + $0xf1] sm:$0xff]
      %v593 = vld [vmem:[%s539 + $0xf9] sm:$0xff]
      %v594 = vld [vmem:[%s539 + $0x109] sm:$0xff]
      %v595 = vld [vmem:[%s539 + $0x111] sm:$0xff]
      %v596 = vld [vmem:[%s539 + $0x121] sm:$0xff]
      %v597 = vld [vmem:[%s539 + $0x129] sm:$0xff]
      %v598 = vld [vmem:[%s539 + $0x139] sm:$0xff]
      %v599 = vld [vmem:[%s539 + $0x141] sm:$0xff]
      %v600 = vld [vmem:[%s539 + $0x151] sm:$0xff]
      %v601 = vld [vmem:[%s539 + $0x159] sm:$0xff]
      %v602 = vld [vmem:[%s539 + $0x169] sm:$0xff]
      %v603 = vld [vmem:[%s539 + $0x171] sm:$0xff]
      %v604 = vld [vmem:[%s539 + $0x2] sm:$0xff]
      %v605 = vld [vmem:[%s539 + $0xa] sm:$0xff]
      %v606 = vld [vmem:[%s539 + $0x1a] sm:$0xff]
      %v607 = vld [vmem:[%s539 + $0x22] sm:$0xff]
      %v608 = vld [vmem:[%s539 + $0x32] sm:$0xff]
      %v609 = vld [vmem:[%s539 + $0x3a] sm:$0xff]
      %v610 = vld [vmem:[%s539 + $0x4a] sm:$0xff]
      %v611 = vld [vmem:[%s539 + $0x52] sm:$0xff]
      %v612 = vld [vmem:[%s539 + $0x62] sm:$0xff]
      %v613 = vld [vmem:[%s539 + $0x6a] sm:$0xff]
      %v614 = vld [vmem:[%s539 + $0x7a] sm:$0xff]
      %v615 = vld [vmem:[%s539 + $0x82] sm:$0xff]
      %v616 = vld [vmem:[%s539 + $0x92] sm:$0xff]
      %v617 = vld [vmem:[%s539 + $0x9a] sm:$0xff]
      %v618 = vld [vmem:[%s539 + $0xaa] sm:$0xff]
      %v619 = vld [vmem:[%s539 + $0xb2] sm:$0xff]
      %v620 = vld [vmem:[%s539 + $0xc2] sm:$0xff]
      %v621 = vld [vmem:[%s539 + $0xca] sm:$0xff]
      %v622 = vld [vmem:[%s539 + $0xda] sm:$0xff]
      %v623 = vld [vmem:[%s539 + $0xe2] sm:$0xff]
      %v624 = vld [vmem:[%s539 + $0xf2] sm:$0xff]
      %v625 = vld [vmem:[%s539 + $0xfa] sm:$0xff]
      %v626 = vld [vmem:[%s539 + $0x10a] sm:$0xff]
      %v627 = vld [vmem:[%s539 + $0x112] sm:$0xff]
      %v628 = vld [vmem:[%s539 + $0x122] sm:$0xff]
      %v629 = vld [vmem:[%s539 + $0x12a] sm:$0xff]
      %v630 = vld [vmem:[%s539 + $0x13a] sm:$0xff]
      %v631 = vld [vmem:[%s539 + $0x142] sm:$0xff]
      %v632 = vld [vmem:[%s539 + $0x152] sm:$0xff]
      %v633 = vld [vmem:[%s539 + $0x15a] sm:$0xff]
      %v634 = vld [vmem:[%s539 + $0x16a] sm:$0xff]
      %v635 = vld [vmem:[%s539 + $0x172] sm:$0xff]
      %668 = vrot.lane.b32.xlu0 %v379, 4
      %v669 = vpop.permute.xlu0 %668
      %670 = vrot.lane.b32.xlu0 %v380, 4
      %v671 = vpop.permute.xlu0 %670
      %672 = vrot.lane.b32.xlu0 %v381, 4
      %v673 = vpop.permute.xlu0 %672
      %674 = vrot.lane.b32.xlu0 %v382, 4
      %v675 = vpop.permute.xlu0 %674
      %676 = vrot.lane.b32.xlu0 %v383, 4
      %v677 = vpop.permute.xlu0 %676
      %678 = vrot.lane.b32.xlu0 %v384, 4
      %v679 = vpop.permute.xlu0 %678
      %680 = vrot.lane.b32.xlu0 %v385, 4
      %v681 = vpop.permute.xlu0 %680
      %682 = vrot.lane.b32.xlu0 %v386, 4
      %v683 = vpop.permute.xlu0 %682
      %684 = vrot.lane.b32.xlu0 %v387, 4
      %v685 = vpop.permute.xlu0 %684
      %686 = vrot.lane.b32.xlu0 %v388, 4
      %v687 = vpop.permute.xlu0 %686
      %688 = vrot.lane.b32.xlu0 %v389, 4
      %v689 = vpop.permute.xlu0 %688
      %690 = vrot.lane.b32.xlu0 %v390, 4
      %v691 = vpop.permute.xlu0 %690
      %692 = vrot.lane.b32.xlu0 %v391, 4
      %v693 = vpop.permute.xlu0 %692
      %694 = vrot.lane.b32.xlu0 %v392, 4
      %v695 = vpop.permute.xlu0 %694
      %696 = vrot.lane.b32.xlu0 %v393, 4
      %v697 = vpop.permute.xlu0 %696
      %698 = vrot.lane.b32.xlu0 %v394, 4
      %v699 = vpop.permute.xlu0 %698
      %700 = vrot.lane.b32.xlu0 %v395, 4
      %v701 = vpop.permute.xlu0 %700
      %702 = vrot.lane.b32.xlu0 %v396, 4
      %v703 = vpop.permute.xlu0 %702
      %704 = vrot.lane.b32.xlu0 %v397, 4
      %v705 = vpop.permute.xlu0 %704
      %706 = vrot.lane.b32.xlu0 %v398, 4
      %v707 = vpop.permute.xlu0 %706
      %708 = vrot.lane.b32.xlu0 %v399, 4
      %v709 = vpop.permute.xlu0 %708
      %710 = vrot.lane.b32.xlu0 %v400, 4
      %v711 = vpop.permute.xlu0 %710
      %712 = vrot.lane.b32.xlu0 %v401, 4
      %v713 = vpop.permute.xlu0 %712
      %714 = vrot.lane.b32.xlu0 %v402, 4
      %v715 = vpop.permute.xlu0 %714
      %716 = vrot.lane.b32.xlu0 %v403, 4
      %v717 = vpop.permute.xlu0 %716
      %718 = vrot.lane.b32.xlu0 %v404, 4
      %v719 = vpop.permute.xlu0 %718
      %720 = vrot.lane.b32.xlu0 %v405, 4
      %v721 = vpop.permute.xlu0 %720
      %722 = vrot.lane.b32.xlu0 %v406, 4
      %v723 = vpop.permute.xlu0 %722
      %724 = vrot.lane.b32.xlu0 %v407, 4
      %v725 = vpop.permute.xlu0 %724
      %726 = vrot.lane.b32.xlu0 %v408, 4
      %v727 = vpop.permute.xlu0 %726
      %728 = vrot.lane.b32.xlu0 %v409, 4
      %v729 = vpop.permute.xlu0 %728
      %730 = vrot.lane.b32.xlu0 %v410, 4
      %v731 = vpop.permute.xlu0 %730
      %796 = vrot.lane.b32.xlu0 %v411, 8
      %v797 = vpop.permute.xlu0 %796
      %798 = vrot.lane.b32.xlu0 %v412, 8
      %v799 = vpop.permute.xlu0 %798
      %800 = vrot.lane.b32.xlu0 %v413, 8
      %v801 = vpop.permute.xlu0 %800
      %802 = vrot.lane.b32.xlu0 %v414, 8
      %v803 = vpop.permute.xlu0 %802
      %804 = vrot.lane.b32.xlu0 %v415, 8
      %v805 = vpop.permute.xlu0 %804
      %806 = vrot.lane.b32.xlu0 %v416, 8
      %v807 = vpop.permute.xlu0 %806
      %808 = vrot.lane.b32.xlu0 %v417, 8
      %v809 = vpop.permute.xlu0 %808
      %810 = vrot.lane.b32.xlu0 %v418, 8
      %v811 = vpop.permute.xlu0 %810
      %812 = vrot.lane.b32.xlu0 %v419, 8
      %v813 = vpop.permute.xlu0 %812
      %814 = vrot.lane.b32.xlu0 %v420, 8
      %v815 = vpop.permute.xlu0 %814
      %816 = vrot.lane.b32.xlu0 %v421, 8
      %v817 = vpop.permute.xlu0 %816
      %818 = vrot.lane.b32.xlu0 %v422, 8
      %v819 = vpop.permute.xlu0 %818
      %820 = vrot.lane.b32.xlu0 %v423, 8
      %v821 = vpop.permute.xlu0 %820
      %822 = vrot.lane.b32.xlu0 %v424, 8
      %v823 = vpop.permute.xlu0 %822
      %824 = vrot.lane.b32.xlu0 %v425, 8
      %v825 = vpop.permute.xlu0 %824
      %826 = vrot.lane.b32.xlu0 %v426, 8
      %v827 = vpop.permute.xlu0 %826
      %828 = vrot.lane.b32.xlu0 %v427, 8
      %v829 = vpop.permute.xlu0 %828
      %830 = vrot.lane.b32.xlu0 %v428, 8
      %v831 = vpop.permute.xlu0 %830
      %832 = vrot.lane.b32.xlu0 %v429, 8
      %v833 = vpop.permute.xlu0 %832
      %834 = vrot.lane.b32.xlu0 %v430, 8
      %v835 = vpop.permute.xlu0 %834
      %836 = vrot.lane.b32.xlu0 %v431, 8
      %v837 = vpop.permute.xlu0 %836
      %838 = vrot.lane.b32.xlu0 %v432, 8
      %v839 = vpop.permute.xlu0 %838
      %840 = vrot.lane.b32.xlu0 %v433, 8
      %v841 = vpop.permute.xlu0 %840
      %842 = vrot.lane.b32.xlu0 %v434, 8
      %v843 = vpop.permute.xlu0 %842
      %844 = vrot.lane.b32.xlu0 %v435, 8
      %v845 = vpop.permute.xlu0 %844
      %846 = vrot.lane.b32.xlu0 %v436, 8
      %v847 = vpop.permute.xlu0 %846
      %848 = vrot.lane.b32.xlu0 %v437, 8
      %v849 = vpop.permute.xlu0 %848
      %850 = vrot.lane.b32.xlu0 %v438, 8
      %v851 = vpop.permute.xlu0 %850
      %852 = vrot.lane.b32.xlu0 %v439, 8
      %v853 = vpop.permute.xlu0 %852
      %854 = vrot.lane.b32.xlu0 %v440, 8
      %v855 = vpop.permute.xlu0 %854
      %856 = vrot.lane.b32.xlu0 %v441, 8
      %v857 = vpop.permute.xlu0 %856
      %858 = vrot.lane.b32.xlu0 %v442, 8
      %v859 = vpop.permute.xlu0 %858
      %924 = vrot.lane.b32.xlu0 %v443, 12
      %v925 = vpop.permute.xlu0 %924
      %926 = vrot.lane.b32.xlu0 %v444, 12
      %v927 = vpop.permute.xlu0 %926
      %928 = vrot.lane.b32.xlu0 %v445, 12
      %v929 = vpop.permute.xlu0 %928
      %930 = vrot.lane.b32.xlu0 %v446, 12
      %v931 = vpop.permute.xlu0 %930
      %932 = vrot.lane.b32.xlu0 %v447, 12
      %v933 = vpop.permute.xlu0 %932
      %934 = vrot.lane.b32.xlu0 %v448, 12
      %v935 = vpop.permute.xlu0 %934
      %936 = vrot.lane.b32.xlu0 %v449, 12
      %v937 = vpop.permute.xlu0 %936
      %938 = vrot.lane.b32.xlu0 %v450, 12
      %v939 = vpop.permute.xlu0 %938
      %940 = vrot.lane.b32.xlu0 %v451, 12
      %v941 = vpop.permute.xlu0 %940
      %942 = vrot.lane.b32.xlu0 %v452, 12
      %v943 = vpop.permute.xlu0 %942
      %944 = vrot.lane.b32.xlu0 %v453, 12
      %v945 = vpop.permute.xlu0 %944
      %946 = vrot.lane.b32.xlu0 %v454, 12
      %v947 = vpop.permute.xlu0 %946
      %948 = vrot.lane.b32.xlu0 %v455, 12
      %v949 = vpop.permute.xlu0 %948
      %950 = vrot.lane.b32.xlu0 %v456, 12
      %v951 = vpop.permute.xlu0 %950
      %952 = vrot.lane.b32.xlu0 %v457, 12
      %v953 = vpop.permute.xlu0 %952
      %954 = vrot.lane.b32.xlu0 %v458, 12
      %v955 = vpop.permute.xlu0 %954
      %956 = vrot.lane.b32.xlu0 %v459, 12
      %v957 = vpop.permute.xlu0 %956
      %958 = vrot.lane.b32.xlu0 %v460, 12
      %v959 = vpop.permute.xlu0 %958
      %960 = vrot.lane.b32.xlu0 %v461, 12
      %v961 = vpop.permute.xlu0 %960
      %962 = vrot.lane.b32.xlu0 %v462, 12
      %v963 = vpop.permute.xlu0 %962
      %964 = vrot.lane.b32.xlu0 %v463, 12
      %v965 = vpop.permute.xlu0 %964
      %966 = vrot.lane.b32.xlu0 %v464, 12
      %v967 = vpop.permute.xlu0 %966
      %968 = vrot.lane.b32.xlu0 %v465, 12
      %v969 = vpop.permute.xlu0 %968
      %970 = vrot.lane.b32.xlu0 %v466, 12
      %v971 = vpop.permute.xlu0 %970
      %972 = vrot.lane.b32.xlu0 %v467, 12
      %v973 = vpop.permute.xlu0 %972
      %974 = vrot.lane.b32.xlu0 %v468, 12
      %v975 = vpop.permute.xlu0 %974
      %976 = vrot.lane.b32.xlu0 %v469, 12
      %v977 = vpop.permute.xlu0 %976
      %978 = vrot.lane.b32.xlu0 %v470, 12
      %v979 = vpop.permute.xlu0 %978
      %980 = vrot.lane.b32.xlu0 %v471, 12
      %v981 = vpop.permute.xlu0 %980
      %982 = vrot.lane.b32.xlu0 %v472, 12
      %v983 = vpop.permute.xlu0 %982
      %984 = vrot.lane.b32.xlu0 %v473, 12
      %v985 = vpop.permute.xlu0 %984
      %986 = vrot.lane.b32.xlu0 %v474, 12
      %v987 = vpop.permute.xlu0 %986
      %1052 = vrot.lane.b32.xlu0 %v475, 16
      %v1053 = vpop.permute.xlu0 %1052
      %1054 = vrot.lane.b32.xlu0 %v476, 16
      %v1055 = vpop.permute.xlu0 %1054
      %1056 = vrot.lane.b32.xlu0 %v477, 16
      %v1057 = vpop.permute.xlu0 %1056
      %1058 = vrot.lane.b32.xlu0 %v478, 16
      %v1059 = vpop.permute.xlu0 %1058
      %1060 = vrot.lane.b32.xlu0 %v479, 16
      %v1061 = vpop.permute.xlu0 %1060
      %1062 = vrot.lane.b32.xlu0 %v480, 16
      %v1063 = vpop.permute.xlu0 %1062
      %1064 = vrot.lane.b32.xlu0 %v481, 16
      %v1065 = vpop.permute.xlu0 %1064
      %1066 = vrot.lane.b32.xlu0 %v482, 16
      %v1067 = vpop.permute.xlu0 %1066
      %1068 = vrot.lane.b32.xlu0 %v483, 16
      %v1069 = vpop.permute.xlu0 %1068
      %1070 = vrot.lane.b32.xlu0 %v484, 16
      %v1071 = vpop.permute.xlu0 %1070
      %1072 = vrot.lane.b32.xlu0 %v485, 16
      %v1073 = vpop.permute.xlu0 %1072
      %1074 = vrot.lane.b32.xlu0 %v486, 16
      %v1075 = vpop.permute.xlu0 %1074
      %1076 = vrot.lane.b32.xlu0 %v487, 16
      %v1077 = vpop.permute.xlu0 %1076
      %1078 = vrot.lane.b32.xlu0 %v488, 16
      %v1079 = vpop.permute.xlu0 %1078
      %1080 = vrot.lane.b32.xlu0 %v489, 16
      %v1081 = vpop.permute.xlu0 %1080
      %1082 = vrot.lane.b32.xlu0 %v490, 16
      %v1083 = vpop.permute.xlu0 %1082
      %1084 = vrot.lane.b32.xlu0 %v491, 16
      %v1085 = vpop.permute.xlu0 %1084
      %1086 = vrot.lane.b32.xlu0 %v492, 16
      %v1087 = vpop.permute.xlu0 %1086
      %1088 = vrot.lane.b32.xlu0 %v493, 16
      %v1089 = vpop.permute.xlu0 %1088
      %1090 = vrot.lane.b32.xlu0 %v494, 16
      %v1091 = vpop.permute.xlu0 %1090
      %1092 = vrot.lane.b32.xlu0 %v495, 16
      %v1093 = vpop.permute.xlu0 %1092
      %1094 = vrot.lane.b32.xlu0 %v496, 16
      %v1095 = vpop.permute.xlu0 %1094
      %1096 = vrot.lane.b32.xlu0 %v497, 16
      %v1097 = vpop.permute.xlu0 %1096
      %1098 = vrot.lane.b32.xlu0 %v498, 16
      %v1099 = vpop.permute.xlu0 %1098
      %1100 = vrot.lane.b32.xlu0 %v499, 16
      %v1101 = vpop.permute.xlu0 %1100
      %1102 = vrot.lane.b32.xlu0 %v500, 16
      %v1103 = vpop.permute.xlu0 %1102
      %1104 = vrot.lane.b32.xlu0 %v501, 16
      %v1105 = vpop.permute.xlu0 %1104
      %1106 = vrot.lane.b32.xlu0 %v502, 16
      %v1107 = vpop.permute.xlu0 %1106
      %1108 = vrot.lane.b32.xlu0 %v503, 16
      %v1109 = vpop.permute.xlu0 %1108
      %1110 = vrot.lane.b32.xlu0 %v504, 16
      %v1111 = vpop.permute.xlu0 %1110
      %1112 = vrot.lane.b32.xlu0 %v505, 16
      %v1113 = vpop.permute.xlu0 %1112
      %1114 = vrot.lane.b32.xlu0 %v506, 16
      %v1115 = vpop.permute.xlu0 %1114
      %1180 = vrot.lane.b32.xlu0 %v507, 20
      %v1181 = vpop.permute.xlu0 %1180
      %1182 = vrot.lane.b32.xlu0 %v508, 20
      %v1183 = vpop.permute.xlu0 %1182
      %1184 = vrot.lane.b32.xlu0 %v509, 20
      %v1185 = vpop.permute.xlu0 %1184
      %1186 = vrot.lane.b32.xlu0 %v510, 20
      %v1187 = vpop.permute.xlu0 %1186
      %1188 = vrot.lane.b32.xlu0 %v511, 20
      %v1189 = vpop.permute.xlu0 %1188
      %1190 = vrot.lane.b32.xlu0 %v512, 20
      %v1191 = vpop.permute.xlu0 %1190
      %1192 = vrot.lane.b32.xlu0 %v513, 20
      %v1193 = vpop.permute.xlu0 %1192
      %1194 = vrot.lane.b32.xlu0 %v514, 20
      %v1195 = vpop.permute.xlu0 %1194
      %1196 = vrot.lane.b32.xlu0 %v515, 20
      %v1197 = vpop.permute.xlu0 %1196
      %1198 = vrot.lane.b32.xlu0 %v516, 20
      %v1199 = vpop.permute.xlu0 %1198
      %1200 = vrot.lane.b32.xlu0 %v517, 20
      %v1201 = vpop.permute.xlu0 %1200
      %1202 = vrot.lane.b32.xlu0 %v518, 20
      %v1203 = vpop.permute.xlu0 %1202
      %1204 = vrot.lane.b32.xlu0 %v519, 20
      %v1205 = vpop.permute.xlu0 %1204
      %1206 = vrot.lane.b32.xlu0 %v520, 20
      %v1207 = vpop.permute.xlu0 %1206
      %1208 = vrot.lane.b32.xlu0 %v521, 20
      %v1209 = vpop.permute.xlu0 %1208
      %1210 = vrot.lane.b32.xlu0 %v522, 20
      %v1211 = vpop.permute.xlu0 %1210
      %1212 = vrot.lane.b32.xlu0 %v523, 20
      %v1213 = vpop.permute.xlu0 %1212
      %1214 = vrot.lane.b32.xlu0 %v524, 20
      %v1215 = vpop.permute.xlu0 %1214
      %1216 = vrot.lane.b32.xlu0 %v525, 20
      %v1217 = vpop.permute.xlu0 %1216
      %1218 = vrot.lane.b32.xlu0 %v526, 20
      %v1219 = vpop.permute.xlu0 %1218
      %1220 = vrot.lane.b32.xlu0 %v527, 20
      %v1221 = vpop.permute.xlu0 %1220
      %1222 = vrot.lane.b32.xlu0 %v528, 20
      %v1223 = vpop.permute.xlu0 %1222
      %1224 = vrot.lane.b32.xlu0 %v529, 20
      %v1225 = vpop.permute.xlu0 %1224
      %1226 = vrot.lane.b32.xlu0 %v530, 20
      %v1227 = vpop.permute.xlu0 %1226
      %1228 = vrot.lane.b32.xlu0 %v531, 20
      %v1229 = vpop.permute.xlu0 %1228
      %1230 = vrot.lane.b32.xlu0 %v532, 20
      %v1231 = vpop.permute.xlu0 %1230
      %1232 = vrot.lane.b32.xlu0 %v533, 20
      %v1233 = vpop.permute.xlu0 %1232
      %1234 = vrot.lane.b32.xlu0 %v534, 20
      %v1235 = vpop.permute.xlu0 %1234
      %1236 = vrot.lane.b32.xlu0 %v535, 20
      %v1237 = vpop.permute.xlu0 %1236
      %1238 = vrot.lane.b32.xlu0 %v536, 20
      %v1239 = vpop.permute.xlu0 %1238
      %1240 = vrot.lane.b32.xlu0 %v537, 20
      %v1241 = vpop.permute.xlu0 %1240
      %1242 = vrot.lane.b32.xlu0 %v538, 20
      %v1243 = vpop.permute.xlu0 %1242
      %1308 = vrot.lane.b32.xlu0 %v540, 24
      %v1309 = vpop.permute.xlu0 %1308
      %1310 = vrot.lane.b32.xlu0 %v541, 24
      %v1311 = vpop.permute.xlu0 %1310
      %1312 = vrot.lane.b32.xlu0 %v542, 24
      %v1313 = vpop.permute.xlu0 %1312
      %1314 = vrot.lane.b32.xlu0 %v543, 24
      %v1315 = vpop.permute.xlu0 %1314
      %1316 = vrot.lane.b32.xlu0 %v544, 24
      %v1317 = vpop.permute.xlu0 %1316
      %1318 = vrot.lane.b32.xlu0 %v545, 24
      %v1319 = vpop.permute.xlu0 %1318
      %1320 = vrot.lane.b32.xlu0 %v546, 24
      %v1321 = vpop.permute.xlu0 %1320
      %1322 = vrot.lane.b32.xlu0 %v547, 24
      %v1323 = vpop.permute.xlu0 %1322
      %1324 = vrot.lane.b32.xlu0 %v548, 24
      %v1325 = vpop.permute.xlu0 %1324
      %1326 = vrot.lane.b32.xlu0 %v549, 24
      %v1327 = vpop.permute.xlu0 %1326
      %1328 = vrot.lane.b32.xlu0 %v550, 24
      %v1329 = vpop.permute.xlu0 %1328
      %1330 = vrot.lane.b32.xlu0 %v551, 24
      %v1331 = vpop.permute.xlu0 %1330
      %1332 = vrot.lane.b32.xlu0 %v552, 24
      %v1333 = vpop.permute.xlu0 %1332
      %1334 = vrot.lane.b32.xlu0 %v553, 24
      %v1335 = vpop.permute.xlu0 %1334
      %1336 = vrot.lane.b32.xlu0 %v554, 24
      %v1337 = vpop.permute.xlu0 %1336
      %1338 = vrot.lane.b32.xlu0 %v555, 24
      %v1339 = vpop.permute.xlu0 %1338
      %1340 = vrot.lane.b32.xlu0 %v556, 24
      %v1341 = vpop.permute.xlu0 %1340
      %1342 = vrot.lane.b32.xlu0 %v557, 24
      %v1343 = vpop.permute.xlu0 %1342
      %1344 = vrot.lane.b32.xlu0 %v558, 24
      %v1345 = vpop.permute.xlu0 %1344
      %1346 = vrot.lane.b32.xlu0 %v559, 24
      %v1347 = vpop.permute.xlu0 %1346
      %1348 = vrot.lane.b32.xlu0 %v560, 24
      %v1349 = vpop.permute.xlu0 %1348
      %1350 = vrot.lane.b32.xlu0 %v561, 24
      %v1351 = vpop.permute.xlu0 %1350
      %1352 = vrot.lane.b32.xlu0 %v562, 24
      %v1353 = vpop.permute.xlu0 %1352
      %1354 = vrot.lane.b32.xlu0 %v563, 24
      %v1355 = vpop.permute.xlu0 %1354
      %1356 = vrot.lane.b32.xlu0 %v564, 24
      %v1357 = vpop.permute.xlu0 %1356
      %1358 = vrot.lane.b32.xlu0 %v565, 24
      %v1359 = vpop.permute.xlu0 %1358
      %1360 = vrot.lane.b32.xlu0 %v566, 24
      %v1361 = vpop.permute.xlu0 %1360
      %1362 = vrot.lane.b32.xlu0 %v567, 24
      %v1363 = vpop.permute.xlu0 %1362
      %1364 = vrot.lane.b32.xlu0 %v568, 24
      %v1365 = vpop.permute.xlu0 %1364
      %1366 = vrot.lane.b32.xlu0 %v569, 24
      %v1367 = vpop.permute.xlu0 %1366
      %1368 = vrot.lane.b32.xlu0 %v570, 24
      %v1369 = vpop.permute.xlu0 %1368
      %1370 = vrot.lane.b32.xlu0 %v571, 24
      %v1371 = vpop.permute.xlu0 %1370
      %1436 = vrot.lane.b32.xlu0 %v572, 28
      %v1437 = vpop.permute.xlu0 %1436
      %1438 = vrot.lane.b32.xlu0 %v573, 28
      %v1439 = vpop.permute.xlu0 %1438
      %1440 = vrot.lane.b32.xlu0 %v574, 28
      %v1441 = vpop.permute.xlu0 %1440
      %1442 = vrot.lane.b32.xlu0 %v575, 28
      %v1443 = vpop.permute.xlu0 %1442
      %1444 = vrot.lane.b32.xlu0 %v576, 28
      %v1445 = vpop.permute.xlu0 %1444
      %1446 = vrot.lane.b32.xlu0 %v577, 28
      %v1447 = vpop.permute.xlu0 %1446
      %1448 = vrot.lane.b32.xlu0 %v578, 28
      %v1449 = vpop.permute.xlu0 %1448
      %1450 = vrot.lane.b32.xlu0 %v579, 28
      %v1451 = vpop.permute.xlu0 %1450
      %1452 = vrot.lane.b32.xlu0 %v580, 28
      %v1453 = vpop.permute.xlu0 %1452
      %1454 = vrot.lane.b32.xlu0 %v581, 28
      %v1455 = vpop.permute.xlu0 %1454
      %1456 = vrot.lane.b32.xlu0 %v582, 28
      %v1457 = vpop.permute.xlu0 %1456
      %1458 = vrot.lane.b32.xlu0 %v583, 28
      %v1459 = vpop.permute.xlu0 %1458
      %1460 = vrot.lane.b32.xlu0 %v584, 28
      %v1461 = vpop.permute.xlu0 %1460
      %1462 = vrot.lane.b32.xlu0 %v585, 28
      %v1463 = vpop.permute.xlu0 %1462
      %1464 = vrot.lane.b32.xlu0 %v586, 28
      %v1465 = vpop.permute.xlu0 %1464
      %1466 = vrot.lane.b32.xlu0 %v587, 28
      %v1467 = vpop.permute.xlu0 %1466
      %1468 = vrot.lane.b32.xlu0 %v588, 28
      %v1469 = vpop.permute.xlu0 %1468
      %1470 = vrot.lane.b32.xlu0 %v589, 28
      %v1471 = vpop.permute.xlu0 %1470
      %1472 = vrot.lane.b32.xlu0 %v590, 28
      %v1473 = vpop.permute.xlu0 %1472
      %1474 = vrot.lane.b32.xlu0 %v591, 28
      %v1475 = vpop.permute.xlu0 %1474
      %1476 = vrot.lane.b32.xlu0 %v592, 28
      %v1477 = vpop.permute.xlu0 %1476
      %1478 = vrot.lane.b32.xlu0 %v593, 28
      %v1479 = vpop.permute.xlu0 %1478
      %1480 = vrot.lane.b32.xlu0 %v594, 28
      %v1481 = vpop.permute.xlu0 %1480
      %1482 = vrot.lane.b32.xlu0 %v595, 28
      %v1483 = vpop.permute.xlu0 %1482
      %1484 = vrot.lane.b32.xlu0 %v596, 28
      %v1485 = vpop.permute.xlu0 %1484
      %1486 = vrot.lane.b32.xlu0 %v597, 28
      %v1487 = vpop.permute.xlu0 %1486
      %1488 = vrot.lane.b32.xlu0 %v598, 28
      %v1489 = vpop.permute.xlu0 %1488
      %1490 = vrot.lane.b32.xlu0 %v599, 28
      %v1491 = vpop.permute.xlu0 %1490
      %1492 = vrot.lane.b32.xlu0 %v600, 28
      %v1493 = vpop.permute.xlu0 %1492
      %1494 = vrot.lane.b32.xlu0 %v601, 28
      %v1495 = vpop.permute.xlu0 %1494
      %1496 = vrot.lane.b32.xlu0 %v602, 28
      %v1497 = vpop.permute.xlu0 %1496
      %1498 = vrot.lane.b32.xlu0 %v603, 28
      %v1499 = vpop.permute.xlu0 %1498
      %1564 = vrot.lane.b32.xlu0 %v604, 32
      %v1565 = vpop.permute.xlu0 %1564
      %1566 = vrot.lane.b32.xlu0 %v605, 32
      %v1567 = vpop.permute.xlu0 %1566
      %1568 = vrot.lane.b32.xlu0 %v606, 32
      %v1569 = vpop.permute.xlu0 %1568
      %1570 = vrot.lane.b32.xlu0 %v607, 32
      %v1571 = vpop.permute.xlu0 %1570
      %1572 = vrot.lane.b32.xlu0 %v608, 32
      %v1573 = vpop.permute.xlu0 %1572
      %1574 = vrot.lane.b32.xlu0 %v609, 32
      %v1575 = vpop.permute.xlu0 %1574
      %1576 = vrot.lane.b32.xlu0 %v610, 32
      %v1577 = vpop.permute.xlu0 %1576
      %1578 = vrot.lane.b32.xlu0 %v611, 32
      %v1579 = vpop.permute.xlu0 %1578
      %1580 = vrot.lane.b32.xlu0 %v612, 32
      %v1581 = vpop.permute.xlu0 %1580
      %1582 = vrot.lane.b32.xlu0 %v613, 32
      %v1583 = vpop.permute.xlu0 %1582
      %1584 = vrot.lane.b32.xlu0 %v614, 32
      %v1585 = vpop.permute.xlu0 %1584
      %1586 = vrot.lane.b32.xlu0 %v615, 32
      %v1587 = vpop.permute.xlu0 %1586
      %1588 = vrot.lane.b32.xlu0 %v616, 32
      %v1589 = vpop.permute.xlu0 %1588
      %1590 = vrot.lane.b32.xlu0 %v617, 32
      %v1591 = vpop.permute.xlu0 %1590
      %1592 = vrot.lane.b32.xlu0 %v618, 32
      %v1593 = vpop.permute.xlu0 %1592
      %1594 = vrot.lane.b32.xlu0 %v619, 32
      %v1595 = vpop.permute.xlu0 %1594
      %1596 = vrot.lane.b32.xlu0 %v620, 32
      %v1597 = vpop.permute.xlu0 %1596
      %1598 = vrot.lane.b32.xlu0 %v621, 32
      %v1599 = vpop.permute.xlu0 %1598
      %1600 = vrot.lane.b32.xlu0 %v622, 32
      %v1601 = vpop.permute.xlu0 %1600
      %1602 = vrot.lane.b32.xlu0 %v623, 32
      %v1603 = vpop.permute.xlu0 %1602
      %1604 = vrot.lane.b32.xlu0 %v624, 32
      %v1605 = vpop.permute.xlu0 %1604
      %1606 = vrot.lane.b32.xlu0 %v625, 32
      %v1607 = vpop.permute.xlu0 %1606
      %1608 = vrot.lane.b32.xlu0 %v626, 32
      %v1609 = vpop.permute.xlu0 %1608
      %1610 = vrot.lane.b32.xlu0 %v627, 32
      %v1611 = vpop.permute.xlu0 %1610
      %1612 = vrot.lane.b32.xlu0 %v628, 32
      %v1613 = vpop.permute.xlu0 %1612
      %1614 = vrot.lane.b32.xlu0 %v629, 32
      %v1615 = vpop.permute.xlu0 %1614
      %1616 = vrot.lane.b32.xlu0 %v630, 32
      %v1617 = vpop.permute.xlu0 %1616
      %1618 = vrot.lane.b32.xlu0 %v631, 32
      %v1619 = vpop.permute.xlu0 %1618
      %1620 = vrot.lane.b32.xlu0 %v632, 32
      %v1621 = vpop.permute.xlu0 %1620
      %1622 = vrot.lane.b32.xlu0 %v633, 32
      %v1623 = vpop.permute.xlu0 %1622
      %1624 = vrot.lane.b32.xlu0 %v634, 32
      %v1625 = vpop.permute.xlu0 %1624
      %1626 = vrot.lane.b32.xlu0 %v635, 32
      %v1627 = vpop.permute.xlu0 %1626
      %v1660 = vsel %vm268, %v347, %v669
      %v1661 = vsel %vm268, %v348, %v671
      %v1662 = vsel %vm268, %v349, %v673
      %v1663 = vsel %vm268, %v350, %v675
      %v1664 = vsel %vm268, %v351, %v677
      %v1665 = vsel %vm268, %v352, %v679
      %v1666 = vsel %vm268, %v353, %v681
      %v1667 = vsel %vm268, %v354, %v683
      %v1668 = vsel %vm268, %v355, %v685
      %v1669 = vsel %vm268, %v356, %v687
      %v1670 = vsel %vm268, %v357, %v689
      %v1671 = vsel %vm268, %v358, %v691
      %v1672 = vsel %vm268, %v359, %v693
      %v1673 = vsel %vm268, %v360, %v695
      %v1674 = vsel %vm268, %v361, %v697
      %v1675 = vsel %vm268, %v362, %v699
      %v1676 = vsel %vm268, %v363, %v701
      %v1677 = vsel %vm268, %v364, %v703
      %v1678 = vsel %vm268, %v365, %v705
      %v1679 = vsel %vm268, %v366, %v707
      %v1680 = vsel %vm268, %v367, %v709
      %v1681 = vsel %vm268, %v368, %v711
      %v1682 = vsel %vm268, %v369, %v713
      %v1683 = vsel %vm268, %v370, %v715
      %v1684 = vsel %vm268, %v371, %v717
      %v1685 = vsel %vm268, %v372, %v719
      %v1686 = vsel %vm268, %v373, %v721
      %v1687 = vsel %vm268, %v374, %v723
      %v1688 = vsel %vm268, %v375, %v725
      %v1689 = vsel %vm268, %v376, %v727
      %v1690 = vsel %vm268, %v377, %v729
      %v1691 = vsel %vm268, %v378, %v731
      %vm1692 = vcmask 64512
      %v1693 = vsel %vm1692, %v1660, %v797
      %v1694 = vsel %vm1692, %v1661, %v799
      %v1695 = vsel %vm1692, %v1662, %v801
      %v1696 = vsel %vm1692, %v1663, %v803
      %v1697 = vsel %vm1692, %v1664, %v805
      %v1698 = vsel %vm1692, %v1665, %v807
      %v1699 = vsel %vm1692, %v1666, %v809
      %v1700 = vsel %vm1692, %v1667, %v811
      %v1701 = vsel %vm1692, %v1668, %v813
      %v1702 = vsel %vm1692, %v1669, %v815
      %v1703 = vsel %vm1692, %v1670, %v817
      %v1704 = vsel %vm1692, %v1671, %v819
      %v1705 = vsel %vm1692, %v1672, %v821
      %v1706 = vsel %vm1692, %v1673, %v823
      %v1707 = vsel %vm1692, %v1674, %v825
      %v1708 = vsel %vm1692, %v1675, %v827
      %v1709 = vsel %vm1692, %v1676, %v829
      %v1710 = vsel %vm1692, %v1677, %v831
      %v1711 = vsel %vm1692, %v1678, %v833
      %v1712 = vsel %vm1692, %v1679, %v835
      %v1713 = vsel %vm1692, %v1680, %v837
      %v1714 = vsel %vm1692, %v1681, %v839
      %v1715 = vsel %vm1692, %v1682, %v841
      %v1716 = vsel %vm1692, %v1683, %v843
      %v1717 = vsel %vm1692, %v1684, %v845
      %v1718 = vsel %vm1692, %v1685, %v847
      %v1719 = vsel %vm1692, %v1686, %v849
      %v1720 = vsel %vm1692, %v1687, %v851
      %v1721 = vsel %vm1692, %v1688, %v853
      %v1722 = vsel %vm1692, %v1689, %v855
      %v1723 = vsel %vm1692, %v1690, %v857
      %v1724 = vsel %vm1692, %v1691, %v859
      %vm1725 = vcmask 97280
      %v1726 = vsel %vm1725, %v1693, %v925
      %v1727 = vsel %vm1725, %v1694, %v927
      %v1728 = vsel %vm1725, %v1695, %v929
      %v1729 = vsel %vm1725, %v1696, %v931
      %v1730 = vsel %vm1725, %v1697, %v933
      %v1731 = vsel %vm1725, %v1698, %v935
      %v1732 = vsel %vm1725, %v1699, %v937
      %v1733 = vsel %vm1725, %v1700, %v939
      %v1734 = vsel %vm1725, %v1701, %v941
      %v1735 = vsel %vm1725, %v1702, %v943
      %v1736 = vsel %vm1725, %v1703, %v945
      %v1737 = vsel %vm1725, %v1704, %v947
      %v1738 = vsel %vm1725, %v1705, %v949
      %v1739 = vsel %vm1725, %v1706, %v951
      %v1740 = vsel %vm1725, %v1707, %v953
      %v1741 = vsel %vm1725, %v1708, %v955
      %v1742 = vsel %vm1725, %v1709, %v957
      %v1743 = vsel %vm1725, %v1710, %v959
      %v1744 = vsel %vm1725, %v1711, %v961
      %v1745 = vsel %vm1725, %v1712, %v963
      %v1746 = vsel %vm1725, %v1713, %v965
      %v1747 = vsel %vm1725, %v1714, %v967
      %v1748 = vsel %vm1725, %v1715, %v969
      %v1749 = vsel %vm1725, %v1716, %v971
      %v1750 = vsel %vm1725, %v1717, %v973
      %v1751 = vsel %vm1725, %v1718, %v975
      %v1752 = vsel %vm1725, %v1719, %v977
      %v1753 = vsel %vm1725, %v1720, %v979
      %v1754 = vsel %vm1725, %v1721, %v981
      %v1755 = vsel %vm1725, %v1722, %v983
      %v1756 = vsel %vm1725, %v1723, %v985
      %v1757 = vsel %vm1725, %v1724, %v987
      %vm1758 = vcmask 130048
      %v1759 = vsel %vm1758, %v1726, %v1053
      %v1760 = vsel %vm1758, %v1727, %v1055
      %v1761 = vsel %vm1758, %v1728, %v1057
      %v1762 = vsel %vm1758, %v1729, %v1059
      %v1763 = vsel %vm1758, %v1730, %v1061
      %v1764 = vsel %vm1758, %v1731, %v1063
      %v1765 = vsel %vm1758, %v1732, %v1065
      %v1766 = vsel %vm1758, %v1733, %v1067
      %v1767 = vsel %vm1758, %v1734, %v1069
      %v1768 = vsel %vm1758, %v1735, %v1071
      %v1769 = vsel %vm1758, %v1736, %v1073
      %v1770 = vsel %vm1758, %v1737, %v1075
      %v1771 = vsel %vm1758, %v1738, %v1077
      %v1772 = vsel %vm1758, %v1739, %v1079
      %v1773 = vsel %vm1758, %v1740, %v1081
      %v1774 = vsel %vm1758, %v1741, %v1083
      %v1775 = vsel %vm1758, %v1742, %v1085
      %v1776 = vsel %vm1758, %v1743, %v1087
      %v1777 = vsel %vm1758, %v1744, %v1089
      %v1778 = vsel %vm1758, %v1745, %v1091
      %v1779 = vsel %vm1758, %v1746, %v1093
      %v1780 = vsel %vm1758, %v1747, %v1095
      %v1781 = vsel %vm1758, %v1748, %v1097
      %v1782 = vsel %vm1758, %v1749, %v1099
      %v1783 = vsel %vm1758, %v1750, %v1101
      %v1784 = vsel %vm1758, %v1751, %v1103
      %v1785 = vsel %vm1758, %v1752, %v1105
      %v1786 = vsel %vm1758, %v1753, %v1107
      %v1787 = vsel %vm1758, %v1754, %v1109
      %v1788 = vsel %vm1758, %v1755, %v1111
      %v1789 = vsel %vm1758, %v1756, %v1113
      %v1790 = vsel %vm1758, %v1757, %v1115
      %vm1791 = vcmask 162816
      %v1792 = vsel %vm1791, %v1759, %v1181
      %v1793 = vsel %vm1791, %v1760, %v1183
      %v1794 = vsel %vm1791, %v1761, %v1185
      %v1795 = vsel %vm1791, %v1762, %v1187
      %v1796 = vsel %vm1791, %v1763, %v1189
      %v1797 = vsel %vm1791, %v1764, %v1191
      %v1798 = vsel %vm1791, %v1765, %v1193
      %v1799 = vsel %vm1791, %v1766, %v1195
      %v1800 = vsel %vm1791, %v1767, %v1197
      %v1801 = vsel %vm1791, %v1768, %v1199
      %v1802 = vsel %vm1791, %v1769, %v1201
      %v1803 = vsel %vm1791, %v1770, %v1203
      %v1804 = vsel %vm1791, %v1771, %v1205
      %v1805 = vsel %vm1791, %v1772, %v1207
      %v1806 = vsel %vm1791, %v1773, %v1209
      %v1807 = vsel %vm1791, %v1774, %v1211
      %v1808 = vsel %vm1791, %v1775, %v1213
      %v1809 = vsel %vm1791, %v1776, %v1215
      %v1810 = vsel %vm1791, %v1777, %v1217
      %v1811 = vsel %vm1791, %v1778, %v1219
      %v1812 = vsel %vm1791, %v1779, %v1221
      %v1813 = vsel %vm1791, %v1780, %v1223
      %v1814 = vsel %vm1791, %v1781, %v1225
      %v1815 = vsel %vm1791, %v1782, %v1227
      %v1816 = vsel %vm1791, %v1783, %v1229
      %v1817 = vsel %vm1791, %v1784, %v1231
      %v1818 = vsel %vm1791, %v1785, %v1233
      %v1819 = vsel %vm1791, %v1786, %v1235
      %v1820 = vsel %vm1791, %v1787, %v1237
      %v1821 = vsel %vm1791, %v1788, %v1239
      %v1822 = vsel %vm1791, %v1789, %v1241
      %v1823 = vsel %vm1791, %v1790, %v1243
      %vm1824 = vcmask 195584
      %v1825 = vsel %vm1824, %v1792, %v1309
      %v1826 = vsel %vm1824, %v1793, %v1311
      %v1827 = vsel %vm1824, %v1794, %v1313
      %v1828 = vsel %vm1824, %v1795, %v1315
      %v1829 = vsel %vm1824, %v1796, %v1317
      %v1830 = vsel %vm1824, %v1797, %v1319
      %v1831 = vsel %vm1824, %v1798, %v1321
      %v1832 = vsel %vm1824, %v1799, %v1323
      %v1833 = vsel %vm1824, %v1800, %v1325
      %v1834 = vsel %vm1824, %v1801, %v1327
      %v1835 = vsel %vm1824, %v1802, %v1329
      %v1836 = vsel %vm1824, %v1803, %v1331
      %v1837 = vsel %vm1824, %v1804, %v1333
      %v1838 = vsel %vm1824, %v1805, %v1335
      %v1839 = vsel %vm1824, %v1806, %v1337
      %v1840 = vsel %vm1824, %v1807, %v1339
      %v1841 = vsel %vm1824, %v1808, %v1341
      %v1842 = vsel %vm1824, %v1809, %v1343
      %v1843 = vsel %vm1824, %v1810, %v1345
      %v1844 = vsel %vm1824, %v1811, %v1347
      %v1845 = vsel %vm1824, %v1812, %v1349
      %v1846 = vsel %vm1824, %v1813, %v1351
      %v1847 = vsel %vm1824, %v1814, %v1353
      %v1848 = vsel %vm1824, %v1815, %v1355
      %v1849 = vsel %vm1824, %v1816, %v1357
      %v1850 = vsel %vm1824, %v1817, %v1359
      %v1851 = vsel %vm1824, %v1818, %v1361
      %v1852 = vsel %vm1824, %v1819, %v1363
      %v1853 = vsel %vm1824, %v1820, %v1365
      %v1854 = vsel %vm1824, %v1821, %v1367
      %v1855 = vsel %vm1824, %v1822, %v1369
      %v1856 = vsel %vm1824, %v1823, %v1371
      %vm1857 = vcmask 228352
      %v1858 = vsel %vm1857, %v1825, %v1437
      %v1859 = vsel %vm1857, %v1826, %v1439
      %v1860 = vsel %vm1857, %v1827, %v1441
      %v1861 = vsel %vm1857, %v1828, %v1443
      %v1862 = vsel %vm1857, %v1829, %v1445
      %v1863 = vsel %vm1857, %v1830, %v1447
      %v1864 = vsel %vm1857, %v1831, %v1449
      %v1865 = vsel %vm1857, %v1832, %v1451
      %v1866 = vsel %vm1857, %v1833, %v1453
      %v1867 = vsel %vm1857, %v1834, %v1455
      %v1868 = vsel %vm1857, %v1835, %v1457
      %v1869 = vsel %vm1857, %v1836, %v1459
      %v1870 = vsel %vm1857, %v1837, %v1461
      %v1871 = vsel %vm1857, %v1838, %v1463
      %v1872 = vsel %vm1857, %v1839, %v1465
      %v1873 = vsel %vm1857, %v1840, %v1467
      %v1874 = vsel %vm1857, %v1841, %v1469
      %v1875 = vsel %vm1857, %v1842, %v1471
      %v1876 = vsel %vm1857, %v1843, %v1473
      %v1877 = vsel %vm1857, %v1844, %v1475
      %v1878 = vsel %vm1857, %v1845, %v1477
      %v1879 = vsel %vm1857, %v1846, %v1479
      %v1880 = vsel %vm1857, %v1847, %v1481
      %v1881 = vsel %vm1857, %v1848, %v1483
      %v1882 = vsel %vm1857, %v1849, %v1485
      %v1883 = vsel %vm1857, %v1850, %v1487
      %v1884 = vsel %vm1857, %v1851, %v1489
      %v1885 = vsel %vm1857, %v1852, %v1491
      %v1886 = vsel %vm1857, %v1853, %v1493
      %v1887 = vsel %vm1857, %v1854, %v1495
      %v1888 = vsel %vm1857, %v1855, %v1497
      %v1889 = vsel %vm1857, %v1856, %v1499
      %vm1890 = vcmask 261120
      %v1891 = vsel %vm1890, %v1858, %v1565
      %v1892 = vsel %vm1890, %v1859, %v1567
      %v1893 = vsel %vm1890, %v1860, %v1569
      %v1894 = vsel %vm1890, %v1861, %v1571
      %v1895 = vsel %vm1890, %v1862, %v1573
      %v1896 = vsel %vm1890, %v1863, %v1575
      %v1897 = vsel %vm1890, %v1864, %v1577
      %v1898 = vsel %vm1890, %v1865, %v1579
      %v1899 = vsel %vm1890, %v1866, %v1581
      %v1900 = vsel %vm1890, %v1867, %v1583
      %v1901 = vsel %vm1890, %v1868, %v1585
      %v1902 = vsel %vm1890, %v1869, %v1587
      %v1903 = vsel %vm1890, %v1870, %v1589
      %v1904 = vsel %vm1890, %v1871, %v1591
      %v1905 = vsel %vm1890, %v1872, %v1593
      %v1906 = vsel %vm1890, %v1873, %v1595
      %v1907 = vsel %vm1890, %v1874, %v1597
      %v1908 = vsel %vm1890, %v1875, %v1599
      %v1909 = vsel %vm1890, %v1876, %v1601
      %v1910 = vsel %vm1890, %v1877, %v1603
      %v1911 = vsel %vm1890, %v1878, %v1605
      %v1912 = vsel %vm1890, %v1879, %v1607
      %v1913 = vsel %vm1890, %v1880, %v1609
      %v1914 = vsel %vm1890, %v1881, %v1611
      %v1915 = vsel %vm1890, %v1882, %v1613
      %v1916 = vsel %vm1890, %v1883, %v1615
      %v1917 = vsel %vm1890, %v1884, %v1617
      %v1918 = vsel %vm1890, %v1885, %v1619
      %v1919 = vsel %vm1890, %v1886, %v1621
      %v1920 = vsel %vm1890, %v1887, %v1623
      %v1921 = vsel %vm1890, %v1888, %v1625
      %v1922 = vsel %vm1890, %v1889, %v1627
      %v1923 = vld [vmem:[%s1] sm:$0xff]
      %v1924 = vld [vmem:[%s1 + $0x8] sm:$0xff]
      %v1925 = vld [vmem:[%s1 + $0x10] sm:$0xff]
      %v1926 = vld [vmem:[%s1 + $0x18] sm:$0xff]
      %v1927 = vld [vmem:[%s1 + $0x20] sm:$0xf]
      %vm1928 = vcmask 293888
      %v1930 = vsel %vm1928, %v1891, 0
      %v1933 = vsel %vm1928, %v1892, 0
      %v1936 = vsel %vm1928, %v1893, 0
      %v1939 = vsel %vm1928, %v1894, 0
      %v1942 = vsel %vm1928, %v1895, 0
      %v1945 = vsel %vm1928, %v1896, 0
      %v1948 = vsel %vm1928, %v1897, 0
      %v1951 = vsel %vm1928, %v1898, 0
      %v1954 = vsel %vm1928, %v1899, 0
      %v1957 = vsel %vm1928, %v1900, 0
      %v1960 = vsel %vm1928, %v1901, 0
      %v1963 = vsel %vm1928, %v1902, 0
      %v1966 = vsel %vm1928, %v1903, 0
      %v1969 = vsel %vm1928, %v1904, 0
      %v1972 = vsel %vm1928, %v1905, 0
      %v1975 = vsel %vm1928, %v1906, 0
      %v1978 = vsel %vm1928, %v1907, 0
      %v1981 = vsel %vm1928, %v1908, 0
      %v1984 = vsel %vm1928, %v1909, 0
      %v1987 = vsel %vm1928, %v1910, 0
      %v1990 = vsel %vm1928, %v1911, 0
      %v1993 = vsel %vm1928, %v1912, 0
      %v1996 = vsel %vm1928, %v1913, 0
      %v1999 = vsel %vm1928, %v1914, 0
      %v2002 = vsel %vm1928, %v1915, 0
      %v2005 = vsel %vm1928, %v1916, 0
      %v2008 = vsel %vm1928, %v1917, 0
      %v2011 = vsel %vm1928, %v1918, 0
      %v2014 = vsel %vm1928, %v1919, 0
      %v2017 = vsel %vm1928, %v1920, 0
      %v2020 = vsel %vm1928, %v1921, 0
      %v2023 = vsel %vm1928, %v1922, 0
      %vm2025 = vcmask 1043456
      %v2027 = vsel %vm2025, %v1927, 0
      %2029 = vmatprep.subr.mxu0 0.0
      %2030 = vmatpush1.msra.mxu0 0.0
      %2031 = vmatprep.subr.mxu0 0.0
      %2032 = vmatpush1.msra.mxu0 0.0
      %2033 = vmatprep.subr.mxu0 0.0
      %2034 = vmatpush1.msra.mxu0 0.0
      %2035 = vmatprep.subr.mxu0 0.0
      %2036 = vmatpush1.msra.mxu0 0.0
      %2037 = vmatprep.subr.mxu0 0.0
      %2038 = vmatpush1.msra.mxu0 0.0
      %2039 = vmatprep.subr.mxu0 0.0
      %2040 = vmatpush1.msra.mxu0 0.0
      %2041 = vmatprep.subr.mxu0 0.0
      %2042 = vmatpush1.msra.mxu0 0.0
      %2043 = vmatprep.subr.mxu0 0.0
      %2044 = vmatpush1.msra.mxu0 0.0
      %2045 = vmatprep.subr.mxu0 0.0
      %2046 = vmatpush1.msra.mxu0 0.0
      %2047 = vmatprep.subr.mxu0 0.0
      %2048 = vmatpush1.msra.mxu0 0.0
      %2049 = vmatprep.subr.mxu0 0.0
      %2050 = vmatpush1.msra.mxu0 0.0
      %2051 = vmatprep.subr.mxu0 0.0
      %2052 = vmatpush1.msra.mxu0 %v2027
      %2053 = vmatprep.subr.mxu0 0.0
      %2054 = vmatpush1.msra.mxu0 %v1926
      %2055 = vmatprep.subr.mxu0 0.0
      %2056 = vmatpush1.msra.mxu0 %v1925
      %2057 = vmatprep.subr.mxu0 0.0
      %2058 = vmatpush1.msra.mxu0 %v1924
      %2059 = vmatprep.subr.mxu0 0.0
      %2060 = vmatpush1.msra.mxu0 %v1923
      %2061 = vmatprep.subr.mxu0 0.0
      %2062 = vmatpush2.msra.mxu0 0.0
      %2063 = vmatprep.subr.mxu0 0.0
      %2064 = vmatpush2.msra.mxu0 0.0
      %2065 = vmatprep.subr.mxu0 0.0
      %2066 = vmatpush2.msra.mxu0 0.0
      %2067 = vmatprep.subr.mxu0 0.0
      %2068 = vmatpush2.msra.mxu0 0.0
      %2069 = vmatprep.subr.mxu0 0.0
      %2070 = vmatpush2.msra.mxu0 0.0
      %2071 = vmatprep.subr.mxu0 0.0
      %2072 = vmatpush2.msra.mxu0 0.0
      %2073 = vmatprep.subr.mxu0 0.0
      %2074 = vmatpush2.msra.mxu0 0.0
      %2075 = vmatprep.subr.mxu0 0.0
      %2076 = vmatpush2.msra.mxu0 0.0
      %2077 = vmatprep.subr.mxu0 0.0
      %2078 = vmatpush2.msra.mxu0 0.0
      %2079 = vmatprep.subr.mxu0 0.0
      %2080 = vmatpush2.msra.mxu0 0.0
      %2081 = vmatprep.subr.mxu0 0.0
      %2082 = vmatpush2.msra.mxu0 0.0
      %2083 = vmatprep.subr.mxu0 0.0
      %2084 = vmatpush2.msra.mxu0 0.0
      %2085 = vmatprep.subr.mxu0 0.0
      %2086 = vmatpush2.msra.mxu0 0.0
      %2087 = vmatprep.subr.mxu0 0.0
      %2088 = vmatpush2.msra.mxu0 0.0
      %2089 = vmatprep.subr.mxu0 0.0
      %2090 = vmatpush2.msra.mxu0 0.0
      %2091 = vmatprep.subr.mxu0 0.0
      %2092 = vmatpush2.msra.mxu0 0.0
      %2093 = vmatprep.mubr.f32.mxu0 0.0
      %2094 = vmatmul.mubr.f32.gmra.mxu0 %v1930
      %v2095 = vpop.f32.mrf.mxu0
      %v2096 = vadd.f32 0.0, %v2095
      %v2097 = vpop.f32.mrf.mxu0
      %2098 = vmatprep.mubr.f32.mxu0 0.0
      %2099 = vmatmul.mubr.f32.gmra.mxu0 %v1933
      %v2100 = vpop.f32.mrf.mxu0
      %v2101 = vadd.f32 0.0, %v2100
      %v2102 = vpop.f32.mrf.mxu0
      %2103 = vmatprep.mubr.f32.mxu0 0.0
      %2104 = vmatmul.mubr.f32.gmra.mxu0 %v1936
      %v2105 = vpop.f32.mrf.mxu0
      %v2106 = vadd.f32 0.0, %v2105
      %v2107 = vpop.f32.mrf.mxu0
      %2108 = vmatprep.mubr.f32.mxu0 0.0
      %2109 = vmatmul.mubr.f32.gmra.mxu0 %v1939
      %v2110 = vpop.f32.mrf.mxu0
      %v2111 = vadd.f32 0.0, %v2110
      %v2112 = vpop.f32.mrf.mxu0
      %2113 = vmatprep.mubr.f32.mxu0 0.0
      %2114 = vmatmul.mubr.f32.gmra.mxu0 %v1942
      %v2115 = vpop.f32.mrf.mxu0
      %v2116 = vadd.f32 0.0, %v2115
      %v2117 = vpop.f32.mrf.mxu0
      %2118 = vmatprep.mubr.f32.mxu0 0.0
      %2119 = vmatmul.mubr.f32.gmra.mxu0 %v1945
      %v2120 = vpop.f32.mrf.mxu0
      %v2121 = vadd.f32 0.0, %v2120
      %v2122 = vpop.f32.mrf.mxu0
      %2123 = vmatprep.mubr.f32.mxu0 0.0
      %2124 = vmatmul.mubr.f32.gmra.mxu0 %v1948
      %v2125 = vpop.f32.mrf.mxu0
      %v2126 = vadd.f32 0.0, %v2125
      %v2127 = vpop.f32.mrf.mxu0
      %2128 = vmatprep.mubr.f32.mxu0 0.0
      %2129 = vmatmul.mubr.f32.gmra.mxu0 %v1951
      %v2130 = vpop.f32.mrf.mxu0
      %v2131 = vadd.f32 0.0, %v2130
      %v2132 = vpop.f32.mrf.mxu0
      %2133 = vmatprep.mubr.f32.mxu0 0.0
      %2134 = vmatmul.mubr.f32.gmra.mxu0 %v1954
      %v2135 = vpop.f32.mrf.mxu0
      %v2136 = vadd.f32 0.0, %v2135
      %v2137 = vpop.f32.mrf.mxu0
      %2138 = vmatprep.mubr.f32.mxu0 0.0
      %2139 = vmatmul.mubr.f32.gmra.mxu0 %v1957
      %v2140 = vpop.f32.mrf.mxu0
      %v2141 = vadd.f32 0.0, %v2140
      %v2142 = vpop.f32.mrf.mxu0
      %2143 = vmatprep.mubr.f32.mxu0 0.0
      %2144 = vmatmul.mubr.f32.gmra.mxu0 %v1960
      %v2145 = vpop.f32.mrf.mxu0
      %v2146 = vadd.f32 0.0, %v2145
      %v2147 = vpop.f32.mrf.mxu0
      %2148 = vmatprep.mubr.f32.mxu0 0.0
      %2149 = vmatmul.mubr.f32.gmra.mxu0 %v1963
      %v2150 = vpop.f32.mrf.mxu0
      %v2151 = vadd.f32 0.0, %v2150
      %v2152 = vpop.f32.mrf.mxu0
      %2153 = vmatprep.mubr.f32.mxu0 0.0
      %2154 = vmatmul.mubr.f32.gmra.mxu0 %v1966
      %v2155 = vpop.f32.mrf.mxu0
      %v2156 = vadd.f32 0.0, %v2155
      %v2157 = vpop.f32.mrf.mxu0
      %2158 = vmatprep.mubr.f32.mxu0 0.0
      %2159 = vmatmul.mubr.f32.gmra.mxu0 %v1969
      %v2160 = vpop.f32.mrf.mxu0
      %v2161 = vadd.f32 0.0, %v2160
      %v2162 = vpop.f32.mrf.mxu0
      %2163 = vmatprep.mubr.f32.mxu0 0.0
      %2164 = vmatmul.mubr.f32.gmra.mxu0 %v1972
      %v2165 = vpop.f32.mrf.mxu0
      %v2166 = vadd.f32 0.0, %v2165
      %v2167 = vpop.f32.mrf.mxu0
      %2168 = vmatprep.mubr.f32.mxu0 0.0
      %2169 = vmatmul.mubr.f32.gmra.mxu0 %v1975
      %v2170 = vpop.f32.mrf.mxu0
      %v2171 = vadd.f32 0.0, %v2170
      %v2172 = vpop.f32.mrf.mxu0
      %2173 = vmatprep.mubr.f32.mxu0 0.0
      %2174 = vmatmul.mubr.f32.gmra.mxu0 %v1978
      %v2175 = vpop.f32.mrf.mxu0
      %v2176 = vadd.f32 0.0, %v2175
      %v2177 = vpop.f32.mrf.mxu0
      %2178 = vmatprep.mubr.f32.mxu0 0.0
      %2179 = vmatmul.mubr.f32.gmra.mxu0 %v1981
      %v2180 = vpop.f32.mrf.mxu0
      %v2181 = vadd.f32 0.0, %v2180
      %v2182 = vpop.f32.mrf.mxu0
      %2183 = vmatprep.mubr.f32.mxu0 0.0
      %2184 = vmatmul.mubr.f32.gmra.mxu0 %v1984
      %v2185 = vpop.f32.mrf.mxu0
      %v2186 = vadd.f32 0.0, %v2185
      %v2187 = vpop.f32.mrf.mxu0
      %2188 = vmatprep.mubr.f32.mxu0 0.0
      %2189 = vmatmul.mubr.f32.gmra.mxu0 %v1987
      %v2190 = vpop.f32.mrf.mxu0
      %v2191 = vadd.f32 0.0, %v2190
      %v2192 = vpop.f32.mrf.mxu0
      %2193 = vmatprep.mubr.f32.mxu0 0.0
      %2194 = vmatmul.mubr.f32.gmra.mxu0 %v1990
      %v2195 = vpop.f32.mrf.mxu0
      %v2196 = vadd.f32 0.0, %v2195
      %v2197 = vpop.f32.mrf.mxu0
      %2198 = vmatprep.mubr.f32.mxu0 0.0
      %2199 = vmatmul.mubr.f32.gmra.mxu0 %v1993
      %v2200 = vpop.f32.mrf.mxu0
      %v2201 = vadd.f32 0.0, %v2200
      %v2202 = vpop.f32.mrf.mxu0
      %2203 = vmatprep.mubr.f32.mxu0 0.0
      %2204 = vmatmul.mubr.f32.gmra.mxu0 %v1996
      %v2205 = vpop.f32.mrf.mxu0
      %v2206 = vadd.f32 0.0, %v2205
      %v2207 = vpop.f32.mrf.mxu0
      %2208 = vmatprep.mubr.f32.mxu0 0.0
      %2209 = vmatmul.mubr.f32.gmra.mxu0 %v1999
      %v2210 = vpop.f32.mrf.mxu0
      %v2211 = vadd.f32 0.0, %v2210
      %v2212 = vpop.f32.mrf.mxu0
      %2213 = vmatprep.mubr.f32.mxu0 0.0
      %2214 = vmatmul.mubr.f32.gmra.mxu0 %v2002
      %v2215 = vpop.f32.mrf.mxu0
      %v2216 = vadd.f32 0.0, %v2215
      %v2217 = vpop.f32.mrf.mxu0
      %2218 = vmatprep.mubr.f32.mxu0 0.0
      %2219 = vmatmul.mubr.f32.gmra.mxu0 %v2005
      %v2220 = vpop.f32.mrf.mxu0
      %v2221 = vadd.f32 0.0, %v2220
      %v2222 = vpop.f32.mrf.mxu0
      %2223 = vmatprep.mubr.f32.mxu0 0.0
      %2224 = vmatmul.mubr.f32.gmra.mxu0 %v2008
      %v2225 = vpop.f32.mrf.mxu0
      %v2226 = vadd.f32 0.0, %v2225
      %v2227 = vpop.f32.mrf.mxu0
      %2228 = vmatprep.mubr.f32.mxu0 0.0
      %2229 = vmatmul.mubr.f32.gmra.mxu0 %v2011
      %v2230 = vpop.f32.mrf.mxu0
      %v2231 = vadd.f32 0.0, %v2230
      %v2232 = vpop.f32.mrf.mxu0
      %2233 = vmatprep.mubr.f32.mxu0 0.0
      %2234 = vmatmul.mubr.f32.gmra.mxu0 %v2014
      %v2235 = vpop.f32.mrf.mxu0
      %v2236 = vadd.f32 0.0, %v2235
      %v2237 = vpop.f32.mrf.mxu0
      %2238 = vmatprep.mubr.f32.mxu0 0.0
      %2239 = vmatmul.mubr.f32.gmra.mxu0 %v2017
      %v2240 = vpop.f32.mrf.mxu0
      %v2241 = vadd.f32 0.0, %v2240
      %v2242 = vpop.f32.mrf.mxu0
      %2243 = vmatprep.mubr.f32.mxu0 0.0
      %2244 = vmatmul.mubr.f32.gmra.mxu0 %v2020
      %v2245 = vpop.f32.mrf.mxu0
      %v2246 = vadd.f32 0.0, %v2245
      %v2247 = vpop.f32.mrf.mxu0
      %2248 = vmatprep.mubr.f32.mxu0 0.0
      %2249 = vmatmul.mubr.f32.gmra.mxu0 %v2023
      %v2250 = vpop.f32.mrf.mxu0
      %v2251 = vadd.f32 0.0, %v2250
      %v2252 = vpop.f32.mrf.mxu0
      %2253 = vdwg.mxu0
      %v2254 = vsel %vm1692, %v2096, 0.0
      %v2255 = vsel %vm1692, %v2101, 0.0
      %v2256 = vadd.f32 %v2254, %v2255
      %v2257 = vsel %vm1692, %v2106, 0.0
      %v2258 = vadd.f32 %v2256, %v2257
      %v2259 = vsel %vm1692, %v2111, 0.0
      %v2260 = vadd.f32 %v2258, %v2259
      %v2261 = vsel %vm1692, %v2116, 0.0
      %v2262 = vadd.f32 %v2260, %v2261
      %v2263 = vsel %vm1692, %v2121, 0.0
      %v2264 = vadd.f32 %v2262, %v2263
      %v2265 = vsel %vm1692, %v2126, 0.0
      %v2266 = vadd.f32 %v2264, %v2265
      %v2267 = vsel %vm1692, %v2131, 0.0
      %v2268 = vadd.f32 %v2266, %v2267
      %v2269 = vsel %vm1692, %v2136, 0.0
      %v2270 = vadd.f32 %v2268, %v2269
      %v2271 = vsel %vm1692, %v2141, 0.0
      %v2272 = vadd.f32 %v2270, %v2271
      %v2273 = vsel %vm1692, %v2146, 0.0
      %v2274 = vadd.f32 %v2272, %v2273
      %v2275 = vsel %vm1692, %v2151, 0.0
      %v2276 = vadd.f32 %v2274, %v2275
      %v2277 = vsel %vm1692, %v2156, 0.0
      %v2278 = vadd.f32 %v2276, %v2277
      %v2279 = vsel %vm1692, %v2161, 0.0
      %v2280 = vadd.f32 %v2278, %v2279
      %v2281 = vsel %vm1692, %v2166, 0.0
      %v2282 = vadd.f32 %v2280, %v2281
      %v2283 = vsel %vm1692, %v2171, 0.0
      %v2284 = vadd.f32 %v2282, %v2283
      %v2285 = vsel %vm1692, %v2176, 0.0
      %v2286 = vadd.f32 %v2284, %v2285
      %v2287 = vsel %vm1692, %v2181, 0.0
      %v2288 = vadd.f32 %v2286, %v2287
      %v2289 = vsel %vm1692, %v2186, 0.0
      %v2290 = vadd.f32 %v2288, %v2289
      %v2291 = vsel %vm1692, %v2191, 0.0
      %v2292 = vadd.f32 %v2290, %v2291
      %v2293 = vsel %vm1692, %v2196, 0.0
      %v2294 = vadd.f32 %v2292, %v2293
      %v2295 = vsel %vm1692, %v2201, 0.0
      %v2296 = vadd.f32 %v2294, %v2295
      %v2297 = vsel %vm1692, %v2206, 0.0
      %v2298 = vadd.f32 %v2296, %v2297
      %v2299 = vsel %vm1692, %v2211, 0.0
      %v2300 = vadd.f32 %v2298, %v2299
      %v2301 = vsel %vm1692, %v2216, 0.0
      %v2302 = vadd.f32 %v2300, %v2301
      %v2303 = vsel %vm1692, %v2221, 0.0
      %v2304 = vadd.f32 %v2302, %v2303
      %v2305 = vsel %vm1692, %v2226, 0.0
      %v2306 = vadd.f32 %v2304, %v2305
      %v2307 = vsel %vm1692, %v2231, 0.0
      %v2308 = vadd.f32 %v2306, %v2307
      %v2309 = vsel %vm1692, %v2236, 0.0
      %v2310 = vadd.f32 %v2308, %v2309
      %v2311 = vsel %vm1692, %v2241, 0.0
      %v2312 = vadd.f32 %v2310, %v2311
      %v2313 = vsel %vm1692, %v2246, 0.0
      %v2314 = vadd.f32 %v2312, %v2313
      %v2315 = vsel %vm1692, %v2251, 0.0
      %v2316 = vadd.f32 %v2314, %v2315
      %v2317 = vrot.slane %v2316, 4
      %v2318 = vadd.f32 %v2316, %v2317
      %v2319 = vrot.slane %v2318, 2
      %v2320 = vadd.f32 %v2318, %v2319
      %v2321 = vrot.slane %v2320, 1
      %v2322 = vadd.f32 %v2320, %v2321
      %v2323 = vmul.f32 %v2096, %v2096
      %v2324 = vmul.f32 %v2101, %v2101
      %v2325 = vmul.f32 %v2106, %v2106
      %v2326 = vmul.f32 %v2111, %v2111
      %v2327 = vmul.f32 %v2116, %v2116
      %v2328 = vmul.f32 %v2121, %v2121
      %v2329 = vmul.f32 %v2126, %v2126
      %v2330 = vmul.f32 %v2131, %v2131
      %v2331 = vmul.f32 %v2136, %v2136
      %v2332 = vmul.f32 %v2141, %v2141
      %v2333 = vmul.f32 %v2146, %v2146
      %v2334 = vmul.f32 %v2151, %v2151
      %v2335 = vmul.f32 %v2156, %v2156
      %v2336 = vmul.f32 %v2161, %v2161
      %v2337 = vmul.f32 %v2166, %v2166
      %v2338 = vmul.f32 %v2171, %v2171
      %v2339 = vmul.f32 %v2176, %v2176
      %v2340 = vmul.f32 %v2181, %v2181
      %v2341 = vmul.f32 %v2186, %v2186
      %v2342 = vmul.f32 %v2191, %v2191
      %v2343 = vmul.f32 %v2196, %v2196
      %v2344 = vmul.f32 %v2201, %v2201
      %v2345 = vmul.f32 %v2206, %v2206
      %v2346 = vmul.f32 %v2211, %v2211
      %v2347 = vmul.f32 %v2216, %v2216
      %v2348 = vmul.f32 %v2221, %v2221
      %v2349 = vmul.f32 %v2226, %v2226
      %v2350 = vmul.f32 %v2231, %v2231
      %v2351 = vmul.f32 %v2236, %v2236
      %v2352 = vmul.f32 %v2241, %v2241
      %v2353 = vmul.f32 %v2246, %v2246
      %v2354 = vmul.f32 %v2251, %v2251
      %v2355 = vsel %vm1692, %v2323, 0.0
      %v2356 = vsel %vm1692, %v2324, 0.0
      %v2357 = vadd.f32 %v2355, %v2356
      %v2358 = vsel %vm1692, %v2325, 0.0
      %v2359 = vadd.f32 %v2357, %v2358
      %v2360 = vsel %vm1692, %v2326, 0.0
      %v2361 = vadd.f32 %v2359, %v2360
      %v2362 = vsel %vm1692, %v2327, 0.0
      %v2363 = vadd.f32 %v2361, %v2362
      %v2364 = vsel %vm1692, %v2328, 0.0
      %v2365 = vadd.f32 %v2363, %v2364
      %v2366 = vsel %vm1692, %v2329, 0.0
      %v2367 = vadd.f32 %v2365, %v2366
      %v2368 = vsel %vm1692, %v2330, 0.0
      %v2369 = vadd.f32 %v2367, %v2368
      %v2370 = vsel %vm1692, %v2331, 0.0
      %v2371 = vadd.f32 %v2369, %v2370
      %v2372 = vsel %vm1692, %v2332, 0.0
      %v2373 = vadd.f32 %v2371, %v2372
      %v2374 = vsel %vm1692, %v2333, 0.0
      %v2375 = vadd.f32 %v2373, %v2374
      %v2376 = vsel %vm1692, %v2334, 0.0
      %v2377 = vadd.f32 %v2375, %v2376
      %v2378 = vsel %vm1692, %v2335, 0.0
      %v2379 = vadd.f32 %v2377, %v2378
      %v2380 = vsel %vm1692, %v2336, 0.0
      %v2381 = vadd.f32 %v2379, %v2380
      %v2382 = vsel %vm1692, %v2337, 0.0
      %v2383 = vadd.f32 %v2381, %v2382
      %v2384 = vsel %vm1692, %v2338, 0.0
      %v2385 = vadd.f32 %v2383, %v2384
      %v2386 = vsel %vm1692, %v2339, 0.0
      %v2387 = vadd.f32 %v2385, %v2386
      %v2388 = vsel %vm1692, %v2340, 0.0
      %v2389 = vadd.f32 %v2387, %v2388
      %v2390 = vsel %vm1692, %v2341, 0.0
      %v2391 = vadd.f32 %v2389, %v2390
      %v2392 = vsel %vm1692, %v2342, 0.0
      %v2393 = vadd.f32 %v2391, %v2392
      %v2394 = vsel %vm1692, %v2343, 0.0
      %v2395 = vadd.f32 %v2393, %v2394
      %v2396 = vsel %vm1692, %v2344, 0.0
      %v2397 = vadd.f32 %v2395, %v2396
      %v2398 = vsel %vm1692, %v2345, 0.0
      %v2399 = vadd.f32 %v2397, %v2398
      %v2400 = vsel %vm1692, %v2346, 0.0
      %v2401 = vadd.f32 %v2399, %v2400
      %v2402 = vsel %vm1692, %v2347, 0.0
      %v2403 = vadd.f32 %v2401, %v2402
      %v2404 = vsel %vm1692, %v2348, 0.0
      %v2405 = vadd.f32 %v2403, %v2404
      %v2406 = vsel %vm1692, %v2349, 0.0
      %v2407 = vadd.f32 %v2405, %v2406
      %v2408 = vsel %vm1692, %v2350, 0.0
      %v2409 = vadd.f32 %v2407, %v2408
      %v2410 = vsel %vm1692, %v2351, 0.0
      %v2411 = vadd.f32 %v2409, %v2410
      %v2412 = vsel %vm1692, %v2352, 0.0
      %v2413 = vadd.f32 %v2411, %v2412
      %v2414 = vsel %vm1692, %v2353, 0.0
      %v2415 = vadd.f32 %v2413, %v2414
      %v2416 = vsel %vm1692, %v2354, 0.0
      %v2417 = vadd.f32 %v2415, %v2416
      %v2418 = vrot.slane %v2417, 4
      %v2419 = vadd.f32 %v2417, %v2418
      %v2420 = vrot.slane %v2419, 2
      %v2421 = vadd.f32 %v2419, %v2420
      %v2422 = vrot.slane %v2421, 1
      %v2423 = vadd.f32 %v2421, %v2422
      %vm2424 = vcmask 57344
      %2425 = vst.msk [vmem:[%s235] sm:$0x1] %vm2424, %v2322
      %2426 = vst.msk [vmem:[%s235 + $0x1] sm:$0x1] %vm2424, %v2423
      %2427 = vst.msk [vmem:[%s231] sm:$0xff] %vm1692, %v2096
      %2428 = vst.msk [vmem:[%s231 + $0x8] sm:$0xff] %vm1692, %v2101
      %2429 = vst.msk [vmem:[%s231 + $0x10] sm:$0xff] %vm1692, %v2106
      %2430 = vst.msk [vmem:[%s231 + $0x18] sm:$0xff] %vm1692, %v2111
      %2431 = vst.msk [vmem:[%s231 + $0x20] sm:$0xff] %vm1692, %v2116
      %2432 = vst.msk [vmem:[%s231 + $0x28] sm:$0xff] %vm1692, %v2121
      %2433 = vst.msk [vmem:[%s231 + $0x30] sm:$0xff] %vm1692, %v2126
      %2434 = vst.msk [vmem:[%s231 + $0x38] sm:$0xff] %vm1692, %v2131
      %2435 = vst.msk [vmem:[%s231 + $0x40] sm:$0xff] %vm1692, %v2136
      %2436 = vst.msk [vmem:[%s231 + $0x48] sm:$0xff] %vm1692, %v2141
      %2437 = vst.msk [vmem:[%s231 + $0x50] sm:$0xff] %vm1692, %v2146
      %2438 = vst.msk [vmem:[%s231 + $0x58] sm:$0xff] %vm1692, %v2151
      %2439 = vst.msk [vmem:[%s231 + $0x60] sm:$0xff] %vm1692, %v2156
      %2440 = vst.msk [vmem:[%s231 + $0x68] sm:$0xff] %vm1692, %v2161
      %2441 = vst.msk [vmem:[%s231 + $0x70] sm:$0xff] %vm1692, %v2166
      %2442 = vst.msk [vmem:[%s231 + $0x78] sm:$0xff] %vm1692, %v2171
      %2443 = vst.msk [vmem:[%s231 + $0x80] sm:$0xff] %vm1692, %v2176
      %2444 = vst.msk [vmem:[%s231 + $0x88] sm:$0xff] %vm1692, %v2181
      %2445 = vst.msk [vmem:[%s231 + $0x90] sm:$0xff] %vm1692, %v2186
      %2446 = vst.msk [vmem:[%s231 + $0x98] sm:$0xff] %vm1692, %v2191
      %2447 = vst.msk [vmem:[%s231 + $0xa0] sm:$0xff] %vm1692, %v2196
      %2448 = vst.msk [vmem:[%s231 + $0xa8] sm:$0xff] %vm1692, %v2201
      %2449 = vst.msk [vmem:[%s231 + $0xb0] sm:$0xff] %vm1692, %v2206
      %2450 = vst.msk [vmem:[%s231 + $0xb8] sm:$0xff] %vm1692, %v2211
      %2451 = vst.msk [vmem:[%s231 + $0xc0] sm:$0xff] %vm1692, %v2216
      %2452 = vst.msk [vmem:[%s231 + $0xc8] sm:$0xff] %vm1692, %v2221
      %2453 = vst.msk [vmem:[%s231 + $0xd0] sm:$0xff] %vm1692, %v2226
      %2454 = vst.msk [vmem:[%s231 + $0xd8] sm:$0xff] %vm1692, %v2231
      %2455 = vst.msk [vmem:[%s231 + $0xe0] sm:$0xff] %vm1692, %v2236
      %2456 = vst.msk [vmem:[%s231 + $0xe8] sm:$0xff] %vm1692, %v2241
      %2457 = vst.msk [vmem:[%s231 + $0xf0] sm:$0xff] %vm1692, %v2246
      %2458 = vst.msk [vmem:[%s231 + $0xf8] sm:$0xff] %vm1692, %v2251
      %p2459 = scmp.lt.s32.totalorder %s17, 1
      %s2460 = scalar_select %p2459, %s17, 1
      %s2461 = smul.addr %s2460, 32
      %s2462 = smul.addr %s2461, 8
      %s2463 = scalar_lea.vmem %s4, %s2462
      %p2464 = scmp.lt.s32.totalorder %s17, 1
      %s2465 = scalar_select %p2464, %s17, 1
      %s2466 = smul.addr %s2465, 2
      %s2467 = scalar_lea.vmem %s5, %s2466
      // Predicated region
      $region37: #{double_conv.3} parent=35 // pred_check
        %p2468 = pneg %p124
      $region38: #{double_conv.3} parent=35 // pred_check_branch
        %2470 = sbr.rel (%p2468) target = $region40
      $region39: #{double_conv.3} parent=35 // pred_region
        _
      $region40: #{double_conv.3} parent=35 // pred_fallthru
        _
      // Predicated region
      $region41: #{double_conv.3} parent=35 // pred_check
        %p2471 = pneg %p150
      $region42: #{double_conv.3} parent=35 // pred_check_branch
        %2473 = sbr.rel (%p2471) target = $region44
      $region43: #{double_conv.3} parent=35 // pred_region
        _
      $region44: #{double_conv.3} parent=35 // pred_fallthru
        _
    $region36: #{double_conv.3} parent=5 // pred_fallthru
      _
    %p2474 = scmp.le.s32.totalorder 2, %s12
    // Predicated region
    $region45: #{double_conv.3} parent=5 // pred_check
      %p2475 = pneg %p2474
    $region46: #{double_conv.3} parent=5 // pred_check_branch
      %2477 = sbr.rel (%p2475) target = $region48
    $region47: #{double_conv.3} parent=5 // pred_region
      %s2478 = ssub.s32 %s12, 2
      // Predicated region
      $region49: #{double_conv.3} parent=47 // pred_check
        %p2479 = pneg %p130
      $region50: #{double_conv.3} parent=47 // pred_check_branch
        %2481 = sbr.rel (%p2479) target = $region52
      $region51: #{double_conv.3} parent=47 // pred_region
        %p2482 = scmp.lt.s32.totalorder %s18, 1
        %s2483 = scalar_select %p2482, %s18, 1
        %s2484 = smul.addr %s2483, 32
        %s2485 = smul.addr %s2484, 8
        %s2486 = scalar_lea.vmem %s4, %s2485
      $region52: #{double_conv.3} parent=47 // pred_fallthru
        _
      // Predicated region
      $region53: #{double_conv.3} parent=47 // pred_check
        %p2487 = pneg %p156
      $region54: #{double_conv.3} parent=47 // pred_check_branch
        %2489 = sbr.rel (%p2487) target = $region56
      $region55: #{double_conv.3} parent=47 // pred_region
        %p2490 = scmp.lt.s32.totalorder %s18, 1
        %s2491 = scalar_select %p2490, %s18, 1
        %s2492 = smul.addr %s2491, 2
        %s2493 = scalar_lea.vmem %s5, %s2492
      $region56: #{double_conv.3} parent=47 // pred_fallthru
        _
    $region48: #{double_conv.3} parent=5 // pred_fallthru
      _
  $region6: #{double_conv.3} parent=0 // loop_footer
    %s16 = sadd.s32 1, %s12
  $region7: #{double_conv.3} parent=0 // loop_footer_branch
    %11 = sbr.rel target = $region3
  $region8: #{double_conv.3} parent=0 // loop_exit
    _

// kernel: double_conv.4
$region0: #{double_conv.4}
  #allocation0 [shape = 'u32[]', space=smem, size = 0x4, offset = 0x4, fixed_abs, tag = 'smem constant byte address 0x4 - core index']
  #allocation1 [shape = 'u32[144,128]{1,0:T(1,128)}', space=vmem, size = 0x12000, scoped, tag = 'internal scratch']
  #allocation2 [shape = 'f32[18,18,8]{2,1,0:T(8,128)}', space=vmem, size = 0x36000, scoped, tag = 'scratch operand']
  %s0 = inlined_call_operand.vmem [shape: f32[2,16,16,8], index: 0, kind: input, shape index: {}]
  %s1 = inlined_call_operand.vmem [shape: f32[72,8], index: 1, kind: input, shape index: {}]
  %s2 = inlined_call_operand.vmem [shape: f32[1,8], index: 2, kind: input, shape index: {}]
  %s3 = inlined_call_operand.vmem [shape: f32[1,8], index: 3, kind: input, shape index: {}]
  %s4 = inlined_call_operand.vmem [shape: f32[2,16,16,8], index: 4, kind: output, shape index: {0}]
  %s5 = inlined_call_operand.vmem [shape: f32[2,2,8], index: 5, kind: output, shape index: {1}]
  %6 = xla_tuple %s4, %s5
  %s7 = sld [smem:[#allocation0]]
  $region57: #{double_conv.4} parent=0
    _
  %s9 = ssub.s32 1, %s7
  %s10 = scalar_select 0, %s9, %s7
  loop: start=0, step=1, limit=4
  $region2: #{double_conv.4} parent=0 // loop_pre_header
    _
  $region3: #{double_conv.4} parent=0 // loop_header
    %s12 = sphi 0, %s16
    %p13 = scmp.ge.s32.totalorder %s12, 4
    %s22 = sphi 0, %s24
    %s25 = sphi 0, %s22
    %s26 = sphi 0, %s25
    %s42 = sphi 0, %s26
    %s46 = sphi 0, %s46
    %s48 = sphi 0, %s46
    %s49 = sphi 0, %s48
    %s63 = sphi 0, %s49
    %s67 = sphi 0, %s67
    %s69 = sphi 0, %s67
    %s70 = sphi 0, %s69
    %s84 = sphi 0, %s70
    %s88 = sphi 0, %s88
    %s90 = sphi 0, %s88
    %s91 = sphi 0, %s90
    %s105 = sphi 0, %s91
    %s111 = sphi 0, %s113
    %s114 = sphi 0, %s111
    %s115 = sphi 0, %s114
    %s131 = sphi 0, %s115
    %s137 = sphi 0, %s139
    %s140 = sphi 0, %s137
    %s141 = sphi 0, %s140
    %s157 = sphi 0, %s141
  $region4: #{double_conv.4} parent=0 // loop_header_branch
    %15 = sbr.rel (%p13) target = $region8
  $region5: #{double_conv.4} parent=0 // loop_body
    %s17 = ssub.s32 %s12, 1
    %s18 = ssub.s32 %s12, 2
    %s19 = sadd.s32 %s12, 1
    %s20 = ssub.s32 %s12, %s19
    %p21 = scmp.eq.s32.totalorder %s20, 0
    %s23 = sadd.s32 %s22, 1
    %s24 = scalar_select %p21, %s22, %s23
    %p27 = pneg %p21
    %p28 = scmp.eq.s32.totalorder %s12, 1
    %p29 = por %p27, %p28
    %p30 = scmp.ne.s32.totalorder %s22, %s25
    %p31 = scmp.eq.s32.totalorder %s12, 0
    %p32 = por %p30, %p31
    %p33 = scmp.ne.s32.totalorder %s22, %s25
    %p34 = scmp.eq.s32.totalorder %s17, 1
    %p35 = por %p33, %p34
    %p36 = scmp.ne.s32.totalorder %s25, %s26
    %p37 = scmp.eq.s32.totalorder %s17, 0
    %p38 = por %p36, %p37
    %p39 = scmp.ne.s32.totalorder %s25, %s26
    %p40 = scmp.eq.s32.totalorder %s18, 1
    %p41 = por %p39, %p40
    %p43 = scmp.ne.s32.totalorder %s26, %s42
    %p44 = scmp.eq.s32.totalorder %s18, 0
    %p45 = por %p43, %p44
    %s47 = sadd.s32 %s46, 1
    %p50 = scmp.eq.s32.totalorder %s12, 1
    %p51 = scmp.ne.s32.totalorder %s46, %s48
    %p52 = scmp.eq.s32.totalorder %s12, 0
    %p53 = por %p51, %p52
    %p54 = scmp.ne.s32.totalorder %s46, %s48
    %p55 = scmp.eq.s32.totalorder %s17, 1
    %p56 = por %p54, %p55
    %p57 = scmp.ne.s32.totalorder %s48, %s49
    %p58 = scmp.eq.s32.totalorder %s17, 0
    %p59 = por %p57, %p58
    %p60 = scmp.ne.s32.totalorder %s48, %s49
    %p61 = scmp.eq.s32.totalorder %s18, 1
    %p62 = por %p60, %p61
    %p64 = scmp.ne.s32.totalorder %s49, %s63
    %p65 = scmp.eq.s32.totalorder %s18, 0
    %p66 = por %p64, %p65
    %s68 = sadd.s32 %s67, 1
    %p71 = scmp.eq.s32.totalorder %s12, 1
    %p72 = scmp.ne.s32.totalorder %s67, %s69
    %p73 = scmp.eq.s32.totalorder %s12, 0
    %p74 = por %p72, %p73
    %p75 = scmp.ne.s32.totalorder %s67, %s69
    %p76 = scmp.eq.s32.totalorder %s17, 1
    %p77 = por %p75, %p76
    %p78 = scmp.ne.s32.totalorder %s69, %s70
    %p79 = scmp.eq.s32.totalorder %s17, 0
    %p80 = por %p78, %p79
    %p81 = scmp.ne.s32.totalorder %s69, %s70
    %p82 = scmp.eq.s32.totalorder %s18, 1
    %p83 = por %p81, %p82
    %p85 = scmp.ne.s32.totalorder %s70, %s84
    %p86 = scmp.eq.s32.totalorder %s18, 0
    %p87 = por %p85, %p86
    %s89 = sadd.s32 %s88, 1
    %p92 = scmp.eq.s32.totalorder %s12, 1
    %p93 = scmp.ne.s32.totalorder %s88, %s90
    %p94 = scmp.eq.s32.totalorder %s12, 0
    %p95 = por %p93, %p94
    %p96 = scmp.ne.s32.totalorder %s88, %s90
    %p97 = scmp.eq.s32.totalorder %s17, 1
    %p98 = por %p96, %p97
    %p99 = scmp.ne.s32.totalorder %s90, %s91
    %p100 = scmp.eq.s32.totalorder %s17, 0
    %p101 = por %p99, %p100
    %p102 = scmp.ne.s32.totalorder %s90, %s91
    %p103 = scmp.eq.s32.totalorder %s18, 1
    %p104 = por %p102, %p103
    %p106 = scmp.ne.s32.totalorder %s91, %s105
    %p107 = scmp.eq.s32.totalorder %s18, 0
    %p108 = por %p106, %p107
    %s109 = ssub.s32 %s12, %s19
    %p110 = scmp.eq.s32.totalorder %s109, 0
    %s112 = sadd.s32 %s111, 1
    %s113 = scalar_select %p110, %s111, %s112
    %p116 = pneg %p110
    %p117 = scmp.eq.s32.totalorder %s12, 1
    %p118 = por %p116, %p117
    %p119 = scmp.ne.s32.totalorder %s111, %s114
    %p120 = scmp.eq.s32.totalorder %s12, 0
    %p121 = por %p119, %p120
    %p122 = scmp.ne.s32.totalorder %s111, %s114
    %p123 = scmp.eq.s32.totalorder %s17, 1
    %p124 = por %p122, %p123
    %p125 = scmp.ne.s32.totalorder %s114, %s115
    %p126 = scmp.eq.s32.totalorder %s17, 0
    %p127 = por %p125, %p126
    %p128 = scmp.ne.s32.totalorder %s114, %s115
    %p129 = scmp.eq.s32.totalorder %s18, 1
    %p130 = por %p128, %p129
    %p132 = scmp.ne.s32.totalorder %s115, %s131
    %p133 = scmp.eq.s32.totalorder %s18, 0
    %p134 = por %p132, %p133
    %s135 = ssub.s32 %s12, %s19
    %p136 = scmp.eq.s32.totalorder %s135, 0
    %s138 = sadd.s32 %s137, 1
    %s139 = scalar_select %p136, %s137, %s138
    %p142 = pneg %p136
    %p143 = scmp.eq.s32.totalorder %s12, 1
    %p144 = por %p142, %p143
    %p145 = scmp.ne.s32.totalorder %s137, %s140
    %p146 = scmp.eq.s32.totalorder %s12, 0
    %p147 = por %p145, %p146
    %p148 = scmp.ne.s32.totalorder %s137, %s140
    %p149 = scmp.eq.s32.totalorder %s17, 1
    %p150 = por %p148, %p149
    %p151 = scmp.ne.s32.totalorder %s140, %s141
    %p152 = scmp.eq.s32.totalorder %s17, 0
    %p153 = por %p151, %p152
    %p154 = scmp.ne.s32.totalorder %s140, %s141
    %p155 = scmp.eq.s32.totalorder %s18, 1
    %p156 = por %p154, %p155
    %p158 = scmp.ne.s32.totalorder %s141, %s157
    %p159 = scmp.eq.s32.totalorder %s18, 0
    %p160 = por %p158, %p159
    %p161 = scmp.le.s32.totalorder 1, %s12
    %p162 = scmp.lt.s32.totalorder %s12, 3
    %p163 = pnand %p161, %p162
    %p164 = pneg %p163
    // Predicated region
    $region9: #{double_conv.4} parent=5 // pred_check
      _
    $region10: #{double_conv.4} parent=5 // pred_check_branch
      %166 = sbr.rel (%p163) target = $region12
    $region11: #{double_conv.4} parent=5 // pred_region
      %s167 = ssub.s32 %s12, 1
      // Predicated region
      $region13: #{double_conv.4} parent=11 // pred_check
        %p168 = pneg %p59
      $region14: #{double_conv.4} parent=11 // pred_check_branch
        %170 = sbr.rel (%p168) target = $region16
      $region15: #{double_conv.4} parent=11 // pred_region
        _
      $region16: #{double_conv.4} parent=11 // pred_fallthru
        _
      // Predicated region
      $region17: #{double_conv.4} parent=11 // pred_check
        %p171 = pneg %p80
      $region18: #{double_conv.4} parent=11 // pred_check_branch
        %173 = sbr.rel (%p171) target = $region20
      $region19: #{double_conv.4} parent=11 // pred_region
        _
      $region20: #{double_conv.4} parent=11 // pred_fallthru
        _
      // Predicated region
      $region21: #{double_conv.4} parent=11 // pred_check
        %p174 = pneg %p101
      $region22: #{double_conv.4} parent=11 // pred_check_branch
        %176 = sbr.rel (%p174) target = $region24
      $region23: #{double_conv.4} parent=11 // pred_region
        _
      $region24: #{double_conv.4} parent=11 // pred_fallthru
        _
    $region12: #{double_conv.4} parent=5 // pred_fallthru
      _
    %p177 = scmp.lt.s32.totalorder %s12, 2
    // Predicated region
    $region25: #{double_conv.4} parent=5 // pred_check
      %p178 = pneg %p177
    $region26: #{double_conv.4} parent=5 // pred_check_branch
      %180 = sbr.rel (%p178) target = $region28
    $region27: #{double_conv.4} parent=5 // pred_region
      // Predicated region
      $region29: #{double_conv.4} parent=27 // pred_check
        %p181 = pneg %p32
      $region30: #{double_conv.4} parent=27 // pred_check_branch
        %183 = sbr.rel (%p181) target = $region32
      $region31: #{double_conv.4} parent=27 // pred_region
        %p184 = scmp.lt.s32.totalorder %s12, 1
        %s185 = scalar_select %p184, %s12, 1
        %s186 = smul.addr %s185, 32
        %s187 = smul.addr %s186, 8
        %s188 = scalar_lea.vmem %s0, %s187
      $region32: #{double_conv.4} parent=27 // pred_fallthru
        _
    $region28: #{double_conv.4} parent=5 // pred_fallthru
      _
    %p189 = scmp.le.s32.totalorder 1, %s12
    %p190 = scmp.lt.s32.totalorder %s12, 3
    %p191 = pnand %p189, %p190
    %p192 = pneg %p191
    // Predicated region
    $region33: #{double_conv.4} parent=5 // pred_check
      _
    $region34: #{double_conv.4} parent=5 // pred_check_branch
      %194 = sbr.rel (%p191) target = $region36
    $region35: #{double_conv.4} parent=5 // pred_region
      %s195 = ssub.s32 %s12, 1
      %p196 = scmp.lt.s32.totalorder %s17, 1
      %s197 = scalar_select %p196, %s17, 1
      %s198 = smul.addr %s197, 32
      %s199 = smul.addr %s198, 8
      %s200 = scalar_lea.vmem %s0, %s199
      %p201 = pneg %p38
      %p202 = pneg %p35
      %p203 = pneg %p59
      %p204 = pneg %p56
      %p205 = pneg %p80
      %p206 = pneg %p77
      %p207 = pneg %p101
      %p208 = pneg %p98
      %p209 = pneg %p127
      %p210 = pneg %p124
      %p211 = scmp.lt.s32.totalorder %s17, 1
      %s212 = scalar_select %p211, %s17, 1
      %s213 = smul.addr %s212, 32
      %s214 = smul.addr %s213, 8
      %s215 = scalar_lea.vmem %s4, %s214
      %p216 = pneg %p153
      %p217 = pneg %p150
      %p218 = scmp.lt.s32.totalorder %s17, 1
      %s219 = scalar_select %p218, %s17, 1
      %s220 = smul.addr %s219, 2
      %s221 = scalar_lea.vmem %s5, %s220
      %p222 = scmp.lt.s32.totalorder %s17, 1
      %s223 = scalar_select %p222, %s17, 1
      %s224 = smul.addr %s223, 32
      %s225 = smul.addr %s224, 8
      %s226 = scalar_lea.vmem %s0, %s225
      %p227 = scmp.lt.s32.totalorder %s17, 1
      %s228 = scalar_select %p227, %s17, 1
      %s229 = smul.addr %s228, 32
      %s230 = smul.addr %s229, 8
      %s231 = scalar_lea.vmem %s4, %s230
      %p232 = scmp.lt.s32.totalorder %s17, 1
      %s233 = scalar_select %p232, %s17, 1
      %s234 = smul.addr %s233, 2
      %s235 = scalar_lea.vmem %s5, %s234
      %v236 = vld [vmem:[%s226] sm:$0xff]
      %v237 = vld [vmem:[%s226 + $0x8] sm:$0xff]
      %v238 = vld [vmem:[%s226 + $0x10] sm:$0xff]
      %v239 = vld [vmem:[%s226 + $0x18] sm:$0xff]
      %v240 = vld [vmem:[%s226 + $0x20] sm:$0xff]
      %v241 = vld [vmem:[%s226 + $0x28] sm:$0xff]
      %v242 = vld [vmem:[%s226 + $0x30] sm:$0xff]
      %v243 = vld [vmem:[%s226 + $0x38] sm:$0xff]
      %v244 = vld [vmem:[%s226 + $0x40] sm:$0xff]
      %v245 = vld [vmem:[%s226 + $0x48] sm:$0xff]
      %v246 = vld [vmem:[%s226 + $0x50] sm:$0xff]
      %v247 = vld [vmem:[%s226 + $0x58] sm:$0xff]
      %v248 = vld [vmem:[%s226 + $0x60] sm:$0xff]
      %v249 = vld [vmem:[%s226 + $0x68] sm:$0xff]
      %v250 = vld [vmem:[%s226 + $0x70] sm:$0xff]
      %v251 = vld [vmem:[%s226 + $0x78] sm:$0xff]
      %v252 = vld [vmem:[%s226 + $0x80] sm:$0xff]
      %v253 = vld [vmem:[%s226 + $0x88] sm:$0xff]
      %v254 = vld [vmem:[%s226 + $0x90] sm:$0xff]
      %v255 = vld [vmem:[%s226 + $0x98] sm:$0xff]
      %v256 = vld [vmem:[%s226 + $0xa0] sm:$0xff]
      %v257 = vld [vmem:[%s226 + $0xa8] sm:$0xff]
      %v258 = vld [vmem:[%s226 + $0xb0] sm:$0xff]
      %v259 = vld [vmem:[%s226 + $0xb8] sm:$0xff]
      %v260 = vld [vmem:[%s226 + $0xc0] sm:$0xff]
      %v261 = vld [vmem:[%s226 + $0xc8] sm:$0xff]
      %v262 = vld [vmem:[%s226 + $0xd0] sm:$0xff]
      %v263 = vld [vmem:[%s226 + $0xd8] sm:$0xff]
      %v264 = vld [vmem:[%s226 + $0xe0] sm:$0xff]
      %v265 = vld [vmem:[%s226 + $0xe8] sm:$0xff]
      %v266 = vld [vmem:[%s226 + $0xf0] sm:$0xff]
      %v267 = vld [vmem:[%s226 + $0xf8] sm:$0xff]
      %v268 = vld [vmem:[%s2] sm:$0x1]
      %v270 = vlaneseq
      %v271 = vshrl.u32 %v270, 7
      %v272 = vsub.s32 0, %v271
      %v273 = vrot.slane %v268, %v272
      %v275 = vmul.f32 %v236, %v273
      %v276 = vmul.f32 %v237, %v273
      %v277 = vmul.f32 %v238, %v273
      %v278 = vmul.f32 %v239, %v273
      %v279 = vmul.f32 %v240, %v273
      %v280 = vmul.f32 %v241, %v273
      %v281 = vmul.f32 %v242, %v273
      %v282 = vmul.f32 %v243, %v273
      %v283 = vmul.f32 %v244, %v273
      %v284 = vmul.f32 %v245, %v273
      %v285 = vmul.f32 %v246, %v273
      %v286 = vmul.f32 %v247, %v273
      %v287 = vmul.f32 %v248, %v273
      %v288 = vmul.f32 %v249, %v273
      %v289 = vmul.f32 %v250, %v273
      %v290 = vmul.f32 %v251, %v273
      %v291 = vmul.f32 %v252, %v273
      %v292 = vmul.f32 %v253, %v273
      %v293 = vmul.f32 %v254, %v273
      %v294 = vmul.f32 %v255, %v273
      %v295 = vmul.f32 %v256, %v273
      %v296 = vmul.f32 %v257, %v273
      %v297 = vmul.f32 %v258, %v273
      %v298 = vmul.f32 %v259, %v273
      %v299 = vmul.f32 %v260, %v273
      %v300 = vmul.f32 %v261, %v273
      %v301 = vmul.f32 %v262, %v273
      %v302 = vmul.f32 %v263, %v273
      %v303 = vmul.f32 %v264, %v273
      %v304 = vmul.f32 %v265, %v273
      %v305 = vmul.f32 %v266, %v273
      %v306 = vmul.f32 %v267, %v273
      %v307 = vld [vmem:[%s3] sm:$0x1]
      %v309 = vlaneseq
      %v310 = vshrl.u32 %v309, 7
      %v311 = vsub.s32 0, %v310
      %v312 = vrot.slane %v307, %v311
      %v314 = vadd.f32 %v275, %v312
      %v315 = vadd.f32 %v276, %v312
      %v316 = vadd.f32 %v277, %v312
      %v317 = vadd.f32 %v278, %v312
      %v318 = vadd.f32 %v279, %v312
      %v319 = vadd.f32 %v280, %v312
      %v320 = vadd.f32 %v281, %v312
      %v321 = vadd.f32 %v282, %v312
      %v322 = vadd.f32 %v283, %v312
      %v323 = vadd.f32 %v284, %v312
      %v324 = vadd.f32 %v285, %v312
      %v325 = vadd.f32 %v286, %v312
      %v326 = vadd.f32 %v287, %v312
      %v327 = vadd.f32 %v288, %v312
      %v328 = vadd.f32 %v289, %v312
      %v329 = vadd.f32 %v290, %v312
      %v330 = vadd.f32 %v291, %v312
      %v331 = vadd.f32 %v292, %v312
      %v332 = vadd.f32 %v293, %v312
      %v333 = vadd.f32 %v294, %v312
      %v334 = vadd.f32 %v295, %v312
      %v335 = vadd.f32 %v296, %v312
      %v336 = vadd.f32 %v297, %v312
      %v337 = vadd.f32 %v298, %v312
      %v338 = vadd.f32 %v299, %v312
      %v339 = vadd.f32 %v300, %v312
      %v340 = vadd.f32 %v301, %v312
      %v341 = vadd.f32 %v302, %v312
      %v342 = vadd.f32 %v303, %v312
      %v343 = vadd.f32 %v304, %v312
      %v344 = vadd.f32 %v305, %v312
      %v345 = vadd.f32 %v306, %v312
      %vm346 = vcmp.gt.f32.partialorder %v314, 0.0
      %vm347 = vcmp.gt.f32.partialorder %v315, 0.0
      %vm348 = vcmp.gt.f32.partialorder %v316, 0.0
      %vm349 = vcmp.gt.f32.partialorder %v317, 0.0
      %vm350 = vcmp.gt.f32.partialorder %v318, 0.0
      %vm351 = vcmp.gt.f32.partialorder %v319, 0.0
      %vm352 = vcmp.gt.f32.partialorder %v320, 0.0
      %vm353 = vcmp.gt.f32.partialorder %v321, 0.0
      %vm354 = vcmp.gt.f32.partialorder %v322, 0.0
      %vm355 = vcmp.gt.f32.partialorder %v323, 0.0
      %vm356 = vcmp.gt.f32.partialorder %v324, 0.0
      %vm357 = vcmp.gt.f32.partialorder %v325, 0.0
      %vm358 = vcmp.gt.f32.partialorder %v326, 0.0
      %vm359 = vcmp.gt.f32.partialorder %v327, 0.0
      %vm360 = vcmp.gt.f32.partialorder %v328, 0.0
      %vm361 = vcmp.gt.f32.partialorder %v329, 0.0
      %vm362 = vcmp.gt.f32.partialorder %v330, 0.0
      %vm363 = vcmp.gt.f32.partialorder %v331, 0.0
      %vm364 = vcmp.gt.f32.partialorder %v332, 0.0
      %vm365 = vcmp.gt.f32.partialorder %v333, 0.0
      %vm366 = vcmp.gt.f32.partialorder %v334, 0.0
      %vm367 = vcmp.gt.f32.partialorder %v335, 0.0
      %vm368 = vcmp.gt.f32.partialorder %v336, 0.0
      %vm369 = vcmp.gt.f32.partialorder %v337, 0.0
      %vm370 = vcmp.gt.f32.partialorder %v338, 0.0
      %vm371 = vcmp.gt.f32.partialorder %v339, 0.0
      %vm372 = vcmp.gt.f32.partialorder %v340, 0.0
      %vm373 = vcmp.gt.f32.partialorder %v341, 0.0
      %vm374 = vcmp.gt.f32.partialorder %v342, 0.0
      %vm375 = vcmp.gt.f32.partialorder %v343, 0.0
      %vm376 = vcmp.gt.f32.partialorder %v344, 0.0
      %vm377 = vcmp.gt.f32.partialorder %v345, 0.0
      %v378 = vmul.f32 %v314, 0.2
      %v379 = vmul.f32 %v315, 0.2
      %v380 = vmul.f32 %v316, 0.2
      %v381 = vmul.f32 %v317, 0.2
      %v382 = vmul.f32 %v318, 0.2
      %v383 = vmul.f32 %v319, 0.2
      %v384 = vmul.f32 %v320, 0.2
      %v385 = vmul.f32 %v321, 0.2
      %v386 = vmul.f32 %v322, 0.2
      %v387 = vmul.f32 %v323, 0.2
      %v388 = vmul.f32 %v324, 0.2
      %v389 = vmul.f32 %v325, 0.2
      %v390 = vmul.f32 %v326, 0.2
      %v391 = vmul.f32 %v327, 0.2
      %v392 = vmul.f32 %v328, 0.2
      %v393 = vmul.f32 %v329, 0.2
      %v394 = vmul.f32 %v330, 0.2
      %v395 = vmul.f32 %v331, 0.2
      %v396 = vmul.f32 %v332, 0.2
      %v397 = vmul.f32 %v333, 0.2
      %v398 = vmul.f32 %v334, 0.2
      %v399 = vmul.f32 %v335, 0.2
      %v400 = vmul.f32 %v336, 0.2
      %v401 = vmul.f32 %v337, 0.2
      %v402 = vmul.f32 %v338, 0.2
      %v403 = vmul.f32 %v339, 0.2
      %v404 = vmul.f32 %v340, 0.2
      %v405 = vmul.f32 %v341, 0.2
      %v406 = vmul.f32 %v342, 0.2
      %v407 = vmul.f32 %v343, 0.2
      %v408 = vmul.f32 %v344, 0.2
      %v409 = vmul.f32 %v345, 0.2
      %v410 = vsel %vm346, %v314, %v378
      %v411 = vsel %vm347, %v315, %v379
      %v412 = vsel %vm348, %v316, %v380
      %v413 = vsel %vm349, %v317, %v381
      %v414 = vsel %vm350, %v318, %v382
      %v415 = vsel %vm351, %v319, %v383
      %v416 = vsel %vm352, %v320, %v384
      %v417 = vsel %vm353, %v321, %v385
      %v418 = vsel %vm354, %v322, %v386
      %v419 = vsel %vm355, %v323, %v387
      %v420 = vsel %vm356, %v324, %v388
      %v421 = vsel %vm357, %v325, %v389
      %v422 = vsel %vm358, %v326, %v390
      %v423 = vsel %vm359, %v327, %v391
      %v424 = vsel %vm360, %v328, %v392
      %v425 = vsel %vm361, %v329, %v393
      %v426 = vsel %vm362, %v330, %v394
      %v427 = vsel %vm363, %v331, %v395
      %v428 = vsel %vm364, %v332, %v396
      %v429 = vsel %vm365, %v333, %v397
      %v430 = vsel %vm366, %v334, %v398
      %v431 = vsel %vm367, %v335, %v399
      %v432 = vsel %vm368, %v336, %v400
      %v433 = vsel %vm369, %v337, %v401
      %v434 = vsel %vm370, %v338, %v402
      %v435 = vsel %vm371, %v339, %v403
      %v436 = vsel %vm372, %v340, %v404
      %v437 = vsel %vm373, %v341, %v405
      %v438 = vsel %vm374, %v342, %v406
      %v439 = vsel %vm375, %v343, %v407
      %v440 = vsel %vm376, %v344, %v408
      %v441 = vsel %vm377, %v345, %v409
      %vm442 = vcmask 64512
      %443 = vst.msk [vmem:[#allocation2] sm:$0xff] %vm442, 0.0
      %444 = vst.msk [vmem:[#allocation2 + $0x8] sm:$0xff] %vm442, 0.0
      %vm445 = vcmask 58368
      %446 = vst.msk [vmem:[#allocation2 + $0x10] sm:$0x3] %vm445, 0.0
      %s447 = scalar_lea.vmem [#allocation2], 408
      %448 = vst.msk [vmem:[%s447] sm:$0xff] %vm442, 0.0
      %449 = vst.msk [vmem:[%s447 + $0x8] sm:$0xff] %vm442, 0.0
      %450 = vst.msk [vmem:[%s447 + $0x10] sm:$0x3] %vm445, 0.0
      %vm451 = vcmask 57344
      %452 = vst.msk [vmem:[#allocation2] sm:$0x1] %vm451, 0.0
      %453 = vst.msk [vmem:[#allocation2 + $0x18] sm:$0x1] %vm451, 0.0
      %454 = vst.msk [vmem:[#allocation2 + $0x30] sm:$0x1] %vm451, 0.0
      %455 = vst.msk [vmem:[#allocation2 + $0x48] sm:$0x1] %vm451, 0.0
      %456 = vst.msk [vmem:[#allocation2 + $0x60] sm:$0x1] %vm451, 0.0
      %457 = vst.msk [vmem:[#allocation2 + $0x78] sm:$0x1] %vm451, 0.0
      %458 = vst.msk [vmem:[#allocation2 + $0x90] sm:$0x1] %vm451, 0.0
      %459 = vst.msk [vmem:[#allocation2 + $0xa8] sm:$0x1] %vm451, 0.0
      %460 = vst.msk [vmem:[#allocation2 + $0xc0] sm:$0x1] %vm451, 0.0
      %461 = vst.msk [vmem:[#allocation2 + $0xd8] sm:$0x1] %vm451, 0.0
      %462 = vst.msk [vmem:[#allocation2 + $0xf0] sm:$0x1] %vm451, 0.0
      %463 = vst.msk [vmem:[#allocation2 + $0x108] sm:$0x1] %vm451, 0.0
      %464 = vst.msk [vmem:[#allocation2 + $0x120] sm:$0x1] %vm451, 0.0
      %465 = vst.msk [vmem:[#allocation2 + $0x138] sm:$0x1] %vm451, 0.0
      %466 = vst.msk [vmem:[#allocation2 + $0x150] sm:$0x1] %vm451, 0.0
      %467 = vst.msk [vmem:[#allocation2 + $0x168] sm:$0x1] %vm451, 0.0
      %468 = vst.msk [vmem:[#allocation2 + $0x180] sm:$0x1] %vm451, 0.0
      %469 = vst.msk [vmem:[#allocation2 + $0x198] sm:$0x1] %vm451, 0.0
      %470 = vst.msk [vmem:[#allocation2 + $0x11] sm:$0x1] %vm451, 0.0
      %471 = vst.msk [vmem:[#allocation2 + $0x29] sm:$0x1] %vm451, 0.0
      %472 = vst.msk [vmem:[#allocation2 + $0x41] sm:$0x1] %vm451, 0.0
      %473 = vst.msk [vmem:[#allocation2 + $0x59] sm:$0x1] %vm451, 0.0
      %474 = vst.msk [vmem:[#allocation2 + $0x71] sm:$0x1] %vm451, 0.0
      %475 = vst.msk [vmem:[#allocation2 + $0x89] sm:$0x1] %vm451, 0.0
      %476 = vst.msk [vmem:[#allocation2 + $0xa1] sm:$0x1] %vm451, 0.0
      %477 = vst.msk [vmem:[#allocation2 + $0xb9] sm:$0x1] %vm451, 0.0
      %478 = vst.msk [vmem:[#allocation2 + $0xd1] sm:$0x1] %vm451, 0.0
      %479 = vst.msk [vmem:[#allocation2 + $0xe9] sm:$0x1] %vm451, 0.0
      %480 = vst.msk [vmem:[#allocation2 + $0x101] sm:$0x1] %vm451, 0.0
      %481 = vst.msk [vmem:[#allocation2 + $0x119] sm:$0x1] %vm451, 0.0
      %482 = vst.msk [vmem:[#allocation2 + $0x131] sm:$0x1] %vm451, 0.0
      %483 = vst.msk [vmem:[#allocation2 + $0x149] sm:$0x1] %vm451, 0.0
      %484 = vst.msk [vmem:[#allocation2 + $0x161] sm:$0x1] %vm451, 0.0
      %485 = vst.msk [vmem:[#allocation2 + $0x179] sm:$0x1] %vm451, 0.0
      %486 = vst.msk [vmem:[#allocation2 + $0x191] sm:$0x1] %vm451, 0.0
      %487 = vst.msk [vmem:[#allocation2 + $0x1a9] sm:$0x1] %vm451, 0.0
      %s488 = scalar_lea.vmem [#allocation2], 24
      %489 = vst.msk [vmem:[%s488 + $0x1] sm:$0xff] %vm442, %v410
      %490 = vst.msk [vmem:[%s488 + $0x9] sm:$0xff] %vm442, %v411
      %491 = vst.msk [vmem:[%s488 + $0x19] sm:$0xff] %vm442, %v412
      %492 = vst.msk [vmem:[%s488 + $0x21] sm:$0xff] %vm442, %v413
      %493 = vst.msk [vmem:[%s488 + $0x31] sm:$0xff] %vm442, %v414
      %494 = vst.msk [vmem:[%s488 + $0x39] sm:$0xff] %vm442, %v415
      %495 = vst.msk [vmem:[%s488 + $0x49] sm:$0xff] %vm442, %v416
      %496 = vst.msk [vmem:[%s488 + $0x51] sm:$0xff] %vm442, %v417
      %497 = vst.msk [vmem:[%s488 + $0x61] sm:$0xff] %vm442, %v418
      %498 = vst.msk [vmem:[%s488 + $0x69] sm:$0xff] %vm442, %v419
      %499 = vst.msk [vmem:[%s488 + $0x79] sm:$0xff] %vm442, %v420
      %500 = vst.msk [vmem:[%s488 + $0x81] sm:$0xff] %vm442, %v421
      %501 = vst.msk [vmem:[%s488 + $0x91] sm:$0xff] %vm442, %v422
      %502 = vst.msk [vmem:[%s488 + $0x99] sm:$0xff] %vm442, %v423
      %503 = vst.msk [vmem:[%s488 + $0xa9] sm:$0xff] %vm442, %v424
      %504 = vst.msk [vmem:[%s488 + $0xb1] sm:$0xff] %vm442, %v425
      %505 = vst.msk [vmem:[%s488 + $0xc1] sm:$0xff] %vm442, %v426
      %506 = vst.msk [vmem:[%s488 + $0xc9] sm:$0xff] %vm442, %v427
      %507 = vst.msk [vmem:[%s488 + $0xd9] sm:$0xff] %vm442, %v428
      %508 = vst.msk [vmem:[%s488 + $0xe1] sm:$0xff] %vm442, %v429
      %509 = vst.msk [vmem:[%s488 + $0xf1] sm:$0xff] %vm442, %v430
      %510 = vst.msk [vmem:[%s488 + $0xf9] sm:$0xff] %vm442, %v431
      %511 = vst.msk [vmem:[%s488 + $0x109] sm:$0xff] %vm442, %v432
      %512 = vst.msk [vmem:[%s488 + $0x111] sm:$0xff] %vm442, %v433
      %513 = vst.msk [vmem:[%s488 + $0x121] sm:$0xff] %vm442, %v434
      %514 = vst.msk [vmem:[%s488 + $0x129] sm:$0xff] %vm442, %v435
      %515 = vst.msk [vmem:[%s488 + $0x139] sm:$0xff] %vm442, %v436
      %516 = vst.msk [vmem:[%s488 + $0x141] sm:$0xff] %vm442, %v437
      %517 = vst.msk [vmem:[%s488 + $0x151] sm:$0xff] %vm442, %v438
      %518 = vst.msk [vmem:[%s488 + $0x159] sm:$0xff] %vm442, %v439
      %519 = vst.msk [vmem:[%s488 + $0x169] sm:$0xff] %vm442, %v440
      %520 = vst.msk [vmem:[%s488 + $0x171] sm:$0xff] %vm442, %v441
      %v521 = vld [vmem:[#allocation2] sm:$0xff]
      %v522 = vld [vmem:[#allocation2 + $0x8] sm:$0xff]
      %v523 = vld [vmem:[#allocation2 + $0x18] sm:$0xff]
      %v524 = vld [vmem:[#allocation2 + $0x20] sm:$0xff]
      %v525 = vld [vmem:[#allocation2 + $0x30] sm:$0xff]
      %v526 = vld [vmem:[#allocation2 + $0x38] sm:$0xff]
      %v527 = vld [vmem:[#allocation2 + $0x48] sm:$0xff]
      %v528 = vld [vmem:[#allocation2 + $0x50] sm:$0xff]
      %v529 = vld [vmem:[#allocation2 + $0x60] sm:$0xff]
      %v530 = vld [vmem:[#allocation2 + $0x68] sm:$0xff]
      %v531 = vld [vmem:[#allocation2 + $0x78] sm:$0xff]
      %v532 = vld [vmem:[#allocation2 + $0x80] sm:$0xff]
      %v533 = vld [vmem:[#allocation2 + $0x90] sm:$0xff]
      %v534 = vld [vmem:[#allocation2 + $0x98] sm:$0xff]
      %v535 = vld [vmem:[#allocation2 + $0xa8] sm:$0xff]
      %v536 = vld [vmem:[#allocation2 + $0xb0] sm:$0xff]
      %v537 = vld [vmem:[#allocation2 + $0xc0] sm:$0xff]
      %v538 = vld [vmem:[#allocation2 + $0xc8] sm:$0xff]
      %v539 = vld [vmem:[#allocation2 + $0xd8] sm:$0xff]
      %v540 = vld [vmem:[#allocation2 + $0xe0] sm:$0xff]
      %v541 = vld [vmem:[#allocation2 + $0xf0] sm:$0xff]
      %v542 = vld [vmem:[#allocation2 + $0xf8] sm:$0xff]
      %v543 = vld [vmem:[#allocation2 + $0x108] sm:$0xff]
      %v544 = vld [vmem:[#allocation2 + $0x110] sm:$0xff]
      %v545 = vld [vmem:[#allocation2 + $0x120] sm:$0xff]
      %v546 = vld [vmem:[#allocation2 + $0x128] sm:$0xff]
      %v547 = vld [vmem:[#allocation2 + $0x138] sm:$0xff]
      %v548 = vld [vmem:[#allocation2 + $0x140] sm:$0xff]
      %v549 = vld [vmem:[#allocation2 + $0x150] sm:$0xff]
      %v550 = vld [vmem:[#allocation2 + $0x158] sm:$0xff]
      %v551 = vld [vmem:[#allocation2 + $0x168] sm:$0xff]
      %v552 = vld [vmem:[#allocation2 + $0x170] sm:$0xff]
      %v553 = vld [vmem:[#allocation2 + $0x1] sm:$0xff]
      %v554 = vld [vmem:[#allocation2 + $0x9] sm:$0xff]
      %v555 = vld [vmem:[#allocation2 + $0x19] sm:$0xff]
      %v556 = vld [vmem:[#allocation2 + $0x21] sm:$0xff]
      %v557 = vld [vmem:[#allocation2 + $0x31] sm:$0xff]
      %v558 = vld [vmem:[#allocation2 + $0x39] sm:$0xff]
      %v559 = vld [vmem:[#allocation2 + $0x49] sm:$0xff]
      %v560 = vld [vmem:[#allocation2 + $0x51] sm:$0xff]
      %v561 = vld [vmem:[#allocation2 + $0x61] sm:$0xff]
      %v562 = vld [vmem:[#allocation2 + $0x69] sm:$0xff]
      %v563 = vld [vmem:[#allocation2 + $0x79] sm:$0xff]
      %v564 = vld [vmem:[#allocation2 + $0x81] sm:$0xff]
      %v565 = vld [vmem:[#allocation2 + $0x91] sm:$0xff]
      %v566 = vld [vmem:[#allocation2 + $0x99] sm:$0xff]
      %v567 = vld [vmem:[#allocation2 + $0xa9] sm:$0xff]
      %v568 = vld [vmem:[#allocation2 + $0xb1] sm:$0xff]
      %v569 = vld [vmem:[#allocation2 + $0xc1] sm:$0xff]
      %v570 = vld [vmem:[#allocation2 + $0xc9] sm:$0xff]
      %v571 = vld [vmem:[#allocation2 + $0xd9] sm:$0xff]
      %v572 = vld [vmem:[#allocation2 + $0xe1] sm:$0xff]
      %v573 = vld [vmem:[#allocation2 + $0xf1] sm:$0xff]
      %v574 = vld [vmem:[#allocation2 + $0xf9] sm:$0xff]
      %v575 = vld [vmem:[#allocation2 + $0x109] sm:$0xff]
      %v576 = vld [vmem:[#allocation2 + $0x111] sm:$0xff]
      %v577 = vld [vmem:[#allocation2 + $0x121] sm:$0xff]
      %v578 = vld [vmem:[#allocation2 + $0x129] sm:$0xff]
      %v579 = vld [vmem:[#allocation2 + $0x139] sm:$0xff]
      %v580 = vld [vmem:[#allocation2 + $0x141] sm:$0xff]
      %v581 = vld [vmem:[#allocation2 + $0x151] sm:$0xff]
      %v582 = vld [vmem:[#allocation2 + $0x159] sm:$0xff]
      %v583 = vld [vmem:[#allocation2 + $0x169] sm:$0xff]
      %v584 = vld [vmem:[#allocation2 + $0x171] sm:$0xff]
      %v585 = vld [vmem:[#allocation2 + $0x2] sm:$0xff]
      %v586 = vld [vmem:[#allocation2 + $0xa] sm:$0xff]
      %v587 = vld [vmem:[#allocation2 + $0x1a] sm:$0xff]
      %v588 = vld [vmem:[#allocation2 + $0x22] sm:$0xff]
      %v589 = vld [vmem:[#allocation2 + $0x32] sm:$0xff]
      %v590 = vld [vmem:[#allocation2 + $0x3a] sm:$0xff]
      %v591 = vld [vmem:[#allocation2 + $0x4a] sm:$0xff]
      %v592 = vld [vmem:[#allocation2 + $0x52] sm:$0xff]
      %v593 = vld [vmem:[#allocation2 + $0x62] sm:$0xff]
      %v594 = vld [vmem:[#allocation2 + $0x6a] sm:$0xff]
      %v595 = vld [vmem:[#allocation2 + $0x7a] sm:$0xff]
      %v596 = vld [vmem:[#allocation2 + $0x82] sm:$0xff]
      %v597 = vld [vmem:[#allocation2 + $0x92] sm:$0xff]
      %v598 = vld [vmem:[#allocation2 + $0x9a] sm:$0xff]
      %v599 = vld [vmem:[#allocation2 + $0xaa] sm:$0xff]
      %v600 = vld [vmem:[#allocation2 + $0xb2] sm:$0xff]
      %v601 = vld [vmem:[#allocation2 + $0xc2] sm:$0xff]
      %v602 = vld [vmem:[#allocation2 + $0xca] sm:$0xff]
      %v603 = vld [vmem:[#allocation2 + $0xda] sm:$0xff]
      %v604 = vld [vmem:[#allocation2 + $0xe2] sm:$0xff]
      %v605 = vld [vmem:[#allocation2 + $0xf2] sm:$0xff]
      %v606 = vld [vmem:[#allocation2 + $0xfa] sm:$0xff]
      %v607 = vld [vmem:[#allocation2 + $0x10a] sm:$0xff]
      %v608 = vld [vmem:[#allocation2 + $0x112] sm:$0xff]
      %v609 = vld [vmem:[#allocation2 + $0x122] sm:$0xff]
      %v610 = vld [vmem:[#allocation2 + $0x12a] sm:$0xff]
      %v611 = vld [vmem:[#allocation2 + $0x13a] sm:$0xff]
      %v612 = vld [vmem:[#allocation2 + $0x142] sm:$0xff]
      %v613 = vld [vmem:[#allocation2 + $0x152] sm:$0xff]
      %v614 = vld [vmem:[#allocation2 + $0x15a] sm:$0xff]
      %v615 = vld [vmem:[#allocation2 + $0x16a] sm:$0xff]
      %v616 = vld [vmem:[#allocation2 + $0x172] sm:$0xff]
      %v617 = vld [vmem:[%s488] sm:$0xff]
      %v618 = vld [vmem:[%s488 + $0x8] sm:$0xff]
      %v619 = vld [vmem:[%s488 + $0x18] sm:$0xff]
      %v620 = vld [vmem:[%s488 + $0x20] sm:$0xff]
      %v621 = vld [vmem:[%s488 + $0x30] sm:$0xff]
      %v622 = vld [vmem:[%s488 + $0x38] sm:$0xff]
      %v623 = vld [vmem:[%s488 + $0x48] sm:$0xff]
      %v624 = vld [vmem:[%s488 + $0x50] sm:$0xff]
      %v625 = vld [vmem:[%s488 + $0x60] sm:$0xff]
      %v626 = vld [vmem:[%s488 + $0x68] sm:$0xff]
      %v627 = vld [vmem:[%s488 + $0x78] sm:$0xff]
      %v628 = vld [vmem:[%s488 + $0x80] sm:$0xff]
      %v629 = vld [vmem:[%s488 + $0x90] sm:$0xff]
      %v630 = vld [vmem:[%s488 + $0x98] sm:$0xff]
      %v631 = vld [vmem:[%s488 + $0xa8] sm:$0xff]
      %v632 = vld [vmem:[%s488 + $0xb0] sm:$0xff]
      %v633 = vld [vmem:[%s488 + $0xc0] sm:$0xff]
      %v634 = vld [vmem:[%s488 + $0xc8] sm:$0xff]
      %v635 = vld [vmem:[%s488 + $0xd8] sm:$0xff]
      %v636 = vld [vmem:[%s488 + $0xe0] sm:$0xff]
      %v637 = vld [vmem:[%s488 + $0xf0] sm:$0xff]
      %v638 = vld [vmem:[%s488 + $0xf8] sm:$0xff]
      %v639 = vld [vmem:[%s488 + $0x108] sm:$0xff]
      %v640 = vld [vmem:[%s488 + $0x110] sm:$0xff]
      %v641 = vld [vmem:[%s488 + $0x120] sm:$0xff]
      %v642 = vld [vmem:[%s488 + $0x128] sm:$0xff]
      %v643 = vld [vmem:[%s488 + $0x138] sm:$0xff]
      %v644 = vld [vmem:[%s488 + $0x140] sm:$0xff]
      %v645 = vld [vmem:[%s488 + $0x150] sm:$0xff]
      %v646 = vld [vmem:[%s488 + $0x158] sm:$0xff]
      %v647 = vld [vmem:[%s488 + $0x168] sm:$0xff]
      %v648 = vld [vmem:[%s488 + $0x170] sm:$0xff]
      %v649 = vld [vmem:[%s488 + $0x1] sm:$0xff]
      %v650 = vld [vmem:[%s488 + $0x9] sm:$0xff]
      %v651 = vld [vmem:[%s488 + $0x19] sm:$0xff]
      %v652 = vld [vmem:[%s488 + $0x21] sm:$0xff]
      %v653 = vld [vmem:[%s488 + $0x31] sm:$0xff]
      %v654 = vld [vmem:[%s488 + $0x39] sm:$0xff]
      %v655 = vld [vmem:[%s488 + $0x49] sm:$0xff]
      %v656 = vld [vmem:[%s488 + $0x51] sm:$0xff]
      %v657 = vld [vmem:[%s488 + $0x61] sm:$0xff]
      %v658 = vld [vmem:[%s488 + $0x69] sm:$0xff]
      %v659 = vld [vmem:[%s488 + $0x79] sm:$0xff]
      %v660 = vld [vmem:[%s488 + $0x81] sm:$0xff]
      %v661 = vld [vmem:[%s488 + $0x91] sm:$0xff]
      %v662 = vld [vmem:[%s488 + $0x99] sm:$0xff]
      %v663 = vld [vmem:[%s488 + $0xa9] sm:$0xff]
      %v664 = vld [vmem:[%s488 + $0xb1] sm:$0xff]
      %v665 = vld [vmem:[%s488 + $0xc1] sm:$0xff]
      %v666 = vld [vmem:[%s488 + $0xc9] sm:$0xff]
      %v667 = vld [vmem:[%s488 + $0xd9] sm:$0xff]
      %v668 = vld [vmem:[%s488 + $0xe1] sm:$0xff]
      %v669 = vld [vmem:[%s488 + $0xf1] sm:$0xff]
      %v670 = vld [vmem:[%s488 + $0xf9] sm:$0xff]
      %v671 = vld [vmem:[%s488 + $0x109] sm:$0xff]
      %v672 = vld [vmem:[%s488 + $0x111] sm:$0xff]
      %v673 = vld [vmem:[%s488 + $0x121] sm:$0xff]
      %v674 = vld [vmem:[%s488 + $0x129] sm:$0xff]
      %v675 = vld [vmem:[%s488 + $0x139] sm:$0xff]
      %v676 = vld [vmem:[%s488 + $0x141] sm:$0xff]
      %v677 = vld [vmem:[%s488 + $0x151] sm:$0xff]
      %v678 = vld [vmem:[%s488 + $0x159] sm:$0xff]
      %v679 = vld [vmem:[%s488 + $0x169] sm:$0xff]
      %v680 = vld [vmem:[%s488 + $0x171] sm:$0xff]
      %v681 = vld [vmem:[%s488 + $0x2] sm:$0xff]
      %v682 = vld [vmem:[%s488 + $0xa] sm:$0xff]
      %v683 = vld [vmem:[%s488 + $0x1a] sm:$0xff]
      %v684 = vld [vmem:[%s488 + $0x22] sm:$0xff]
      %v685 = vld [vmem:[%s488 + $0x32] sm:$0xff]
      %v686 = vld [vmem:[%s488 + $0x3a] sm:$0xff]
      %v687 = vld [vmem:[%s488 + $0x4a] sm:$0xff]
      %v688 = vld [vmem:[%s488 + $0x52] sm:$0xff]
      %v689 = vld [vmem:[%s488 + $0x62] sm:$0xff]
      %v690 = vld [vmem:[%s488 + $0x6a] sm:$0xff]
      %v691 = vld [vmem:[%s488 + $0x7a] sm:$0xff]
      %v692 = vld [vmem:[%s488 + $0x82] sm:$0xff]
      %v693 = vld [vmem:[%s488 + $0x92] sm:$0xff]
      %v694 = vld [vmem:[%s488 + $0x9a] sm:$0xff]
      %v695 = vld [vmem:[%s488 + $0xaa] sm:$0xff]
      %v696 = vld [vmem:[%s488 + $0xb2] sm:$0xff]
      %v697 = vld [vmem:[%s488 + $0xc2] sm:$0xff]
      %v698 = vld [vmem:[%s488 + $0xca] sm:$0xff]
      %v699 = vld [vmem:[%s488 + $0xda] sm:$0xff]
      %v700 = vld [vmem:[%s488 + $0xe2] sm:$0xff]
      %v701 = vld [vmem:[%s488 + $0xf2] sm:$0xff]
      %v702 = vld [vmem:[%s488 + $0xfa] sm:$0xff]
      %v703 = vld [vmem:[%s488 + $0x10a] sm:$0xff]
      %v704 = vld [vmem:[%s488 + $0x112] sm:$0xff]
      %v705 = vld [vmem:[%s488 + $0x122] sm:$0xff]
      %v706 = vld [vmem:[%s488 + $0x12a] sm:$0xff]
      %v707 = vld [vmem:[%s488 + $0x13a] sm:$0xff]
      %v708 = vld [vmem:[%s488 + $0x142] sm:$0xff]
      %v709 = vld [vmem:[%s488 + $0x152] sm:$0xff]
      %v710 = vld [vmem:[%s488 + $0x15a] sm:$0xff]
      %v711 = vld [vmem:[%s488 + $0x16a] sm:$0xff]
      %v712 = vld [vmem:[%s488 + $0x172] sm:$0xff]
      %s713 = scalar_lea.vmem [#allocation2], 48
      %v714 = vld [vmem:[%s713] sm:$0xff]
      %v715 = vld [vmem:[%s713 + $0x8] sm:$0xff]
      %v716 = vld [vmem:[%s713 + $0x18] sm:$0xff]
      %v717 = vld [vmem:[%s713 + $0x20] sm:$0xff]
      %v718 = vld [vmem:[%s713 + $0x30] sm:$0xff]
      %v719 = vld [vmem:[%s713 + $0x38] sm:$0xff]
      %v720 = vld [vmem:[%s713 + $0x48] sm:$0xff]
      %v721 = vld [vmem:[%s713 + $0x50] sm:$0xff]
      %v722 = vld [vmem:[%s713 + $0x60] sm:$0xff]
      %v723 = vld [vmem:[%s713 + $0x68] sm:$0xff]
      %v724 = vld [vmem:[%s713 + $0x78] sm:$0xff]
      %v725 = vld [vmem:[%s713 + $0x80] sm:$0xff]
      %v726 = vld [vmem:[%s713 + $0x90] sm:$0xff]
      %v727 = vld [vmem:[%s713 + $0x98] sm:$0xff]
      %v728 = vld [vmem:[%s713 + $0xa8] sm:$0xff]
      %v729 = vld [vmem:[%s713 + $0xb0] sm:$0xff]
      %v730 = vld [vmem:[%s713 + $0xc0] sm:$0xff]
      %v731 = vld [vmem:[%s713 + $0xc8] sm:$0xff]
      %v732 = vld [vmem:[%s713 + $0xd8] sm:$0xff]
      %v733 = vld [vmem:[%s713 + $0xe0] sm:$0xff]
      %v734 = vld [vmem:[%s713 + $0xf0] sm:$0xff]
      %v735 = vld [vmem:[%s713 + $0xf8] sm:$0xff]
      %v736 = vld [vmem:[%s713 + $0x108] sm:$0xff]
      %v737 = vld [vmem:[%s713 + $0x110] sm:$0xff]
      %v738 = vld [vmem:[%s713 + $0x120] sm:$0xff]
      %v739 = vld [vmem:[%s713 + $0x128] sm:$0xff]
      %v740 = vld [vmem:[%s713 + $0x138] sm:$0xff]
      %v741 = vld [vmem:[%s713 + $0x140] sm:$0xff]
      %v742 = vld [vmem:[%s713 + $0x150] sm:$0xff]
      %v743 = vld [vmem:[%s713 + $0x158] sm:$0xff]
      %v744 = vld [vmem:[%s713 + $0x168] sm:$0xff]
      %v745 = vld [vmem:[%s713 + $0x170] sm:$0xff]
      %v746 = vld [vmem:[%s713 + $0x1] sm:$0xff]
      %v747 = vld [vmem:[%s713 + $0x9] sm:$0xff]
      %v748 = vld [vmem:[%s713 + $0x19] sm:$0xff]
      %v749 = vld [vmem:[%s713 + $0x21] sm:$0xff]
      %v750 = vld [vmem:[%s713 + $0x31] sm:$0xff]
      %v751 = vld [vmem:[%s713 + $0x39] sm:$0xff]
      %v752 = vld [vmem:[%s713 + $0x49] sm:$0xff]
      %v753 = vld [vmem:[%s713 + $0x51] sm:$0xff]
      %v754 = vld [vmem:[%s713 + $0x61] sm:$0xff]
      %v755 = vld [vmem:[%s713 + $0x69] sm:$0xff]
      %v756 = vld [vmem:[%s713 + $0x79] sm:$0xff]
      %v757 = vld [vmem:[%s713 + $0x81] sm:$0xff]
      %v758 = vld [vmem:[%s713 + $0x91] sm:$0xff]
      %v759 = vld [vmem:[%s713 + $0x99] sm:$0xff]
      %v760 = vld [vmem:[%s713 + $0xa9] sm:$0xff]
      %v761 = vld [vmem:[%s713 + $0xb1] sm:$0xff]
      %v762 = vld [vmem:[%s713 + $0xc1] sm:$0xff]
      %v763 = vld [vmem:[%s713 + $0xc9] sm:$0xff]
      %v764 = vld [vmem:[%s713 + $0xd9] sm:$0xff]
      %v765 = vld [vmem:[%s713 + $0xe1] sm:$0xff]
      %v766 = vld [vmem:[%s713 + $0xf1] sm:$0xff]
      %v767 = vld [vmem:[%s713 + $0xf9] sm:$0xff]
      %v768 = vld [vmem:[%s713 + $0x109] sm:$0xff]
      %v769 = vld [vmem:[%s713 + $0x111] sm:$0xff]
      %v770 = vld [vmem:[%s713 + $0x121] sm:$0xff]
      %v771 = vld [vmem:[%s713 + $0x129] sm:$0xff]
      %v772 = vld [vmem:[%s713 + $0x139] sm:$0xff]
      %v773 = vld [vmem:[%s713 + $0x141] sm:$0xff]
      %v774 = vld [vmem:[%s713 + $0x151] sm:$0xff]
      %v775 = vld [vmem:[%s713 + $0x159] sm:$0xff]
      %v776 = vld [vmem:[%s713 + $0x169] sm:$0xff]
      %v777 = vld [vmem:[%s713 + $0x171] sm:$0xff]
      %v778 = vld [vmem:[%s713 + $0x2] sm:$0xff]
      %v779 = vld [vmem:[%s713 + $0xa] sm:$0xff]
      %v780 = vld [vmem:[%s713 + $0x1a] sm:$0xff]
      %v781 = vld [vmem:[%s713 + $0x22] sm:$0xff]
      %v782 = vld [vmem:[%s713 + $0x32] sm:$0xff]
      %v783 = vld [vmem:[%s713 + $0x3a] sm:$0xff]
      %v784 = vld [vmem:[%s713 + $0x4a] sm:$0xff]
      %v785 = vld [vmem:[%s713 + $0x52] sm:$0xff]
      %v786 = vld [vmem:[%s713 + $0x62] sm:$0xff]
      %v787 = vld [vmem:[%s713 + $0x6a] sm:$0xff]
      %v788 = vld [vmem:[%s713 + $0x7a] sm:$0xff]
      %v789 = vld [vmem:[%s713 + $0x82] sm:$0xff]
      %v790 = vld [vmem:[%s713 + $0x92] sm:$0xff]
      %v791 = vld [vmem:[%s713 + $0x9a] sm:$0xff]
      %v792 = vld [vmem:[%s713 + $0xaa] sm:$0xff]
      %v793 = vld [vmem:[%s713 + $0xb2] sm:$0xff]
      %v794 = vld [vmem:[%s713 + $0xc2] sm:$0xff]
      %v795 = vld [vmem:[%s713 + $0xca] sm:$0xff]
      %v796 = vld [vmem:[%s713 + $0xda] sm:$0xff]
      %v797 = vld [vmem:[%s713 + $0xe2] sm:$0xff]
      %v798 = vld [vmem:[%s713 + $0xf2] sm:$0xff]
      %v799 = vld [vmem:[%s713 + $0xfa] sm:$0xff]
      %v800 = vld [vmem:[%s713 + $0x10a] sm:$0xff]
      %v801 = vld [vmem:[%s713 + $0x112] sm:$0xff]
      %v802 = vld [vmem:[%s713 + $0x122] sm:$0xff]
      %v803 = vld [vmem:[%s713 + $0x12a] sm:$0xff]
      %v804 = vld [vmem:[%s713 + $0x13a] sm:$0xff]
      %v805 = vld [vmem:[%s713 + $0x142] sm:$0xff]
      %v806 = vld [vmem:[%s713 + $0x152] sm:$0xff]
      %v807 = vld [vmem:[%s713 + $0x15a] sm:$0xff]
      %v808 = vld [vmem:[%s713 + $0x16a] sm:$0xff]
      %v809 = vld [vmem:[%s713 + $0x172] sm:$0xff]
      %842 = vrot.lane.b32.xlu0 %v553, 8
      %v843 = vpop.permute.xlu0 %842
      %844 = vrot.lane.b32.xlu0 %v554, 8
      %v845 = vpop.permute.xlu0 %844
      %846 = vrot.lane.b32.xlu0 %v555, 8
      %v847 = vpop.permute.xlu0 %846
      %848 = vrot.lane.b32.xlu0 %v556, 8
      %v849 = vpop.permute.xlu0 %848
      %850 = vrot.lane.b32.xlu0 %v557, 8
      %v851 = vpop.permute.xlu0 %850
      %852 = vrot.lane.b32.xlu0 %v558, 8
      %v853 = vpop.permute.xlu0 %852
      %854 = vrot.lane.b32.xlu0 %v559, 8
      %v855 = vpop.permute.xlu0 %854
      %856 = vrot.lane.b32.xlu0 %v560, 8
      %v857 = vpop.permute.xlu0 %856
      %858 = vrot.lane.b32.xlu0 %v561, 8
      %v859 = vpop.permute.xlu0 %858
      %860 = vrot.lane.b32.xlu0 %v562, 8
      %v861 = vpop.permute.xlu0 %860
      %862 = vrot.lane.b32.xlu0 %v563, 8
      %v863 = vpop.permute.xlu0 %862
      %864 = vrot.lane.b32.xlu0 %v564, 8
      %v865 = vpop.permute.xlu0 %864
      %866 = vrot.lane.b32.xlu0 %v565, 8
      %v867 = vpop.permute.xlu0 %866
      %868 = vrot.lane.b32.xlu0 %v566, 8
      %v869 = vpop.permute.xlu0 %868
      %870 = vrot.lane.b32.xlu0 %v567, 8
      %v871 = vpop.permute.xlu0 %870
      %872 = vrot.lane.b32.xlu0 %v568, 8
      %v873 = vpop.permute.xlu0 %872
      %874 = vrot.lane.b32.xlu0 %v569, 8
      %v875 = vpop.permute.xlu0 %874
      %876 = vrot.lane.b32.xlu0 %v570, 8
      %v877 = vpop.permute.xlu0 %876
      %878 = vrot.lane.b32.xlu0 %v571, 8
      %v879 = vpop.permute.xlu0 %878
      %880 = vrot.lane.b32.xlu0 %v572, 8
      %v881 = vpop.permute.xlu0 %880
      %882 = vrot.lane.b32.xlu0 %v573, 8
      %v883 = vpop.permute.xlu0 %882
      %884 = vrot.lane.b32.xlu0 %v574, 8
      %v885 = vpop.permute.xlu0 %884
      %886 = vrot.lane.b32.xlu0 %v575, 8
      %v887 = vpop.permute.xlu0 %886
      %888 = vrot.lane.b32.xlu0 %v576, 8
      %v889 = vpop.permute.xlu0 %888
      %890 = vrot.lane.b32.xlu0 %v577, 8
      %v891 = vpop.permute.xlu0 %890
      %892 = vrot.lane.b32.xlu0 %v578, 8
      %v893 = vpop.permute.xlu0 %892
      %894 = vrot.lane.b32.xlu0 %v579, 8
      %v895 = vpop.permute.xlu0 %894
      %896 = vrot.lane.b32.xlu0 %v580, 8
      %v897 = vpop.permute.xlu0 %896
      %898 = vrot.lane.b32.xlu0 %v581, 8
      %v899 = vpop.permute.xlu0 %898
      %900 = vrot.lane.b32.xlu0 %v582, 8
      %v901 = vpop.permute.xlu0 %900
      %902 = vrot.lane.b32.xlu0 %v583, 8
      %v903 = vpop.permute.xlu0 %902
      %904 = vrot.lane.b32.xlu0 %v584, 8
      %v905 = vpop.permute.xlu0 %904
      %970 = vrot.lane.b32.xlu0 %v585, 16
      %v971 = vpop.permute.xlu0 %970
      %972 = vrot.lane.b32.xlu0 %v586, 16
      %v973 = vpop.permute.xlu0 %972
      %974 = vrot.lane.b32.xlu0 %v587, 16
      %v975 = vpop.permute.xlu0 %974
      %976 = vrot.lane.b32.xlu0 %v588, 16
      %v977 = vpop.permute.xlu0 %976
      %978 = vrot.lane.b32.xlu0 %v589, 16
      %v979 = vpop.permute.xlu0 %978
      %980 = vrot.lane.b32.xlu0 %v590, 16
      %v981 = vpop.permute.xlu0 %980
      %982 = vrot.lane.b32.xlu0 %v591, 16
      %v983 = vpop.permute.xlu0 %982
      %984 = vrot.lane.b32.xlu0 %v592, 16
      %v985 = vpop.permute.xlu0 %984
      %986 = vrot.lane.b32.xlu0 %v593, 16
      %v987 = vpop.permute.xlu0 %986
      %988 = vrot.lane.b32.xlu0 %v594, 16
      %v989 = vpop.permute.xlu0 %988
      %990 = vrot.lane.b32.xlu0 %v595, 16
      %v991 = vpop.permute.xlu0 %990
      %992 = vrot.lane.b32.xlu0 %v596, 16
      %v993 = vpop.permute.xlu0 %992
      %994 = vrot.lane.b32.xlu0 %v597, 16
      %v995 = vpop.permute.xlu0 %994
      %996 = vrot.lane.b32.xlu0 %v598, 16
      %v997 = vpop.permute.xlu0 %996
      %998 = vrot.lane.b32.xlu0 %v599, 16
      %v999 = vpop.permute.xlu0 %998
      %1000 = vrot.lane.b32.xlu0 %v600, 16
      %v1001 = vpop.permute.xlu0 %1000
      %1002 = vrot.lane.b32.xlu0 %v601, 16
      %v1003 = vpop.permute.xlu0 %1002
      %1004 = vrot.lane.b32.xlu0 %v602, 16
      %v1005 = vpop.permute.xlu0 %1004
      %1006 = vrot.lane.b32.xlu0 %v603, 16
      %v1007 = vpop.permute.xlu0 %1006
      %1008 = vrot.lane.b32.xlu0 %v604, 16
      %v1009 = vpop.permute.xlu0 %1008
      %1010 = vrot.lane.b32.xlu0 %v605, 16
      %v1011 = vpop.permute.xlu0 %1010
      %1012 = vrot.lane.b32.xlu0 %v606, 16
      %v1013 = vpop.permute.xlu0 %1012
      %1014 = vrot.lane.b32.xlu0 %v607, 16
      %v1015 = vpop.permute.xlu0 %1014
      %1016 = vrot.lane.b32.xlu0 %v608, 16
      %v1017 = vpop.permute.xlu0 %1016
      %1018 = vrot.lane.b32.xlu0 %v609, 16
      %v1019 = vpop.permute.xlu0 %1018
      %1020 = vrot.lane.b32.xlu0 %v610, 16
      %v1021 = vpop.permute.xlu0 %1020
      %1022 = vrot.lane.b32.xlu0 %v611, 16
      %v1023 = vpop.permute.xlu0 %1022
      %1024 = vrot.lane.b32.xlu0 %v612, 16
      %v1025 = vpop.permute.xlu0 %1024
      %1026 = vrot.lane.b32.xlu0 %v613, 16
      %v1027 = vpop.permute.xlu0 %1026
      %1028 = vrot.lane.b32.xlu0 %v614, 16
      %v1029 = vpop.permute.xlu0 %1028
      %1030 = vrot.lane.b32.xlu0 %v615, 16
      %v1031 = vpop.permute.xlu0 %1030
      %1032 = vrot.lane.b32.xlu0 %v616, 16
      %v1033 = vpop.permute.xlu0 %1032
      %1098 = vrot.lane.b32.xlu0 %v617, 24
      %v1099 = vpop.permute.xlu0 %1098
      %1100 = vrot.lane.b32.xlu0 %v618, 24
      %v1101 = vpop.permute.xlu0 %1100
      %1102 = vrot.lane.b32.xlu0 %v619, 24
      %v1103 = vpop.permute.xlu0 %1102
      %1104 = vrot.lane.b32.xlu0 %v620, 24
      %v1105 = vpop.permute.xlu0 %1104
      %1106 = vrot.lane.b32.xlu0 %v621, 24
      %v1107 = vpop.permute.xlu0 %1106
      %1108 = vrot.lane.b32.xlu0 %v622, 24
      %v1109 = vpop.permute.xlu0 %1108
      %1110 = vrot.lane.b32.xlu0 %v623, 24
      %v1111 = vpop.permute.xlu0 %1110
      %1112 = vrot.lane.b32.xlu0 %v624, 24
      %v1113 = vpop.permute.xlu0 %1112
      %1114 = vrot.lane.b32.xlu0 %v625, 24
      %v1115 = vpop.permute.xlu0 %1114
      %1116 = vrot.lane.b32.xlu0 %v626, 24
      %v1117 = vpop.permute.xlu0 %1116
      %1118 = vrot.lane.b32.xlu0 %v627, 24
      %v1119 = vpop.permute.xlu0 %1118
      %1120 = vrot.lane.b32.xlu0 %v628, 24
      %v1121 = vpop.permute.xlu0 %1120
      %1122 = vrot.lane.b32.xlu0 %v629, 24
      %v1123 = vpop.permute.xlu0 %1122
      %1124 = vrot.lane.b32.xlu0 %v630, 24
      %v1125 = vpop.permute.xlu0 %1124
      %1126 = vrot.lane.b32.xlu0 %v631, 24
      %v1127 = vpop.permute.xlu0 %1126
      %1128 = vrot.lane.b32.xlu0 %v632, 24
      %v1129 = vpop.permute.xlu0 %1128
      %1130 = vrot.lane.b32.xlu0 %v633, 24
      %v1131 = vpop.permute.xlu0 %1130
      %1132 = vrot.lane.b32.xlu0 %v634, 24
      %v1133 = vpop.permute.xlu0 %1132
      %1134 = vrot.lane.b32.xlu0 %v635, 24
      %v1135 = vpop.permute.xlu0 %1134
      %1136 = vrot.lane.b32.xlu0 %v636, 24
      %v1137 = vpop.permute.xlu0 %1136
      %1138 = vrot.lane.b32.xlu0 %v637, 24
      %v1139 = vpop.permute.xlu0 %1138
      %1140 = vrot.lane.b32.xlu0 %v638, 24
      %v1141 = vpop.permute.xlu0 %1140
      %1142 = vrot.lane.b32.xlu0 %v639, 24
      %v1143 = vpop.permute.xlu0 %1142
      %1144 = vrot.lane.b32.xlu0 %v640, 24
      %v1145 = vpop.permute.xlu0 %1144
      %1146 = vrot.lane.b32.xlu0 %v641, 24
      %v1147 = vpop.permute.xlu0 %1146
      %1148 = vrot.lane.b32.xlu0 %v642, 24
      %v1149 = vpop.permute.xlu0 %1148
      %1150 = vrot.lane.b32.xlu0 %v643, 24
      %v1151 = vpop.permute.xlu0 %1150
      %1152 = vrot.lane.b32.xlu0 %v644, 24
      %v1153 = vpop.permute.xlu0 %1152
      %1154 = vrot.lane.b32.xlu0 %v645, 24
      %v1155 = vpop.permute.xlu0 %1154
      %1156 = vrot.lane.b32.xlu0 %v646, 24
      %v1157 = vpop.permute.xlu0 %1156
      %1158 = vrot.lane.b32.xlu0 %v647, 24
      %v1159 = vpop.permute.xlu0 %1158
      %1160 = vrot.lane.b32.xlu0 %v648, 24
      %v1161 = vpop.permute.xlu0 %1160
      %1226 = vrot.lane.b32.xlu0 %v649, 32
      %v1227 = vpop.permute.xlu0 %1226
      %1228 = vrot.lane.b32.xlu0 %v650, 32
      %v1229 = vpop.permute.xlu0 %1228
      %1230 = vrot.lane.b32.xlu0 %v651, 32
      %v1231 = vpop.permute.xlu0 %1230
      %1232 = vrot.lane.b32.xlu0 %v652, 32
      %v1233 = vpop.permute.xlu0 %1232
      %1234 = vrot.lane.b32.xlu0 %v653, 32
      %v1235 = vpop.permute.xlu0 %1234
      %1236 = vrot.lane.b32.xlu0 %v654, 32
      %v1237 = vpop.permute.xlu0 %1236
      %1238 = vrot.lane.b32.xlu0 %v655, 32
      %v1239 = vpop.permute.xlu0 %1238
      %1240 = vrot.lane.b32.xlu0 %v656, 32
      %v1241 = vpop.permute.xlu0 %1240
      %1242 = vrot.lane.b32.xlu0 %v657, 32
      %v1243 = vpop.permute.xlu0 %1242
      %1244 = vrot.lane.b32.xlu0 %v658, 32
      %v1245 = vpop.permute.xlu0 %1244
      %1246 = vrot.lane.b32.xlu0 %v659, 32
      %v1247 = vpop.permute.xlu0 %1246
      %1248 = vrot.lane.b32.xlu0 %v660, 32
      %v1249 = vpop.permute.xlu0 %1248
      %1250 = vrot.lane.b32.xlu0 %v661, 32
      %v1251 = vpop.permute.xlu0 %1250
      %1252 = vrot.lane.b32.xlu0 %v662, 32
      %v1253 = vpop.permute.xlu0 %1252
      %1254 = vrot.lane.b32.xlu0 %v663, 32
      %v1255 = vpop.permute.xlu0 %1254
      %1256 = vrot.lane.b32.xlu0 %v664, 32
      %v1257 = vpop.permute.xlu0 %1256
      %1258 = vrot.lane.b32.xlu0 %v665, 32
      %v1259 = vpop.permute.xlu0 %1258
      %1260 = vrot.lane.b32.xlu0 %v666, 32
      %v1261 = vpop.permute.xlu0 %1260
      %1262 = vrot.lane.b32.xlu0 %v667, 32
      %v1263 = vpop.permute.xlu0 %1262
      %1264 = vrot.lane.b32.xlu0 %v668, 32
      %v1265 = vpop.permute.xlu0 %1264
      %1266 = vrot.lane.b32.xlu0 %v669, 32
      %v1267 = vpop.permute.xlu0 %1266
      %1268 = vrot.lane.b32.xlu0 %v670, 32
      %v1269 = vpop.permute.xlu0 %1268
      %1270 = vrot.lane.b32.xlu0 %v671, 32
      %v1271 = vpop.permute.xlu0 %1270
      %1272 = vrot.lane.b32.xlu0 %v672, 32
      %v1273 = vpop.permute.xlu0 %1272
      %1274 = vrot.lane.b32.xlu0 %v673, 32
      %v1275 = vpop.permute.xlu0 %1274
      %1276 = vrot.lane.b32.xlu0 %v674, 32
      %v1277 = vpop.permute.xlu0 %1276
      %1278 = vrot.lane.b32.xlu0 %v675, 32
      %v1279 = vpop.permute.xlu0 %1278
      %1280 = vrot.lane.b32.xlu0 %v676, 32
      %v1281 = vpop.permute.xlu0 %1280
      %1282 = vrot.lane.b32.xlu0 %v677, 32
      %v1283 = vpop.permute.xlu0 %1282
      %1284 = vrot.lane.b32.xlu0 %v678, 32
      %v1285 = vpop.permute.xlu0 %1284
      %1286 = vrot.lane.b32.xlu0 %v679, 32
      %v1287 = vpop.permute.xlu0 %1286
      %1288 = vrot.lane.b32.xlu0 %v680, 32
      %v1289 = vpop.permute.xlu0 %1288
      %1354 = vrot.lane.b32.xlu0 %v681, 40
      %v1355 = vpop.permute.xlu0 %1354
      %1356 = vrot.lane.b32.xlu0 %v682, 40
      %v1357 = vpop.permute.xlu0 %1356
      %1358 = vrot.lane.b32.xlu0 %v683, 40
      %v1359 = vpop.permute.xlu0 %1358
      %1360 = vrot.lane.b32.xlu0 %v684, 40
      %v1361 = vpop.permute.xlu0 %1360
      %1362 = vrot.lane.b32.xlu0 %v685, 40
      %v1363 = vpop.permute.xlu0 %1362
      %1364 = vrot.lane.b32.xlu0 %v686, 40
      %v1365 = vpop.permute.xlu0 %1364
      %1366 = vrot.lane.b32.xlu0 %v687, 40
      %v1367 = vpop.permute.xlu0 %1366
      %1368 = vrot.lane.b32.xlu0 %v688, 40
      %v1369 = vpop.permute.xlu0 %1368
      %1370 = vrot.lane.b32.xlu0 %v689, 40
      %v1371 = vpop.permute.xlu0 %1370
      %1372 = vrot.lane.b32.xlu0 %v690, 40
      %v1373 = vpop.permute.xlu0 %1372
      %1374 = vrot.lane.b32.xlu0 %v691, 40
      %v1375 = vpop.permute.xlu0 %1374
      %1376 = vrot.lane.b32.xlu0 %v692, 40
      %v1377 = vpop.permute.xlu0 %1376
      %1378 = vrot.lane.b32.xlu0 %v693, 40
      %v1379 = vpop.permute.xlu0 %1378
      %1380 = vrot.lane.b32.xlu0 %v694, 40
      %v1381 = vpop.permute.xlu0 %1380
      %1382 = vrot.lane.b32.xlu0 %v695, 40
      %v1383 = vpop.permute.xlu0 %1382
      %1384 = vrot.lane.b32.xlu0 %v696, 40
      %v1385 = vpop.permute.xlu0 %1384
      %1386 = vrot.lane.b32.xlu0 %v697, 40
      %v1387 = vpop.permute.xlu0 %1386
      %1388 = vrot.lane.b32.xlu0 %v698, 40
      %v1389 = vpop.permute.xlu0 %1388
      %1390 = vrot.lane.b32.xlu0 %v699, 40
      %v1391 = vpop.permute.xlu0 %1390
      %1392 = vrot.lane.b32.xlu0 %v700, 40
      %v1393 = vpop.permute.xlu0 %1392
      %1394 = vrot.lane.b32.xlu0 %v701, 40
      %v1395 = vpop.permute.xlu0 %1394
      %1396 = vrot.lane.b32.xlu0 %v702, 40
      %v1397 = vpop.permute.xlu0 %1396
      %1398 = vrot.lane.b32.xlu0 %v703, 40
      %v1399 = vpop.permute.xlu0 %1398
      %1400 = vrot.lane.b32.xlu0 %v704, 40
      %v1401 = vpop.permute.xlu0 %1400
      %1402 = vrot.lane.b32.xlu0 %v705, 40
      %v1403 = vpop.permute.xlu0 %1402
      %1404 = vrot.lane.b32.xlu0 %v706, 40
      %v1405 = vpop.permute.xlu0 %1404
      %1406 = vrot.lane.b32.xlu0 %v707, 40
      %v1407 = vpop.permute.xlu0 %1406
      %1408 = vrot.lane.b32.xlu0 %v708, 40
      %v1409 = vpop.permute.xlu0 %1408
      %1410 = vrot.lane.b32.xlu0 %v709, 40
      %v1411 = vpop.permute.xlu0 %1410
      %1412 = vrot.lane.b32.xlu0 %v710, 40
      %v1413 = vpop.permute.xlu0 %1412
      %1414 = vrot.lane.b32.xlu0 %v711, 40
      %v1415 = vpop.permute.xlu0 %1414
      %1416 = vrot.lane.b32.xlu0 %v712, 40
      %v1417 = vpop.permute.xlu0 %1416
      %1482 = vrot.lane.b32.xlu0 %v714, 48
      %v1483 = vpop.permute.xlu0 %1482
      %1484 = vrot.lane.b32.xlu0 %v715, 48
      %v1485 = vpop.permute.xlu0 %1484
      %1486 = vrot.lane.b32.xlu0 %v716, 48
      %v1487 = vpop.permute.xlu0 %1486
      %1488 = vrot.lane.b32.xlu0 %v717, 48
      %v1489 = vpop.permute.xlu0 %1488
      %1490 = vrot.lane.b32.xlu0 %v718, 48
      %v1491 = vpop.permute.xlu0 %1490
      %1492 = vrot.lane.b32.xlu0 %v719, 48
      %v1493 = vpop.permute.xlu0 %1492
      %1494 = vrot.lane.b32.xlu0 %v720, 48
      %v1495 = vpop.permute.xlu0 %1494
      %1496 = vrot.lane.b32.xlu0 %v721, 48
      %v1497 = vpop.permute.xlu0 %1496
      %1498 = vrot.lane.b32.xlu0 %v722, 48
      %v1499 = vpop.permute.xlu0 %1498
      %1500 = vrot.lane.b32.xlu0 %v723, 48
      %v1501 = vpop.permute.xlu0 %1500
      %1502 = vrot.lane.b32.xlu0 %v724, 48
      %v1503 = vpop.permute.xlu0 %1502
      %1504 = vrot.lane.b32.xlu0 %v725, 48
      %v1505 = vpop.permute.xlu0 %1504
      %1506 = vrot.lane.b32.xlu0 %v726, 48
      %v1507 = vpop.permute.xlu0 %1506
      %1508 = vrot.lane.b32.xlu0 %v727, 48
      %v1509 = vpop.permute.xlu0 %1508
      %1510 = vrot.lane.b32.xlu0 %v728, 48
      %v1511 = vpop.permute.xlu0 %1510
      %1512 = vrot.lane.b32.xlu0 %v729, 48
      %v1513 = vpop.permute.xlu0 %1512
      %1514 = vrot.lane.b32.xlu0 %v730, 48
      %v1515 = vpop.permute.xlu0 %1514
      %1516 = vrot.lane.b32.xlu0 %v731, 48
      %v1517 = vpop.permute.xlu0 %1516
      %1518 = vrot.lane.b32.xlu0 %v732, 48
      %v1519 = vpop.permute.xlu0 %1518
      %1520 = vrot.lane.b32.xlu0 %v733, 48
      %v1521 = vpop.permute.xlu0 %1520
      %1522 = vrot.lane.b32.xlu0 %v734, 48
      %v1523 = vpop.permute.xlu0 %1522
      %1524 = vrot.lane.b32.xlu0 %v735, 48
      %v1525 = vpop.permute.xlu0 %1524
      %1526 = vrot.lane.b32.xlu0 %v736, 48
      %v1527 = vpop.permute.xlu0 %1526
      %1528 = vrot.lane.b32.xlu0 %v737, 48
      %v1529 = vpop.permute.xlu0 %1528
      %1530 = vrot.lane.b32.xlu0 %v738, 48
      %v1531 = vpop.permute.xlu0 %1530
      %1532 = vrot.lane.b32.xlu0 %v739, 48
      %v1533 = vpop.permute.xlu0 %1532
      %1534 = vrot.lane.b32.xlu0 %v740, 48
      %v1535 = vpop.permute.xlu0 %1534
      %1536 = vrot.lane.b32.xlu0 %v741, 48
      %v1537 = vpop.permute.xlu0 %1536
      %1538 = vrot.lane.b32.xlu0 %v742, 48
      %v1539 = vpop.permute.xlu0 %1538
      %1540 = vrot.lane.b32.xlu0 %v743, 48
      %v1541 = vpop.permute.xlu0 %1540
      %1542 = vrot.lane.b32.xlu0 %v744, 48
      %v1543 = vpop.permute.xlu0 %1542
      %1544 = vrot.lane.b32.xlu0 %v745, 48
      %v1545 = vpop.permute.xlu0 %1544
      %1610 = vrot.lane.b32.xlu0 %v746, 56
      %v1611 = vpop.permute.xlu0 %1610
      %1612 = vrot.lane.b32.xlu0 %v747, 56
      %v1613 = vpop.permute.xlu0 %1612
      %1614 = vrot.lane.b32.xlu0 %v748, 56
      %v1615 = vpop.permute.xlu0 %1614
      %1616 = vrot.lane.b32.xlu0 %v749, 56
      %v1617 = vpop.permute.xlu0 %1616
      %1618 = vrot.lane.b32.xlu0 %v750, 56
      %v1619 = vpop.permute.xlu0 %1618
      %1620 = vrot.lane.b32.xlu0 %v751, 56
      %v1621 = vpop.permute.xlu0 %1620
      %1622 = vrot.lane.b32.xlu0 %v752, 56
      %v1623 = vpop.permute.xlu0 %1622
      %1624 = vrot.lane.b32.xlu0 %v753, 56
      %v1625 = vpop.permute.xlu0 %1624
      %1626 = vrot.lane.b32.xlu0 %v754, 56
      %v1627 = vpop.permute.xlu0 %1626
      %1628 = vrot.lane.b32.xlu0 %v755, 56
      %v1629 = vpop.permute.xlu0 %1628
      %1630 = vrot.lane.b32.xlu0 %v756, 56
      %v1631 = vpop.permute.xlu0 %1630
      %1632 = vrot.lane.b32.xlu0 %v757, 56
      %v1633 = vpop.permute.xlu0 %1632
      %1634 = vrot.lane.b32.xlu0 %v758, 56
      %v1635 = vpop.permute.xlu0 %1634
      %1636 = vrot.lane.b32.xlu0 %v759, 56
      %v1637 = vpop.permute.xlu0 %1636
      %1638 = vrot.lane.b32.xlu0 %v760, 56
      %v1639 = vpop.permute.xlu0 %1638
      %1640 = vrot.lane.b32.xlu0 %v761, 56
      %v1641 = vpop.permute.xlu0 %1640
      %1642 = vrot.lane.b32.xlu0 %v762, 56
      %v1643 = vpop.permute.xlu0 %1642
      %1644 = vrot.lane.b32.xlu0 %v763, 56
      %v1645 = vpop.permute.xlu0 %1644
      %1646 = vrot.lane.b32.xlu0 %v764, 56
      %v1647 = vpop.permute.xlu0 %1646
      %1648 = vrot.lane.b32.xlu0 %v765, 56
      %v1649 = vpop.permute.xlu0 %1648
      %1650 = vrot.lane.b32.xlu0 %v766, 56
      %v1651 = vpop.permute.xlu0 %1650
      %1652 = vrot.lane.b32.xlu0 %v767, 56
      %v1653 = vpop.permute.xlu0 %1652
      %1654 = vrot.lane.b32.xlu0 %v768, 56
      %v1655 = vpop.permute.xlu0 %1654
      %1656 = vrot.lane.b32.xlu0 %v769, 56
      %v1657 = vpop.permute.xlu0 %1656
      %1658 = vrot.lane.b32.xlu0 %v770, 56
      %v1659 = vpop.permute.xlu0 %1658
      %1660 = vrot.lane.b32.xlu0 %v771, 56
      %v1661 = vpop.permute.xlu0 %1660
      %1662 = vrot.lane.b32.xlu0 %v772, 56
      %v1663 = vpop.permute.xlu0 %1662
      %1664 = vrot.lane.b32.xlu0 %v773, 56
      %v1665 = vpop.permute.xlu0 %1664
      %1666 = vrot.lane.b32.xlu0 %v774, 56
      %v1667 = vpop.permute.xlu0 %1666
      %1668 = vrot.lane.b32.xlu0 %v775, 56
      %v1669 = vpop.permute.xlu0 %1668
      %1670 = vrot.lane.b32.xlu0 %v776, 56
      %v1671 = vpop.permute.xlu0 %1670
      %1672 = vrot.lane.b32.xlu0 %v777, 56
      %v1673 = vpop.permute.xlu0 %1672
      %1738 = vrot.lane.b32.xlu0 %v778, 64
      %v1739 = vpop.permute.xlu0 %1738
      %1740 = vrot.lane.b32.xlu0 %v779, 64
      %v1741 = vpop.permute.xlu0 %1740
      %1742 = vrot.lane.b32.xlu0 %v780, 64
      %v1743 = vpop.permute.xlu0 %1742
      %1744 = vrot.lane.b32.xlu0 %v781, 64
      %v1745 = vpop.permute.xlu0 %1744
      %1746 = vrot.lane.b32.xlu0 %v782, 64
      %v1747 = vpop.permute.xlu0 %1746
      %1748 = vrot.lane.b32.xlu0 %v783, 64
      %v1749 = vpop.permute.xlu0 %1748
      %1750 = vrot.lane.b32.xlu0 %v784, 64
      %v1751 = vpop.permute.xlu0 %1750
      %1752 = vrot.lane.b32.xlu0 %v785, 64
      %v1753 = vpop.permute.xlu0 %1752
      %1754 = vrot.lane.b32.xlu0 %v786, 64
      %v1755 = vpop.permute.xlu0 %1754
      %1756 = vrot.lane.b32.xlu0 %v787, 64
      %v1757 = vpop.permute.xlu0 %1756
      %1758 = vrot.lane.b32.xlu0 %v788, 64
      %v1759 = vpop.permute.xlu0 %1758
      %1760 = vrot.lane.b32.xlu0 %v789, 64
      %v1761 = vpop.permute.xlu0 %1760
      %1762 = vrot.lane.b32.xlu0 %v790, 64
      %v1763 = vpop.permute.xlu0 %1762
      %1764 = vrot.lane.b32.xlu0 %v791, 64
      %v1765 = vpop.permute.xlu0 %1764
      %1766 = vrot.lane.b32.xlu0 %v792, 64
      %v1767 = vpop.permute.xlu0 %1766
      %1768 = vrot.lane.b32.xlu0 %v793, 64
      %v1769 = vpop.permute.xlu0 %1768
      %1770 = vrot.lane.b32.xlu0 %v794, 64
      %v1771 = vpop.permute.xlu0 %1770
      %1772 = vrot.lane.b32.xlu0 %v795, 64
      %v1773 = vpop.permute.xlu0 %1772
      %1774 = vrot.lane.b32.xlu0 %v796, 64
      %v1775 = vpop.permute.xlu0 %1774
      %1776 = vrot.lane.b32.xlu0 %v797, 64
      %v1777 = vpop.permute.xlu0 %1776
      %1778 = vrot.lane.b32.xlu0 %v798, 64
      %v1779 = vpop.permute.xlu0 %1778
      %1780 = vrot.lane.b32.xlu0 %v799, 64
      %v1781 = vpop.permute.xlu0 %1780
      %1782 = vrot.lane.b32.xlu0 %v800, 64
      %v1783 = vpop.permute.xlu0 %1782
      %1784 = vrot.lane.b32.xlu0 %v801, 64
      %v1785 = vpop.permute.xlu0 %1784
      %1786 = vrot.lane.b32.xlu0 %v802, 64
      %v1787 = vpop.permute.xlu0 %1786
      %1788 = vrot.lane.b32.xlu0 %v803, 64
      %v1789 = vpop.permute.xlu0 %1788
      %1790 = vrot.lane.b32.xlu0 %v804, 64
      %v1791 = vpop.permute.xlu0 %1790
      %1792 = vrot.lane.b32.xlu0 %v805, 64
      %v1793 = vpop.permute.xlu0 %1792
      %1794 = vrot.lane.b32.xlu0 %v806, 64
      %v1795 = vpop.permute.xlu0 %1794
      %1796 = vrot.lane.b32.xlu0 %v807, 64
      %v1797 = vpop.permute.xlu0 %1796
      %1798 = vrot.lane.b32.xlu0 %v808, 64
      %v1799 = vpop.permute.xlu0 %1798
      %1800 = vrot.lane.b32.xlu0 %v809, 64
      %v1801 = vpop.permute.xlu0 %1800
      %v1834 = vsel %vm442, %v521, %v843
      %v1835 = vsel %vm442, %v522, %v845
      %v1836 = vsel %vm442, %v523, %v847
      %v1837 = vsel %vm442, %v524, %v849
      %v1838 = vsel %vm442, %v525, %v851
      %v1839 = vsel %vm442, %v526, %v853
      %v1840 = vsel %vm442, %v527, %v855
      %v1841 = vsel %vm442, %v528, %v857
      %v1842 = vsel %vm442, %v529, %v859
      %v1843 = vsel %vm442, %v530, %v861
      %v1844 = vsel %vm442, %v531, %v863
      %v1845 = vsel %vm442, %v532, %v865
      %v1846 = vsel %vm442, %v533, %v867
      %v1847 = vsel %vm442, %v534, %v869
      %v1848 = vsel %vm442, %v535, %v871
      %v1849 = vsel %vm442, %v536, %v873
      %v1850 = vsel %vm442, %v537, %v875
      %v1851 = vsel %vm442, %v538, %v877
      %v1852 = vsel %vm442, %v539, %v879
      %v1853 = vsel %vm442, %v540, %v881
      %v1854 = vsel %vm442, %v541, %v883
      %v1855 = vsel %vm442, %v542, %v885
      %v1856 = vsel %vm442, %v543, %v887
      %v1857 = vsel %vm442, %v544, %v889
      %v1858 = vsel %vm442, %v545, %v891
      %v1859 = vsel %vm442, %v546, %v893
      %v1860 = vsel %vm442, %v547, %v895
      %v1861 = vsel %vm442, %v548, %v897
      %v1862 = vsel %vm442, %v549, %v899
      %v1863 = vsel %vm442, %v550, %v901
      %v1864 = vsel %vm442, %v551, %v903
      %v1865 = vsel %vm442, %v552, %v905
      %vm1866 = vcmask 130048
      %v1867 = vsel %vm1866, %v1834, %v971
      %v1868 = vsel %vm1866, %v1835, %v973
      %v1869 = vsel %vm1866, %v1836, %v975
      %v1870 = vsel %vm1866, %v1837, %v977
      %v1871 = vsel %vm1866, %v1838, %v979
      %v1872 = vsel %vm1866, %v1839, %v981
      %v1873 = vsel %vm1866, %v1840, %v983
      %v1874 = vsel %vm1866, %v1841, %v985
      %v1875 = vsel %vm1866, %v1842, %v987
      %v1876 = vsel %vm1866, %v1843, %v989
      %v1877 = vsel %vm1866, %v1844, %v991
      %v1878 = vsel %vm1866, %v1845, %v993
      %v1879 = vsel %vm1866, %v1846, %v995
      %v1880 = vsel %vm1866, %v1847, %v997
      %v1881 = vsel %vm1866, %v1848, %v999
      %v1882 = vsel %vm1866, %v1849, %v1001
      %v1883 = vsel %vm1866, %v1850, %v1003
      %v1884 = vsel %vm1866, %v1851, %v1005
      %v1885 = vsel %vm1866, %v1852, %v1007
      %v1886 = vsel %vm1866, %v1853, %v1009
      %v1887 = vsel %vm1866, %v1854, %v1011
      %v1888 = vsel %vm1866, %v1855, %v1013
      %v1889 = vsel %vm1866, %v1856, %v1015
      %v1890 = vsel %vm1866, %v1857, %v1017
      %v1891 = vsel %vm1866, %v1858, %v1019
      %v1892 = vsel %vm1866, %v1859, %v1021
      %v1893 = vsel %vm1866, %v1860, %v1023
      %v1894 = vsel %vm1866, %v1861, %v1025
      %v1895 = vsel %vm1866, %v1862, %v1027
      %v1896 = vsel %vm1866, %v1863, %v1029
      %v1897 = vsel %vm1866, %v1864, %v1031
      %v1898 = vsel %vm1866, %v1865, %v1033
      %vm1899 = vcmask 195584
      %v1900 = vsel %vm1899, %v1867, %v1099
      %v1901 = vsel %vm1899, %v1868, %v1101
      %v1902 = vsel %vm1899, %v1869, %v1103
      %v1903 = vsel %vm1899, %v1870, %v1105
      %v1904 = vsel %vm1899, %v1871, %v1107
      %v1905 = vsel %vm1899, %v1872, %v1109
      %v1906 = vsel %vm1899, %v1873, %v1111
      %v1907 = vsel %vm1899, %v1874, %v1113
      %v1908 = vsel %vm1899, %v1875, %v1115
      %v1909 = vsel %vm1899, %v1876, %v1117
      %v1910 = vsel %vm1899, %v1877, %v1119
      %v1911 = vsel %vm1899, %v1878, %v1121
      %v1912 = vsel %vm1899, %v1879, %v1123
      %v1913 = vsel %vm1899, %v1880, %v1125
      %v1914 = vsel %vm1899, %v1881, %v1127
      %v1915 = vsel %vm1899, %v1882, %v1129
      %v1916 = vsel %vm1899, %v1883, %v1131
      %v1917 = vsel %vm1899, %v1884, %v1133
      %v1918 = vsel %vm1899, %v1885, %v1135
      %v1919 = vsel %vm1899, %v1886, %v1137
      %v1920 = vsel %vm1899, %v1887, %v1139
      %v1921 = vsel %vm1899, %v1888, %v1141
      %v1922 = vsel %vm1899, %v1889, %v1143
      %v1923 = vsel %vm1899, %v1890, %v1145
      %v1924 = vsel %vm1899, %v1891, %v1147
      %v1925 = vsel %vm1899, %v1892, %v1149
      %v1926 = vsel %vm1899, %v1893, %v1151
      %v1927 = vsel %vm1899, %v1894, %v1153
      %v1928 = vsel %vm1899, %v1895, %v1155
      %v1929 = vsel %vm1899, %v1896, %v1157
      %v1930 = vsel %vm1899, %v1897, %v1159
      %v1931 = vsel %vm1899, %v1898, %v1161
      %vm1932 = vcmask 261120
      %v1933 = vsel %vm1932, %v1900, %v1227
      %v1934 = vsel %vm1932, %v1901, %v1229
      %v1935 = vsel %vm1932, %v1902, %v1231
      %v1936 = vsel %vm1932, %v1903, %v1233
      %v1937 = vsel %vm1932, %v1904, %v1235
      %v1938 = vsel %vm1932, %v1905, %v1237
      %v1939 = vsel %vm1932, %v1906, %v1239
      %v1940 = vsel %vm1932, %v1907, %v1241
      %v1941 = vsel %vm1932, %v1908, %v1243
      %v1942 = vsel %vm1932, %v1909, %v1245
      %v1943 = vsel %vm1932, %v1910, %v1247
      %v1944 = vsel %vm1932, %v1911, %v1249
      %v1945 = vsel %vm1932, %v1912, %v1251
      %v1946 = vsel %vm1932, %v1913, %v1253
      %v1947 = vsel %vm1932, %v1914, %v1255
      %v1948 = vsel %vm1932, %v1915, %v1257
      %v1949 = vsel %vm1932, %v1916, %v1259
      %v1950 = vsel %vm1932, %v1917, %v1261
      %v1951 = vsel %vm1932, %v1918, %v1263
      %v1952 = vsel %vm1932, %v1919, %v1265
      %v1953 = vsel %vm1932, %v1920, %v1267
      %v1954 = vsel %vm1932, %v1921, %v1269
      %v1955 = vsel %vm1932, %v1922, %v1271
      %v1956 = vsel %vm1932, %v1923, %v1273
      %v1957 = vsel %vm1932, %v1924, %v1275
      %v1958 = vsel %vm1932, %v1925, %v1277
      %v1959 = vsel %vm1932, %v1926, %v1279
      %v1960 = vsel %vm1932, %v1927, %v1281
      %v1961 = vsel %vm1932, %v1928, %v1283
      %v1962 = vsel %vm1932, %v1929, %v1285
      %v1963 = vsel %vm1932, %v1930, %v1287
      %v1964 = vsel %vm1932, %v1931, %v1289
      %vm1965 = vcmask 326656
      %v1966 = vsel %vm1965, %v1933, %v1355
      %v1967 = vsel %vm1965, %v1934, %v1357
      %v1968 = vsel %vm1965, %v1935, %v1359
      %v1969 = vsel %vm1965, %v1936, %v1361
      %v1970 = vsel %vm1965, %v1937, %v1363
      %v1971 = vsel %vm1965, %v1938, %v1365
      %v1972 = vsel %vm1965, %v1939, %v1367
      %v1973 = vsel %vm1965, %v1940, %v1369
      %v1974 = vsel %vm1965, %v1941, %v1371
      %v1975 = vsel %vm1965, %v1942, %v1373
      %v1976 = vsel %vm1965, %v1943, %v1375
      %v1977 = vsel %vm1965, %v1944, %v1377
      %v1978 = vsel %vm1965, %v1945, %v1379
      %v1979 = vsel %vm1965, %v1946, %v1381
      %v1980 = vsel %vm1965, %v1947, %v1383
      %v1981 = vsel %vm1965, %v1948, %v1385
      %v1982 = vsel %vm1965, %v1949, %v1387
      %v1983 = vsel %vm1965, %v1950, %v1389
      %v1984 = vsel %vm1965, %v1951, %v1391
      %v1985 = vsel %vm1965, %v1952, %v1393
      %v1986 = vsel %vm1965, %v1953, %v1395
      %v1987 = vsel %vm1965, %v1954, %v1397
      %v1988 = vsel %vm1965, %v1955, %v1399
      %v1989 = vsel %vm1965, %v1956, %v1401
      %v1990 = vsel %vm1965, %v1957, %v1403
      %v1991 = vsel %vm1965, %v1958, %v1405
      %v1992 = vsel %vm1965, %v1959, %v1407
      %v1993 = vsel %vm1965, %v1960, %v1409
      %v1994 = vsel %vm1965, %v1961, %v1411
      %v1995 = vsel %vm1965, %v1962, %v1413
      %v1996 = vsel %vm1965, %v1963, %v1415
      %v1997 = vsel %vm1965, %v1964, %v1417
      %vm1998 = vcmask 392192
      %v1999 = vsel %vm1998, %v1966, %v1483
      %v2000 = vsel %vm1998, %v1967, %v1485
      %v2001 = vsel %vm1998, %v1968, %v1487
      %v2002 = vsel %vm1998, %v1969, %v1489
      %v2003 = vsel %vm1998, %v1970, %v1491
      %v2004 = vsel %vm1998, %v1971, %v1493
      %v2005 = vsel %vm1998, %v1972, %v1495
      %v2006 = vsel %vm1998, %v1973, %v1497
      %v2007 = vsel %vm1998, %v1974, %v1499
      %v2008 = vsel %vm1998, %v1975, %v1501
      %v2009 = vsel %vm1998, %v1976, %v1503
      %v2010 = vsel %vm1998, %v1977, %v1505
      %v2011 = vsel %vm1998, %v1978, %v1507
      %v2012 = vsel %vm1998, %v1979, %v1509
      %v2013 = vsel %vm1998, %v1980, %v1511
      %v2014 = vsel %vm1998, %v1981, %v1513
      %v2015 = vsel %vm1998, %v1982, %v1515
      %v2016 = vsel %vm1998, %v1983, %v1517
      %v2017 = vsel %vm1998, %v1984, %v1519
      %v2018 = vsel %vm1998, %v1985, %v1521
      %v2019 = vsel %vm1998, %v1986, %v1523
      %v2020 = vsel %vm1998, %v1987, %v1525
      %v2021 = vsel %vm1998, %v1988, %v1527
      %v2022 = vsel %vm1998, %v1989, %v1529
      %v2023 = vsel %vm1998, %v1990, %v1531
      %v2024 = vsel %vm1998, %v1991, %v1533
      %v2025 = vsel %vm1998, %v1992, %v1535
      %v2026 = vsel %vm1998, %v1993, %v1537
      %v2027 = vsel %vm1998, %v1994, %v1539
      %v2028 = vsel %vm1998, %v1995, %v1541
      %v2029 = vsel %vm1998, %v1996, %v1543
      %v2030 = vsel %vm1998, %v1997, %v1545
      %vm2031 = vcmask 457728
      %v2032 = vsel %vm2031, %v1999, %v1611
      %v2033 = vsel %vm2031, %v2000, %v1613
      %v2034 = vsel %vm2031, %v2001, %v1615
      %v2035 = vsel %vm2031, %v2002, %v1617
      %v2036 = vsel %vm2031, %v2003, %v1619
      %v2037 = vsel %vm2031, %v2004, %v1621
      %v2038 = vsel %vm2031, %v2005, %v1623
      %v2039 = vsel %vm2031, %v2006, %v1625
      %v2040 = vsel %vm2031, %v2007, %v1627
      %v2041 = vsel %vm2031, %v2008, %v1629
      %v2042 = vsel %vm2031, %v2009, %v1631
      %v2043 = vsel %vm2031, %v2010, %v1633
      %v2044 = vsel %vm2031, %v2011, %v1635
      %v2045 = vsel %vm2031, %v2012, %v1637
      %v2046 = vsel %vm2031, %v2013, %v1639
      %v2047 = vsel %vm2031, %v2014, %v1641
      %v2048 = vsel %vm2031, %v2015, %v1643
      %v2049 = vsel %vm2031, %v2016, %v1645
      %v2050 = vsel %vm2031, %v2017, %v1647
      %v2051 = vsel %vm2031, %v2018, %v1649
      %v2052 = vsel %vm2031, %v2019, %v1651
      %v2053 = vsel %vm2031, %v2020, %v1653
      %v2054 = vsel %vm2031, %v2021, %v1655
      %v2055 = vsel %vm2031, %v2022, %v1657
      %v2056 = vsel %vm2031, %v2023, %v1659
      %v2057 = vsel %vm2031, %v2024, %v1661
      %v2058 = vsel %vm2031, %v2025, %v1663
      %v2059 = vsel %vm2031, %v2026, %v1665
      %v2060 = vsel %vm2031, %v2027, %v1667
      %v2061 = vsel %vm2031, %v2028, %v1669
      %v2062 = vsel %vm2031, %v2029, %v1671
      %v2063 = vsel %vm2031, %v2030, %v1673
      %vm2064 = vcmask 523264
      %v2065 = vsel %vm2064, %v2032, %v1739
      %v2066 = vsel %vm2064, %v2033, %v1741
      %v2067 = vsel %vm2064, %v2034, %v1743
      %v2068 = vsel %vm2064, %v2035, %v1745
      %v2069 = vsel %vm2064, %v2036, %v1747
      %v2070 = vsel %vm2064, %v2037, %v1749
      %v2071 = vsel %vm2064, %v2038, %v1751
      %v2072 = vsel %vm2064, %v2039, %v1753
      %v2073 = vsel %vm2064, %v2040, %v1755
      %v2074 = vsel %vm2064, %v2041, %v1757
      %v2075 = vsel %vm2064, %v2042, %v1759
      %v2076 = vsel %vm2064, %v2043, %v1761
      %v2077 = vsel %vm2064, %v2044, %v1763
      %v2078 = vsel %vm2064, %v2045, %v1765
      %v2079 = vsel %vm2064, %v2046, %v1767
      %v2080 = vsel %vm2064, %v2047, %v1769
      %v2081 = vsel %vm2064, %v2048, %v1771
      %v2082 = vsel %vm2064, %v2049, %v1773
      %v2083 = vsel %vm2064, %v2050, %v1775
      %v2084 = vsel %vm2064, %v2051, %v1777
      %v2085 = vsel %vm2064, %v2052, %v1779
      %v2086 = vsel %vm2064, %v2053, %v1781
      %v2087 = vsel %vm2064, %v2054, %v1783
      %v2088 = vsel %vm2064, %v2055, %v1785
      %v2089 = vsel %vm2064, %v2056, %v1787
      %v2090 = vsel %vm2064, %v2057, %v1789
      %v2091 = vsel %vm2064, %v2058, %v1791
      %v2092 = vsel %vm2064, %v2059, %v1793
      %v2093 = vsel %vm2064, %v2060, %v1795
      %v2094 = vsel %vm2064, %v2061, %v1797
      %v2095 = vsel %vm2064, %v2062, %v1799
      %v2096 = vsel %vm2064, %v2063, %v1801
      %v2097 = vld [vmem:[%s1] sm:$0xff]
      %v2098 = vld [vmem:[%s1 + $0x8] sm:$0xff]
      %v2099 = vld [vmem:[%s1 + $0x10] sm:$0xff]
      %v2100 = vld [vmem:[%s1 + $0x18] sm:$0xff]
      %v2101 = vld [vmem:[%s1 + $0x20] sm:$0xff]
      %v2102 = vld [vmem:[%s1 + $0x28] sm:$0xff]
      %v2103 = vld [vmem:[%s1 + $0x30] sm:$0xff]
      %v2104 = vld [vmem:[%s1 + $0x38] sm:$0xff]
      %v2105 = vld [vmem:[%s1 + $0x40] sm:$0xff]
      %vm2106 = vcmask 588800
      %v2108 = vsel %vm2106, %v2065, 0
      %v2111 = vsel %vm2106, %v2066, 0
      %v2114 = vsel %vm2106, %v2067, 0
      %v2117 = vsel %vm2106, %v2068, 0
      %v2120 = vsel %vm2106, %v2069, 0
      %v2123 = vsel %vm2106, %v2070, 0
      %v2126 = vsel %vm2106, %v2071, 0
      %v2129 = vsel %vm2106, %v2072, 0
      %v2132 = vsel %vm2106, %v2073, 0
      %v2135 = vsel %vm2106, %v2074, 0
      %v2138 = vsel %vm2106, %v2075, 0
      %v2141 = vsel %vm2106, %v2076, 0
      %v2144 = vsel %vm2106, %v2077, 0
      %v2147 = vsel %vm2106, %v2078, 0
      %v2150 = vsel %vm2106, %v2079, 0
      %v2153 = vsel %vm2106, %v2080, 0
      %v2156 = vsel %vm2106, %v2081, 0
      %v2159 = vsel %vm2106, %v2082, 0
      %v2162 = vsel %vm2106, %v2083, 0
      %v2165 = vsel %vm2106, %v2084, 0
      %v2168 = vsel %vm2106, %v2085, 0
      %v2171 = vsel %vm2106, %v2086, 0
      %v2174 = vsel %vm2106, %v2087, 0
      %v2177 = vsel %vm2106, %v2088, 0
      %v2180 = vsel %vm2106, %v2089, 0
      %v2183 = vsel %vm2106, %v2090, 0
      %v2186 = vsel %vm2106, %v2091, 0
      %v2189 = vsel %vm2106, %v2092, 0
      %v2192 = vsel %vm2106, %v2093, 0
      %v2195 = vsel %vm2106, %v2094, 0
      %v2198 = vsel %vm2106, %v2095, 0
      %v2201 = vsel %vm2106, %v2096, 0
      %2203 = vmatprep.subr.mxu0 0.0
      %2204 = vmatpush1.msra.mxu0 0.0
      %2205 = vmatprep.subr.mxu0 0.0
      %2206 = vmatpush1.msra.mxu0 0.0
      %2207 = vmatprep.subr.mxu0 0.0
      %2208 = vmatpush1.msra.mxu0 0.0
      %2209 = vmatprep.subr.mxu0 0.0
      %2210 = vmatpush1.msra.mxu0 0.0
      %2211 = vmatprep.subr.mxu0 0.0
      %2212 = vmatpush1.msra.mxu0 0.0
      %2213 = vmatprep.subr.mxu0 0.0
      %2214 = vmatpush1.msra.mxu0 0.0
      %2215 = vmatprep.subr.mxu0 0.0
      %2216 = vmatpush1.msra.mxu0 0.0
      %2217 = vmatprep.subr.mxu0 0.0
      %2218 = vmatpush1.msra.mxu0 %v2105
      %2219 = vmatprep.subr.mxu0 0.0
      %2220 = vmatpush1.msra.mxu0 %v2104
      %2221 = vmatprep.subr.mxu0 0.0
      %2222 = vmatpush1.msra.mxu0 %v2103
      %2223 = vmatprep.subr.mxu0 0.0
      %2224 = vmatpush1.msra.mxu0 %v2102
      %2225 = vmatprep.subr.mxu0 0.0
      %2226 = vmatpush1.msra.mxu0 %v2101
      %2227 = vmatprep.subr.mxu0 0.0
      %2228 = vmatpush1.msra.mxu0 %v2100
      %2229 = vmatprep.subr.mxu0 0.0
      %2230 = vmatpush1.msra.mxu0 %v2099
      %2231 = vmatprep.subr.mxu0 0.0
      %2232 = vmatpush1.msra.mxu0 %v2098
      %2233 = vmatprep.subr.mxu0 0.0
      %2234 = vmatpush1.msra.mxu0 %v2097
      %2235 = vmatprep.subr.mxu0 0.0
      %2236 = vmatpush2.msra.mxu0 0.0
      %2237 = vmatprep.subr.mxu0 0.0
      %2238 = vmatpush2.msra.mxu0 0.0
      %2239 = vmatprep.subr.mxu0 0.0
      %2240 = vmatpush2.msra.mxu0 0.0
      %2241 = vmatprep.subr.mxu0 0.0
      %2242 = vmatpush2.msra.mxu0 0.0
      %2243 = vmatprep.subr.mxu0 0.0
      %2244 = vmatpush2.msra.mxu0 0.0
      %2245 = vmatprep.subr.mxu0 0.0
      %2246 = vmatpush2.msra.mxu0 0.0
      %2247 = vmatprep.subr.mxu0 0.0
      %2248 = vmatpush2.msra.mxu0 0.0
      %2249 = vmatprep.subr.mxu0 0.0
      %2250 = vmatpush2.msra.mxu0 0.0
      %2251 = vmatprep.subr.mxu0 0.0
      %2252 = vmatpush2.msra.mxu0 0.0
      %2253 = vmatprep.subr.mxu0 0.0
      %2254 = vmatpush2.msra.mxu0 0.0
      %2255 = vmatprep.subr.mxu0 0.0
      %2256 = vmatpush2.msra.mxu0 0.0
      %2257 = vmatprep.subr.mxu0 0.0
      %2258 = vmatpush2.msra.mxu0 0.0
      %2259 = vmatprep.subr.mxu0 0.0
      %2260 = vmatpush2.msra.mxu0 0.0
      %2261 = vmatprep.subr.mxu0 0.0
      %2262 = vmatpush2.msra.mxu0 0.0
      %2263 = vmatprep.subr.mxu0 0.0
      %2264 = vmatpush2.msra.mxu0 0.0
      %2265 = vmatprep.subr.mxu0 0.0
      %2266 = vmatpush2.msra.mxu0 0.0
      %2267 = vmatprep.mubr.f32.mxu0 0.0
      %2268 = vmatmul.mubr.f32.gmra.mxu0 %v2108
      %v2269 = vpop.f32.mrf.mxu0
      %v2270 = vadd.f32 0.0, %v2269
      %v2271 = vpop.f32.mrf.mxu0
      %2272 = vmatprep.mubr.f32.mxu0 0.0
      %2273 = vmatmul.mubr.f32.gmra.mxu0 %v2111
      %v2274 = vpop.f32.mrf.mxu0
      %v2275 = vadd.f32 0.0, %v2274
      %v2276 = vpop.f32.mrf.mxu0
      %2277 = vmatprep.mubr.f32.mxu0 0.0
      %2278 = vmatmul.mubr.f32.gmra.mxu0 %v2114
      %v2279 = vpop.f32.mrf.mxu0
      %v2280 = vadd.f32 0.0, %v2279
      %v2281 = vpop.f32.mrf.mxu0
      %2282 = vmatprep.mubr.f32.mxu0 0.0
      %2283 = vmatmul.mubr.f32.gmra.mxu0 %v2117
      %v2284 = vpop.f32.mrf.mxu0
      %v2285 = vadd.f32 0.0, %v2284
      %v2286 = vpop.f32.mrf.mxu0
      %2287 = vmatprep.mubr.f32.mxu0 0.0
      %2288 = vmatmul.mubr.f32.gmra.mxu0 %v2120
      %v2289 = vpop.f32.mrf.mxu0
      %v2290 = vadd.f32 0.0, %v2289
      %v2291 = vpop.f32.mrf.mxu0
      %2292 = vmatprep.mubr.f32.mxu0 0.0
      %2293 = vmatmul.mubr.f32.gmra.mxu0 %v2123
      %v2294 = vpop.f32.mrf.mxu0
      %v2295 = vadd.f32 0.0, %v2294
      %v2296 = vpop.f32.mrf.mxu0
      %2297 = vmatprep.mubr.f32.mxu0 0.0
      %2298 = vmatmul.mubr.f32.gmra.mxu0 %v2126
      %v2299 = vpop.f32.mrf.mxu0
      %v2300 = vadd.f32 0.0, %v2299
      %v2301 = vpop.f32.mrf.mxu0
      %2302 = vmatprep.mubr.f32.mxu0 0.0
      %2303 = vmatmul.mubr.f32.gmra.mxu0 %v2129
      %v2304 = vpop.f32.mrf.mxu0
      %v2305 = vadd.f32 0.0, %v2304
      %v2306 = vpop.f32.mrf.mxu0
      %2307 = vmatprep.mubr.f32.mxu0 0.0
      %2308 = vmatmul.mubr.f32.gmra.mxu0 %v2132
      %v2309 = vpop.f32.mrf.mxu0
      %v2310 = vadd.f32 0.0, %v2309
      %v2311 = vpop.f32.mrf.mxu0
      %2312 = vmatprep.mubr.f32.mxu0 0.0
      %2313 = vmatmul.mubr.f32.gmra.mxu0 %v2135
      %v2314 = vpop.f32.mrf.mxu0
      %v2315 = vadd.f32 0.0, %v2314
      %v2316 = vpop.f32.mrf.mxu0
      %2317 = vmatprep.mubr.f32.mxu0 0.0
      %2318 = vmatmul.mubr.f32.gmra.mxu0 %v2138
      %v2319 = vpop.f32.mrf.mxu0
      %v2320 = vadd.f32 0.0, %v2319
      %v2321 = vpop.f32.mrf.mxu0
      %2322 = vmatprep.mubr.f32.mxu0 0.0
      %2323 = vmatmul.mubr.f32.gmra.mxu0 %v2141
      %v2324 = vpop.f32.mrf.mxu0
      %v2325 = vadd.f32 0.0, %v2324
      %v2326 = vpop.f32.mrf.mxu0
      %2327 = vmatprep.mubr.f32.mxu0 0.0
      %2328 = vmatmul.mubr.f32.gmra.mxu0 %v2144
      %v2329 = vpop.f32.mrf.mxu0
      %v2330 = vadd.f32 0.0, %v2329
      %v2331 = vpop.f32.mrf.mxu0
      %2332 = vmatprep.mubr.f32.mxu0 0.0
      %2333 = vmatmul.mubr.f32.gmra.mxu0 %v2147
      %v2334 = vpop.f32.mrf.mxu0
      %v2335 = vadd.f32 0.0, %v2334
      %v2336 = vpop.f32.mrf.mxu0
      %2337 = vmatprep.mubr.f32.mxu0 0.0
      %2338 = vmatmul.mubr.f32.gmra.mxu0 %v2150
      %v2339 = vpop.f32.mrf.mxu0
      %v2340 = vadd.f32 0.0, %v2339
      %v2341 = vpop.f32.mrf.mxu0
      %2342 = vmatprep.mubr.f32.mxu0 0.0
      %2343 = vmatmul.mubr.f32.gmra.mxu0 %v2153
      %v2344 = vpop.f32.mrf.mxu0
      %v2345 = vadd.f32 0.0, %v2344
      %v2346 = vpop.f32.mrf.mxu0
      %2347 = vmatprep.mubr.f32.mxu0 0.0
      %2348 = vmatmul.mubr.f32.gmra.mxu0 %v2156
      %v2349 = vpop.f32.mrf.mxu0
      %v2350 = vadd.f32 0.0, %v2349
      %v2351 = vpop.f32.mrf.mxu0
      %2352 = vmatprep.mubr.f32.mxu0 0.0
      %2353 = vmatmul.mubr.f32.gmra.mxu0 %v2159
      %v2354 = vpop.f32.mrf.mxu0
      %v2355 = vadd.f32 0.0, %v2354
      %v2356 = vpop.f32.mrf.mxu0
      %2357 = vmatprep.mubr.f32.mxu0 0.0
      %2358 = vmatmul.mubr.f32.gmra.mxu0 %v2162
      %v2359 = vpop.f32.mrf.mxu0
      %v2360 = vadd.f32 0.0, %v2359
      %v2361 = vpop.f32.mrf.mxu0
      %2362 = vmatprep.mubr.f32.mxu0 0.0
      %2363 = vmatmul.mubr.f32.gmra.mxu0 %v2165
      %v2364 = vpop.f32.mrf.mxu0
      %v2365 = vadd.f32 0.0, %v2364
      %v2366 = vpop.f32.mrf.mxu0
      %2367 = vmatprep.mubr.f32.mxu0 0.0
      %2368 = vmatmul.mubr.f32.gmra.mxu0 %v2168
      %v2369 = vpop.f32.mrf.mxu0
      %v2370 = vadd.f32 0.0, %v2369
      %v2371 = vpop.f32.mrf.mxu0
      %2372 = vmatprep.mubr.f32.mxu0 0.0
      %2373 = vmatmul.mubr.f32.gmra.mxu0 %v2171
      %v2374 = vpop.f32.mrf.mxu0
      %v2375 = vadd.f32 0.0, %v2374
      %v2376 = vpop.f32.mrf.mxu0
      %2377 = vmatprep.mubr.f32.mxu0 0.0
      %2378 = vmatmul.mubr.f32.gmra.mxu0 %v2174
      %v2379 = vpop.f32.mrf.mxu0
      %v2380 = vadd.f32 0.0, %v2379
      %v2381 = vpop.f32.mrf.mxu0
      %2382 = vmatprep.mubr.f32.mxu0 0.0
      %2383 = vmatmul.mubr.f32.gmra.mxu0 %v2177
      %v2384 = vpop.f32.mrf.mxu0
      %v2385 = vadd.f32 0.0, %v2384
      %v2386 = vpop.f32.mrf.mxu0
      %2387 = vmatprep.mubr.f32.mxu0 0.0
      %2388 = vmatmul.mubr.f32.gmra.mxu0 %v2180
      %v2389 = vpop.f32.mrf.mxu0
      %v2390 = vadd.f32 0.0, %v2389
      %v2391 = vpop.f32.mrf.mxu0
      %2392 = vmatprep.mubr.f32.mxu0 0.0
      %2393 = vmatmul.mubr.f32.gmra.mxu0 %v2183
      %v2394 = vpop.f32.mrf.mxu0
      %v2395 = vadd.f32 0.0, %v2394
      %v2396 = vpop.f32.mrf.mxu0
      %2397 = vmatprep.mubr.f32.mxu0 0.0
      %2398 = vmatmul.mubr.f32.gmra.mxu0 %v2186
      %v2399 = vpop.f32.mrf.mxu0
      %v2400 = vadd.f32 0.0, %v2399
      %v2401 = vpop.f32.mrf.mxu0
      %2402 = vmatprep.mubr.f32.mxu0 0.0
      %2403 = vmatmul.mubr.f32.gmra.mxu0 %v2189
      %v2404 = vpop.f32.mrf.mxu0
      %v2405 = vadd.f32 0.0, %v2404
      %v2406 = vpop.f32.mrf.mxu0
      %2407 = vmatprep.mubr.f32.mxu0 0.0
      %2408 = vmatmul.mubr.f32.gmra.mxu0 %v2192
      %v2409 = vpop.f32.mrf.mxu0
      %v2410 = vadd.f32 0.0, %v2409
      %v2411 = vpop.f32.mrf.mxu0
      %2412 = vmatprep.mubr.f32.mxu0 0.0
      %2413 = vmatmul.mubr.f32.gmra.mxu0 %v2195
      %v2414 = vpop.f32.mrf.mxu0
      %v2415 = vadd.f32 0.0, %v2414
      %v2416 = vpop.f32.mrf.mxu0
      %2417 = vmatprep.mubr.f32.mxu0 0.0
      %2418 = vmatmul.mubr.f32.gmra.mxu0 %v2198
      %v2419 = vpop.f32.mrf.mxu0
      %v2420 = vadd.f32 0.0, %v2419
      %v2421 = vpop.f32.mrf.mxu0
      %2422 = vmatprep.mubr.f32.mxu0 0.0
      %2423 = vmatmul.mubr.f32.gmra.mxu0 %v2201
      %v2424 = vpop.f32.mrf.mxu0
      %v2425 = vadd.f32 0.0, %v2424
      %v2426 = vpop.f32.mrf.mxu0
      %2427 = vdwg.mxu0
      %v2428 = vsel %vm442, %v2270, 0.0
      %v2429 = vsel %vm442, %v2275, 0.0
      %v2430 = vadd.f32 %v2428, %v2429
      %v2431 = vsel %vm442, %v2280, 0.0
      %v2432 = vadd.f32 %v2430, %v2431
      %v2433 = vsel %vm442, %v2285, 0.0
      %v2434 = vadd.f32 %v2432, %v2433
      %v2435 = vsel %vm442, %v2290, 0.0
      %v2436 = vadd.f32 %v2434, %v2435
      %v2437 = vsel %vm442, %v2295, 0.0
      %v2438 = vadd.f32 %v2436, %v2437
      %v2439 = vsel %vm442, %v2300, 0.0
      %v2440 = vadd.f32 %v2438, %v2439
      %v2441 = vsel %vm442, %v2305, 0.0
      %v2442 = vadd.f32 %v2440, %v2441
      %v2443 = vsel %vm442, %v2310, 0.0
      %v2444 = vadd.f32 %v2442, %v2443
      %v2445 = vsel %vm442, %v2315, 0.0
      %v2446 = vadd.f32 %v2444, %v2445
      %v2447 = vsel %vm442, %v2320, 0.0
      %v2448 = vadd.f32 %v2446, %v2447
      %v2449 = vsel %vm442, %v2325, 0.0
      %v2450 = vadd.f32 %v2448, %v2449
      %v2451 = vsel %vm442, %v2330, 0.0
      %v2452 = vadd.f32 %v2450, %v2451
      %v2453 = vsel %vm442, %v2335, 0.0
      %v2454 = vadd.f32 %v2452, %v2453
      %v2455 = vsel %vm442, %v2340, 0.0
      %v2456 = vadd.f32 %v2454, %v2455
      %v2457 = vsel %vm442, %v2345, 0.0
      %v2458 = vadd.f32 %v2456, %v2457
      %v2459 = vsel %vm442, %v2350, 0.0
      %v2460 = vadd.f32 %v2458, %v2459
      %v2461 = vsel %vm442, %v2355, 0.0
      %v2462 = vadd.f32 %v2460, %v2461
      %v2463 = vsel %vm442, %v2360, 0.0
      %v2464 = vadd.f32 %v2462, %v2463
      %v2465 = vsel %vm442, %v2365, 0.0
      %v2466 = vadd.f32 %v2464, %v2465
      %v2467 = vsel %vm442, %v2370, 0.0
      %v2468 = vadd.f32 %v2466, %v2467
      %v2469 = vsel %vm442, %v2375, 0.0
      %v2470 = vadd.f32 %v2468, %v2469
      %v2471 = vsel %vm442, %v2380, 0.0
      %v2472 = vadd.f32 %v2470, %v2471
      %v2473 = vsel %vm442, %v2385, 0.0
      %v2474 = vadd.f32 %v2472, %v2473
      %v2475 = vsel %vm442, %v2390, 0.0
      %v2476 = vadd.f32 %v2474, %v2475
      %v2477 = vsel %vm442, %v2395, 0.0
      %v2478 = vadd.f32 %v2476, %v2477
      %v2479 = vsel %vm442, %v2400, 0.0
      %v2480 = vadd.f32 %v2478, %v2479
      %v2481 = vsel %vm442, %v2405, 0.0
      %v2482 = vadd.f32 %v2480, %v2481
      %v2483 = vsel %vm442, %v2410, 0.0
      %v2484 = vadd.f32 %v2482, %v2483
      %v2485 = vsel %vm442, %v2415, 0.0
      %v2486 = vadd.f32 %v2484, %v2485
      %v2487 = vsel %vm442, %v2420, 0.0
      %v2488 = vadd.f32 %v2486, %v2487
      %v2489 = vsel %vm442, %v2425, 0.0
      %v2490 = vadd.f32 %v2488, %v2489
      %v2491 = vrot.slane %v2490, 4
      %v2492 = vadd.f32 %v2490, %v2491
      %v2493 = vrot.slane %v2492, 2
      %v2494 = vadd.f32 %v2492, %v2493
      %v2495 = vrot.slane %v2494, 1
      %v2496 = vadd.f32 %v2494, %v2495
      %v2497 = vmul.f32 %v2270, %v2270
      %v2498 = vmul.f32 %v2275, %v2275
      %v2499 = vmul.f32 %v2280, %v2280
      %v2500 = vmul.f32 %v2285, %v2285
      %v2501 = vmul.f32 %v2290, %v2290
      %v2502 = vmul.f32 %v2295, %v2295
      %v2503 = vmul.f32 %v2300, %v2300
      %v2504 = vmul.f32 %v2305, %v2305
      %v2505 = vmul.f32 %v2310, %v2310
      %v2506 = vmul.f32 %v2315, %v2315
      %v2507 = vmul.f32 %v2320, %v2320
      %v2508 = vmul.f32 %v2325, %v2325
      %v2509 = vmul.f32 %v2330, %v2330
      %v2510 = vmul.f32 %v2335, %v2335
      %v2511 = vmul.f32 %v2340, %v2340
      %v2512 = vmul.f32 %v2345, %v2345
      %v2513 = vmul.f32 %v2350, %v2350
      %v2514 = vmul.f32 %v2355, %v2355
      %v2515 = vmul.f32 %v2360, %v2360
      %v2516 = vmul.f32 %v2365, %v2365
      %v2517 = vmul.f32 %v2370, %v2370
      %v2518 = vmul.f32 %v2375, %v2375
      %v2519 = vmul.f32 %v2380, %v2380
      %v2520 = vmul.f32 %v2385, %v2385
      %v2521 = vmul.f32 %v2390, %v2390
      %v2522 = vmul.f32 %v2395, %v2395
      %v2523 = vmul.f32 %v2400, %v2400
      %v2524 = vmul.f32 %v2405, %v2405
      %v2525 = vmul.f32 %v2410, %v2410
      %v2526 = vmul.f32 %v2415, %v2415
      %v2527 = vmul.f32 %v2420, %v2420
      %v2528 = vmul.f32 %v2425, %v2425
      %v2529 = vsel %vm442, %v2497, 0.0
      %v2530 = vsel %vm442, %v2498, 0.0
      %v2531 = vadd.f32 %v2529, %v2530
      %v2532 = vsel %vm442, %v2499, 0.0
      %v2533 = vadd.f32 %v2531, %v2532
      %v2534 = vsel %vm442, %v2500, 0.0
      %v2535 = vadd.f32 %v2533, %v2534
      %v2536 = vsel %vm442, %v2501, 0.0
      %v2537 = vadd.f32 %v2535, %v2536
      %v2538 = vsel %vm442, %v2502, 0.0
      %v2539 = vadd.f32 %v2537, %v2538
      %v2540 = vsel %vm442, %v2503, 0.0
      %v2541 = vadd.f32 %v2539, %v2540
      %v2542 = vsel %vm442, %v2504, 0.0
      %v2543 = vadd.f32 %v2541, %v2542
      %v2544 = vsel %vm442, %v2505, 0.0
      %v2545 = vadd.f32 %v2543, %v2544
      %v2546 = vsel %vm442, %v2506, 0.0
      %v2547 = vadd.f32 %v2545, %v2546
      %v2548 = vsel %vm442, %v2507, 0.0
      %v2549 = vadd.f32 %v2547, %v2548
      %v2550 = vsel %vm442, %v2508, 0.0
      %v2551 = vadd.f32 %v2549, %v2550
      %v2552 = vsel %vm442, %v2509, 0.0
      %v2553 = vadd.f32 %v2551, %v2552
      %v2554 = vsel %vm442, %v2510, 0.0
      %v2555 = vadd.f32 %v2553, %v2554
      %v2556 = vsel %vm442, %v2511, 0.0
      %v2557 = vadd.f32 %v2555, %v2556
      %v2558 = vsel %vm442, %v2512, 0.0
      %v2559 = vadd.f32 %v2557, %v2558
      %v2560 = vsel %vm442, %v2513, 0.0
      %v2561 = vadd.f32 %v2559, %v2560
      %v2562 = vsel %vm442, %v2514, 0.0
      %v2563 = vadd.f32 %v2561, %v2562
      %v2564 = vsel %vm442, %v2515, 0.0
      %v2565 = vadd.f32 %v2563, %v2564
      %v2566 = vsel %vm442, %v2516, 0.0
      %v2567 = vadd.f32 %v2565, %v2566
      %v2568 = vsel %vm442, %v2517, 0.0
      %v2569 = vadd.f32 %v2567, %v2568
      %v2570 = vsel %vm442, %v2518, 0.0
      %v2571 = vadd.f32 %v2569, %v2570
      %v2572 = vsel %vm442, %v2519, 0.0
      %v2573 = vadd.f32 %v2571, %v2572
      %v2574 = vsel %vm442, %v2520, 0.0
      %v2575 = vadd.f32 %v2573, %v2574
      %v2576 = vsel %vm442, %v2521, 0.0
      %v2577 = vadd.f32 %v2575, %v2576
      %v2578 = vsel %vm442, %v2522, 0.0
      %v2579 = vadd.f32 %v2577, %v2578
      %v2580 = vsel %vm442, %v2523, 0.0
      %v2581 = vadd.f32 %v2579, %v2580
      %v2582 = vsel %vm442, %v2524, 0.0
      %v2583 = vadd.f32 %v2581, %v2582
      %v2584 = vsel %vm442, %v2525, 0.0
      %v2585 = vadd.f32 %v2583, %v2584
      %v2586 = vsel %vm442, %v2526, 0.0
      %v2587 = vadd.f32 %v2585, %v2586
      %v2588 = vsel %vm442, %v2527, 0.0
      %v2589 = vadd.f32 %v2587, %v2588
      %v2590 = vsel %vm442, %v2528, 0.0
      %v2591 = vadd.f32 %v2589, %v2590
      %v2592 = vrot.slane %v2591, 4
      %v2593 = vadd.f32 %v2591, %v2592
      %v2594 = vrot.slane %v2593, 2
      %v2595 = vadd.f32 %v2593, %v2594
      %v2596 = vrot.slane %v2595, 1
      %v2597 = vadd.f32 %v2595, %v2596
      %2598 = vst.msk [vmem:[%s235] sm:$0x1] %vm451, %v2496
      %2599 = vst.msk [vmem:[%s235 + $0x1] sm:$0x1] %vm451, %v2597
      %2600 = vst.msk [vmem:[%s231] sm:$0xff] %vm442, %v2270
      %2601 = vst.msk [vmem:[%s231 + $0x8] sm:$0xff] %vm442, %v2275
      %2602 = vst.msk [vmem:[%s231 + $0x10] sm:$0xff] %vm442, %v2280
      %2603 = vst.msk [vmem:[%s231 + $0x18] sm:$0xff] %vm442, %v2285
      %2604 = vst.msk [vmem:[%s231 + $0x20] sm:$0xff] %vm442, %v2290
      %2605 = vst.msk [vmem:[%s231 + $0x28] sm:$0xff] %vm442, %v2295
      %2606 = vst.msk [vmem:[%s231 + $0x30] sm:$0xff] %vm442, %v2300
      %2607 = vst.msk [vmem:[%s231 + $0x38] sm:$0xff] %vm442, %v2305
      %2608 = vst.msk [vmem:[%s231 + $0x40] sm:$0xff] %vm442, %v2310
      %2609 = vst.msk [vmem:[%s231 + $0x48] sm:$0xff] %vm442, %v2315
      %2610 = vst.msk [vmem:[%s231 + $0x50] sm:$0xff] %vm442, %v2320
      %2611 = vst.msk [vmem:[%s231 + $0x58] sm:$0xff] %vm442, %v2325
      %2612 = vst.msk [vmem:[%s231 + $0x60] sm:$0xff] %vm442, %v2330
      %2613 = vst.msk [vmem:[%s231 + $0x68] sm:$0xff] %vm442, %v2335
      %2614 = vst.msk [vmem:[%s231 + $0x70] sm:$0xff] %vm442, %v2340
      %2615 = vst.msk [vmem:[%s231 + $0x78] sm:$0xff] %vm442, %v2345
      %2616 = vst.msk [vmem:[%s231 + $0x80] sm:$0xff] %vm442, %v2350
      %2617 = vst.msk [vmem:[%s231 + $0x88] sm:$0xff] %vm442, %v2355
      %2618 = vst.msk [vmem:[%s231 + $0x90] sm:$0xff] %vm442, %v2360
      %2619 = vst.msk [vmem:[%s231 + $0x98] sm:$0xff] %vm442, %v2365
      %2620 = vst.msk [vmem:[%s231 + $0xa0] sm:$0xff] %vm442, %v2370
      %2621 = vst.msk [vmem:[%s231 + $0xa8] sm:$0xff] %vm442, %v2375
      %2622 = vst.msk [vmem:[%s231 + $0xb0] sm:$0xff] %vm442, %v2380
      %2623 = vst.msk [vmem:[%s231 + $0xb8] sm:$0xff] %vm442, %v2385
      %2624 = vst.msk [vmem:[%s231 + $0xc0] sm:$0xff] %vm442, %v2390
      %2625 = vst.msk [vmem:[%s231 + $0xc8] sm:$0xff] %vm442, %v2395
      %2626 = vst.msk [vmem:[%s231 + $0xd0] sm:$0xff] %vm442, %v2400
      %2627 = vst.msk [vmem:[%s231 + $0xd8] sm:$0xff] %vm442, %v2405
      %2628 = vst.msk [vmem:[%s231 + $0xe0] sm:$0xff] %vm442, %v2410
      %2629 = vst.msk [vmem:[%s231 + $0xe8] sm:$0xff] %vm442, %v2415
      %2630 = vst.msk [vmem:[%s231 + $0xf0] sm:$0xff] %vm442, %v2420
      %2631 = vst.msk [vmem:[%s231 + $0xf8] sm:$0xff] %vm442, %v2425
      %p2632 = scmp.lt.s32.totalorder %s17, 1
      %s2633 = scalar_select %p2632, %s17, 1
      %s2634 = smul.addr %s2633, 32
      %s2635 = smul.addr %s2634, 8
      %s2636 = scalar_lea.vmem %s4, %s2635
      %p2637 = scmp.lt.s32.totalorder %s17, 1
      %s2638 = scalar_select %p2637, %s17, 1
      %s2639 = smul.addr %s2638, 2
      %s2640 = scalar_lea.vmem %s5, %s2639
      // Predicated region
      $region37: #{double_conv.4} parent=35 // pred_check
        %p2641 = pneg %p124
      $region38: #{double_conv.4} parent=35 // pred_check_branch
        %2643 = sbr.rel (%p2641) target = $region40
      $region39: #{double_conv.4} parent=35 // pred_region
        _
      $region40: #{double_conv.4} parent=35 // pred_fallthru
        _
      // Predicated region
      $region41: #{double_conv.4} parent=35 // pred_check
        %p2644 = pneg %p150
      $region42: #{double_conv.4} parent=35 // pred_check_branch
        %2646 = sbr.rel (%p2644) target = $region44
      $region43: #{double_conv.4} parent=35 // pred_region
        _
      $region44: #{double_conv.4} parent=35 // pred_fallthru
        _
    $region36: #{double_conv.4} parent=5 // pred_fallthru
      _
    %p2647 = scmp.le.s32.totalorder 2, %s12
    // Predicated region
    $region45: #{double_conv.4} parent=5 // pred_check
      %p2648 = pneg %p2647
    $region46: #{double_conv.4} parent=5 // pred_check_branch
      %2650 = sbr.rel (%p2648) target = $region48
    $region47: #{double_conv.4} parent=5 // pred_region
      %s2651 = ssub.s32 %s12, 2
      // Predicated region
      $region49: #{double_conv.4} parent=47 // pred_check
        %p2652 = pneg %p130
      $region50: #{double_conv.4} parent=47 // pred_check_branch
        %2654 = sbr.rel (%p2652) target = $region52
      $region51: #{double_conv.4} parent=47 // pred_region
        %p2655 = scmp.lt.s32.totalorder %s18, 1
        %s2656 = scalar_select %p2655, %s18, 1
        %s2657 = smul.addr %s2656, 32
        %s2658 = smul.addr %s2657, 8
        %s2659 = scalar_lea.vmem %s4, %s2658
      $region52: #{double_conv.4} parent=47 // pred_fallthru
        _
      // Predicated region
      $region53: #{double_conv.4} parent=47 // pred_check
        %p2660 = pneg %p156
      $region54: #{double_conv.4} parent=47 // pred_check_branch
        %2662 = sbr.rel (%p2660) target = $region56
      $region55: #{double_conv.4} parent=47 // pred_region
        %p2663 = scmp.lt.s32.totalorder %s18, 1
        %s2664 = scalar_select %p2663, %s18, 1
        %s2665 = smul.addr %s2664, 2
        %s2666 = scalar_lea.vmem %s5, %s2665
      $region56: #{double_conv.4} parent=47 // pred_fallthru
        _
    $region48: #{double_conv.4} parent=5 // pred_fallthru
      _
  $region6: #{double_conv.4} parent=0 // loop_footer
    %s16 = sadd.s32 1, %s12
  $region7: #{double_conv.4} parent=0 // loop_footer_branch
    %11 = sbr.rel target = $region3
  $region8: #{double_conv.4} parent=0 // loop_exit
    _

</llo_original>
